<compile_context>
chip_gen: v7x
topology: tpu7x:2x2x1
jax: 0.10.0
libtpu: 0.0.40
codegen_flags: <defaults>
</compile_context>

<pallas_src>
import functools

import jax
import jax.numpy as jnp
from jax.experimental import pallas as pl
from jax.experimental.pallas import tpu as pltpu

# ----------------------- Config (small, synthetic) --------------------------
NUM = 32                 # number of samples / graph nodes
FEAT = 16                # config.school.feat_size
SPEC_ARCH = (32, 16)     # config.school.spectral_architecture (hidden..., out)
OUT_FEAT = 8             # config.school.out_feat  (semantic_out_dim)
K = 4                    # config.school.k
GCN_ARCH = (16, 8)       # config.school.gcn_architecture

SLAB_LANES = 128         # lane width of the packed parameter slab

_VMEM = pl.BlockSpec(memory_space=pltpu.MemorySpace.VMEM)
_SMEM = pl.BlockSpec(memory_space=pltpu.MemorySpace.SMEM)

_TRANS = (((1,), (1,)), ((), ()))        # dot_general dims for Z @ Z.T


def _ceil(v, m):
    return ((v + m - 1) // m) * m


# --------------------------- parameter slab ----------------------------------
def _pack_slab(items):
    """Pack small 2-D params into one (rows, 128) f32 slab.

    Each item gets an 8-sublane-aligned row region starting at lane 0.
    Returns (slab, offsets) with offsets[name] = (row0, nrows, ncols) as
    Python ints (static for in-kernel slicing).
    """
    offsets = {}
    row = 0
    for name, a in items:
        r, c = a.shape
        assert c <= SLAB_LANES
        offsets[name] = (row, r, c)
        row += _ceil(r, 8)
    slab = jnp.zeros((_ceil(max(row, 8), 8), SLAB_LANES), jnp.float32)
    for name, a in items:
        r0, _, _ = offsets[name]
        slab = jax.lax.dynamic_update_slice(slab, a.astype(jnp.float32), (r0, 0))
    return slab, offsets


def build_param_slab(spec_params, gcn_params, spec_out_dim):
    items = []
    for i, (w, b) in enumerate(spec_params):
        items.append((f"spec_w{i}", w))
        items.append((f"spec_b{i}", b.reshape(1, -1)))
    # orthonorm weights placeholder (filled after the JAX-side QR)
    items.append(("orth", jnp.zeros((spec_out_dim, spec_out_dim), jnp.float32)))
    for i, (w, b) in enumerate(gcn_params):
        items.append((f"gcn_w{i}", w))
        items.append((f"gcn_b{i}", b.reshape(1, -1)))
    return _pack_slab(items)


# --------------------------- in-kernel helpers -------------------------------
def _leaky_relu(x):
    return jnp.where(x >= 0, x, 0.01 * x)     # PyTorch default slope


def _slab_slice(slab_ref, off):
    r0, r, c = off
    return slab_ref[r0:r0 + r, 0:c]


def _spectral_mlp(x, slab_ref, spec_offs):
    """Chained Linear layers: leaky_relu hidden, tanh last (f32 throughout)."""
    # TODO(synk): SpectralNetModel source not provided; standard SpectralNet
    # MLP (Linear+leaky_relu hidden, tanh last) is assumed.
    h = x
    n_layers = len(spec_offs)
    for i, (w_off, b_off) in enumerate(spec_offs):
        w = _slab_slice(slab_ref, w_off)
        b = _slab_slice(slab_ref, b_off)
        h = jnp.dot(h, w, preferred_element_type=jnp.float32) + b
        h = jnp.tanh(h) if i == n_layers - 1 else _leaky_relu(h)
    return h


def _dist_from_gram(g, eye):
    """sqrt(||zi||^2 + ||zj||^2 - 2 zi.zj + 1e-8) from a Gram matrix.

    Squared norms come from the masked Gram diagonal (eye hoisted by the
    caller and shared), avoiding any (N,1)->(1,N) transpose relayout.
    """
    diag = g * eye
    sq_col = jnp.sum(diag, axis=1, keepdims=True)    # ||z_i||^2  (N,1)
    sq_row = jnp.sum(diag, axis=0, keepdims=True)    # ||z_j||^2  (1,N)
    d2 = jnp.maximum(sq_col + sq_row - 2.0 * g, 0.0)
    return jnp.sqrt(d2 + 1e-8)


# ------------------------------ Pallas kernels -------------------------------
def _spectral_mlp_kernel(x_ref, slab_ref, o_ref, *, spec_offs):
    """Training path: spectral MLP on x_orth (feeds the JAX-side QR)."""
    o_ref[...] = _spectral_mlp(x_ref[...], slab_ref, spec_offs)


def _school_fused_kernel(scal_ref, x_ref, idx_ref, aff_ref, slab_ref, out_ref,
                         *, n, k, out_feat, spec_offs, orth_off, gcn_offs,
                         c_hom, c_graph, c_a, c_y):
    f32 = jnp.float32
    bf16 = jnp.bfloat16
    x = x_ref[...]                                            # (n, F)

    # -------- spectral net on x (f32) --------
    y_tilde = _spectral_mlp(x, slab_ref, spec_offs)           # (n, D)
    ow = _slab_slice(slab_ref, orth_off)                      # (D, D)
    ortho_h = jnp.dot(y_tilde, ow, preferred_element_type=f32)
    d = ortho_h.shape[1]

    # hoisted iota masks, reused for distances / scatter / adjacency
    row_i = jax.lax.broadcasted_iota(jnp.int32, (n, n), 0)
    col_i = jax.lax.broadcasted_iota(jnp.int32, (n, n), 1)
    eye = (row_i == col_i).astype(f32)
    col_mask = (jax.lax.broadcasted_iota(jnp.int32, (n, d), 1)
                < out_feat).astype(f32)

    # Y / rest via column masks (no narrow lane slices); Gram(ortho_H) reuses
    # Gram(Y): Gram(ortho_H) = Gram(Y) + Gram(rest).
    y_m = ortho_h * col_mask                                  # (n, D), cols>=out_feat are 0
    rest_m = ortho_h * (1.0 - col_mask)
    g_y = jax.lax.dot_general(y_m, y_m, _TRANS, preferred_element_type=f32)
    g_rest = jax.lax.dot_general(rest_m, rest_m, _TRANS,
                                 preferred_element_type=f32)
    g_h = g_y + g_rest

    dfi = _dist_from_gram(g_y, eye)                           # (n, n)
    dxi = _dist_from_gram(g_h, eye)                           # (n, n)

    scale = scal_ref[0]                 # = -1 / (2 * alpha), precomputed
    beta = scal_ref[1]
    ad = scale * (dxi + beta * dfi)                           # (n, n)

    # -------- in-kernel kNN gather (one-hot) + simplex projection + scatter --
    onehots = []
    v = []
    for kk in range(k):
        idx_col = idx_ref[:, kk + 1:kk + 2]                   # neighbours 1..k
        oh = (col_i == idx_col).astype(f32)                   # (n, n) one-hot
        onehots.append(oh)
        v.append(jnp.sum(ad * oh, axis=1, keepdims=True))     # ad[i, idx[i,kk]]

    # descending sort of the k columns: odd/even transposition network
    u = list(v)

    def _comp(a, b):
        return jnp.maximum(a, b), jnp.minimum(a, b)

    for p in range(k):
        for j in range(p % 2, k - 1, 2):
            u[j], u[j + 1] = _comp(u[j], u[j + 1])

    kval = 1.0
    css = []
    run = jnp.zeros_like(u[0])
    for j in range(k):
        run = run + u[j]
        css.append(run - kval)
    condf = [((u[j] - css[j] / float(j + 1)) > 0).astype(f32) for j in range(k)]
    rho = condf[0]
    for j in range(1, k):
        rho = rho + condf[j]                                   # >= 1 always
    theta_num = jnp.zeros_like(rho)
    for j in range(k):
        theta_num = theta_num + jnp.where(rho == float(j + 1), css[j], 0.0)
    theta = theta_num / rho

    a_mat = jnp.zeros((n, n), f32)
    for kk in range(k):
        a_mat = a_mat + jnp.maximum(v[kk] - theta, 0.0) * onehots[kk]

    # -------- embs_hom = A @ semantic_H --------
    # TODO(synk): SpectralNet source not provided; semantic_H is taken as the
    # first out_feat columns of the pre-orthonormalisation output (masked).
    semantic_h = y_tilde * col_mask                            # (n, D), padded
    embs_hom = jnp.dot(a_mat, semantic_h, preferred_element_type=f32)

    # -------- affinity -> normalized adjacency (D^-1/2 (W+I) D^-1/2) --------
    # TODO(synk): affinity_to_adjacency source not provided; standard GCN
    # symmetric normalisation assumed.
    adj0 = aff_ref[...] + eye
    deg = jnp.sum(adj0, axis=1, keepdims=True)
    dinv = jax.lax.rsqrt(deg)                                  # (n, 1)
    dinv_row = jnp.sum(dinv * eye, axis=0, keepdims=True)      # (1, n), no transpose
    adj = adj0 * dinv * dinv_row

    # -------- GCN (bf16 operands at the MXU, f32 accumulate) --------
    # TODO(synk): GCN source not provided; X@W+b then A@support, ReLU between
    # layers is assumed.
    adj_b = adj.astype(bf16)
    hg = x
    n_gcn = len(gcn_offs)
    for i, (w_off, b_off) in enumerate(gcn_offs):
        w = _slab_slice(slab_ref, w_off).astype(bf16)
        b = _slab_slice(slab_ref, b_off)
        support = jnp.dot(hg.astype(bf16), w, preferred_element_type=f32) + b
        hg = jnp.dot(adj_b, support.astype(bf16), preferred_element_type=f32)
        if i < n_gcn - 1:
            hg = jnp.maximum(hg, 0.0)
    embs_graph = hg                                            # (n, gcn_out)

    # -------- single lane-dense packed output slab --------
    out_ref[...] = jnp.zeros(out_ref.shape, out_ref.dtype)
    out_ref[:, c_hom:c_hom + d] = embs_hom
    out_ref[:, c_graph:c_graph + embs_graph.shape[1]] = embs_graph
    out_ref[:, c_a:c_a + n] = a_mat
    out_ref[:, c_y:c_y + d] = y_m


# ------------------------------ Pallas wrappers ------------------------------
def spectral_mlp_pallas(x_orth, slab, offs, n_spec, out_dim):
    n, _ = x_orth.shape
    spec_offs = tuple((offs[f"spec_w{i}"], offs[f"spec_b{i}"])
                      for i in range(n_spec))
    flops = sum(2 * n * offs[f"spec_w{i}"][1] * offs[f"spec_w{i}"][2]
                for i in range(n_spec))
    return pl.pallas_call(
        functools.partial(_spectral_mlp_kernel, spec_offs=spec_offs),
        out_shape=jax.ShapeDtypeStruct((n, out_dim), jnp.float32),
        in_specs=[_VMEM, _VMEM],
        out_specs=_VMEM,
        cost_estimate=pl.CostEstimate(
            flops=flops, transcendentals=n * out_dim,
            bytes_accessed=4 * (x_orth.size + slab.size + n * out_dim)),
    )(x_orth, slab)


def school_fused_pallas(x, idx, affinity, slab, scal, offs,
                        n_spec, n_gcn, out_feat, k):
    n, f = x.shape
    d = offs["orth"][2]                               # spectral output dim
    gcn_out = offs[f"gcn_w{n_gcn - 1}"][2]

    # packed output column layout (8-lane aligned regions)
    c_hom = 0
    c_graph = _ceil(c_hom + d, 8)
    c_a = _ceil(c_graph + gcn_out, 8)
    c_y = _ceil(c_a + n, 8)
    out_w = max(128, _ceil(c_y + d, 128))

    spec_offs = tuple((offs[f"spec_w{i}"], offs[f"spec_b{i}"])
                      for i in range(n_spec))
    gcn_offs = tuple((offs[f"gcn_w{i}"], offs[f"gcn_b{i}"])
                     for i in range(n_gcn))

    flops = sum(2 * n * r * c for (_, r, c) in
                (offs[f"spec_w{i}"] for i in range(n_spec)))
    flops += 2 * n * d * d                            # orthonorm matmul
    flops += 2 * (2 * n * n * d)                      # two Gram matrices
    flops += 2 * n * n * d                            # embs_hom
    flops += sum(2 * n * (r * c + n * c) for (_, r, c) in
                 (offs[f"gcn_w{i}"] for i in range(n_gcn)))
    flops += 30 * n * n                               # distances / proj / scatter
    trans = n * d + 2 * n * n + n
    bytes_acc = 4 * (x.size + idx.size + affinity.size + slab.size
                     + scal.size + n * out_w)

    kernel = functools.partial(
        _school_fused_kernel, n=n, k=k, out_feat=out_feat,
        spec_offs=spec_offs, orth_off=offs["orth"], gcn_offs=gcn_offs,
        c_hom=c_hom, c_graph=c_graph, c_a=c_a, c_y=c_y)

    out = pl.pallas_call(
        kernel,
        out_shape=jax.ShapeDtypeStruct((n, out_w), jnp.float32),
        in_specs=[_SMEM, _VMEM, _VMEM, _VMEM, _VMEM],
        out_specs=_VMEM,
        cost_estimate=pl.CostEstimate(flops=flops, transcendentals=trans,
                                      bytes_accessed=bytes_acc),
    )(scal, x, idx, affinity, slab)

    embs_hom = out[:, c_hom:c_hom + out_feat]
    embs_graph = out[:, c_graph:c_graph + gcn_out]
    a_mat = out[:, c_a:c_a + n]
    y = out[:, c_y:c_y + out_feat]
    return embs_hom, embs_graph, a_mat, y


# ------------------------------ Model pieces --------------------------------
def init_linear(key, fan_in, fan_out):
    kw, kb = jax.random.split(key)
    bound = 1.0 / jnp.sqrt(jnp.float32(fan_in))
    w = jax.random.uniform(kw, (fan_in, fan_out), jnp.float32, -bound, bound)
    b = jax.random.uniform(kb, (fan_out,), jnp.float32, -bound, bound)
    return w, b


def make_orthonorm_weights(y_tilde):
    # TODO(synk): QR decomposition / triangular solve have no clean Pallas
    # equivalent; done in plain JAX (standard SpectralNet orthonormalization).
    m, d = y_tilde.shape
    _, r = jnp.linalg.qr(y_tilde)
    rhs = jnp.sqrt(jnp.float32(m)) * jnp.eye(d, dtype=jnp.float32)
    return jax.scipy.linalg.solve_triangular(r, rhs, lower=False)


def school_forward(x, x_orth, idx, alpha, beta, affinity_matrix,
                   spec_params, gcn_params, is_training=True):
    spec_out_dim = spec_params[-1][0].shape[1]
    n_spec, n_gcn = len(spec_params), len(gcn_params)

    # One packed parameter slab for both kernels (orth region filled later).
    base_slab, offs = build_param_slab(spec_params, gcn_params, spec_out_dim)

    if is_training:
        # spectral_net(x_orth, should_update_orth_weights=True)
        y_tilde_orth = spectral_mlp_pallas(x_orth, base_slab, offs,
                                           n_spec, spec_out_dim)
        orthonorm_weights = make_orthonorm_weights(y_tilde_orth)
    else:
        # TODO(synk): eval should reuse cached orthonorm weights; identity used.
        orthonorm_weights = jnp.eye(spec_out_dim, dtype=jnp.float32)

    slab = jax.lax.dynamic_update_slice(base_slab, orthonorm_weights,
                                        (offs["orth"][0], 0))
    scal = jnp.stack([-0.5 / alpha, beta]).astype(jnp.float32)

    return school_fused_pallas(x, idx.astype(jnp.int32), affinity_matrix,
                               slab, scal, offs, n_spec, n_gcn, OUT_FEAT, K)


school_forward_jit = jax.jit(school_forward, static_argnames="is_training")


# ---------------------------------- main -------------------------------------
if __name__ == "__main__":
    key = jax.random.PRNGKey(0)
    k_x, k_xo, k_p = jax.random.split(key, 3)
    x = jax.random.normal(k_x, (NUM, FEAT), jnp.float32)
    x_orth = jax.random.normal(k_xo, (NUM, FEAT), jnp.float32)

    # kNN indices from pairwise distances of x (column 0 = self).
    d2 = jnp.sum((x[:, None, :] - x[None, :, :]) ** 2, axis=-1)
    idx = jnp.argsort(d2, axis=1)[:, :K + 1].astype(jnp.int32)

    affinity = jnp.exp(-d2 / (2.0 * jnp.mean(d2)))
    affinity = affinity * (1.0 - jnp.eye(NUM, dtype=jnp.float32))
    alpha, beta = 1.0, 0.5

    keys = jax.random.split(k_p, 16)
    spec_dims = (FEAT,) + SPEC_ARCH
    spec_params = [init_linear(keys[i], spec_dims[i], spec_dims[i + 1])
                   for i in range(len(spec_dims) - 1)]
    gcn_dims = (FEAT,) + GCN_ARCH
    gcn_params = [init_linear(keys[8 + i], gcn_dims[i], gcn_dims[i + 1])
                  for i in range(len(gcn_dims) - 1)]

    embs_hom, embs_graph, a_mat, y = school_forward_jit(
        x, x_orth, idx, alpha, beta, affinity,
        spec_params, gcn_params, is_training=True)
    jax.block_until_ready((embs_hom, embs_graph, a_mat, y))

    assert embs_hom.shape == (NUM, OUT_FEAT)
    assert embs_graph.shape == (NUM, GCN_ARCH[-1])
    assert a_mat.shape == (NUM, NUM)
    assert y.shape == (NUM, OUT_FEAT)
    assert bool(jnp.all(jnp.isfinite(embs_hom)) & jnp.all(jnp.isfinite(embs_graph))
                & jnp.all(jnp.isfinite(a_mat)) & jnp.all(jnp.isfinite(y)))
    # Simplex projection: every row of A sums to 1 and is non-negative.
    row_sums = jnp.sum(a_mat, axis=1)
    assert bool(jnp.all(jnp.abs(row_sums - 1.0) < 1e-3))
    assert bool(jnp.all(a_mat >= 0.0))
    print("KERNEL_OK")
</pallas_src>

<mosaic_0001>
module attributes {stable_mosaic.version = 11 : i64} {
  func.func @_spectral_mlp_kernel(%arg0: memref<32x16xf32, #tpu.memory_space<vmem>>, %arg1: memref<128x128xf32, #tpu.memory_space<vmem>>, %arg2: memref<32x16xf32, #tpu.memory_space<vmem>>) attributes {dimension_semantics = [], scalar_prefetch = 0 : i64, scratch_operands = 0 : i64, tpu.core_type = #tpu.core_type<tc>} {
    %c0 = arith.constant 0 : index
    %c0_0 = arith.constant 0 : index
    %0 = vector.load %arg0[%c0, %c0_0] : memref<32x16xf32, #tpu.memory_space<vmem>>, vector<32x16xf32>
    %c0_1 = arith.constant 0 : index
    %c0_2 = arith.constant 0 : index
    %1 = vector.load %arg1[%c0_1, %c0_2] : memref<128x128xf32, #tpu.memory_space<vmem>>, vector<16x32xf32>
    %c16 = arith.constant 16 : index
    %c0_3 = arith.constant 0 : index
    %2 = vector.load %arg1[%c16, %c0_3] : memref<128x128xf32, #tpu.memory_space<vmem>>, vector<1x32xf32>
    %cst = arith.constant dense<0.000000e+00> : vector<32x32xf32>
    %3 = tpu.matmul %0, %1, %cst {dimension_numbers = #tpu.dot_dimension_numbers<[1], [0], [0], [1], [0, 0, 1, 1], [], []>} : vector<32x16xf32>, vector<16x32xf32>, vector<32x32xf32> -> vector<32x32xf32>
    %4 = vector.broadcast %2 : vector<1x32xf32> to vector<32x32xf32>
    %5 = arith.addf %3, %4 : vector<32x32xf32>
    %cst_4 = arith.constant 0.000000e+00 : f32
    %6 = vector.broadcast %cst_4 : f32 to vector<32x32xf32>
    %7 = arith.cmpf oge, %5, %6 : vector<32x32xf32>
    %cst_5 = arith.constant 0.00999999977 : f32
    %8 = vector.broadcast %cst_5 : f32 to vector<32x32xf32>
    %9 = arith.mulf %8, %5 : vector<32x32xf32>
    %10 = arith.select %7, %5, %9 : vector<32x32xi1>, vector<32x32xf32>
    %c24 = arith.constant 24 : index
    %c0_6 = arith.constant 0 : index
    %11 = vector.load %arg1[%c24, %c0_6] : memref<128x128xf32, #tpu.memory_space<vmem>>, vector<32x16xf32>
    %c56 = arith.constant 56 : index
    %c0_7 = arith.constant 0 : index
    %12 = vector.load %arg1[%c56, %c0_7] : memref<128x128xf32, #tpu.memory_space<vmem>>, vector<1x16xf32>
    %cst_8 = arith.constant dense<0.000000e+00> : vector<32x16xf32>
    %13 = tpu.matmul %10, %11, %cst_8 {dimension_numbers = #tpu.dot_dimension_numbers<[1], [0], [0], [1], [0, 0, 1, 1], [], []>} : vector<32x32xf32>, vector<32x16xf32>, vector<32x16xf32> -> vector<32x16xf32>
    %14 = vector.broadcast %12 : vector<1x16xf32> to vector<32x16xf32>
    %15 = arith.addf %13, %14 : vector<32x16xf32>
    %16 = math.tanh %15 : vector<32x16xf32>
    %c0_9 = arith.constant 0 : index
    %c0_10 = arith.constant 0 : index
    %17 = vector.load %arg2[%c0_9, %c0_10] : memref<32x16xf32, #tpu.memory_space<vmem>>, vector<32x16xf32>
    tpu.vector_store %arg2[%c0_9, %c0_10], %16 {strides = array<i32>} : memref<32x16xf32, #tpu.memory_space<vmem>>, vector<32x16xf32>,
    return
  }
}

module attributes {stable_mosaic.version = 11 : i64} {
  func.func @_school_fused_kernel(%arg0: memref<2xf32, #tpu.memory_space<smem>>, %arg1: memref<32x16xf32, #tpu.memory_space<vmem>>, %arg2: memref<32x5xi32, #tpu.memory_space<vmem>>, %arg3: memref<32x32xf32, #tpu.memory_space<vmem>>, %arg4: memref<128x128xf32, #tpu.memory_space<vmem>>, %arg5: memref<32x128xf32, #tpu.memory_space<vmem>>) attributes {dimension_semantics = [], scalar_prefetch = 0 : i64, scratch_operands = 0 : i64, tpu.core_type = #tpu.core_type<tc>} {
    %c0 = arith.constant 0 : index
    %c0_0 = arith.constant 0 : index
    %0 = vector.load %arg1[%c0, %c0_0] : memref<32x16xf32, #tpu.memory_space<vmem>>, vector<32x16xf32>
    %c0_1 = arith.constant 0 : index
    %c0_2 = arith.constant 0 : index
    %1 = vector.load %arg4[%c0_1, %c0_2] : memref<128x128xf32, #tpu.memory_space<vmem>>, vector<16x32xf32>
    %c16 = arith.constant 16 : index
    %c0_3 = arith.constant 0 : index
    %2 = vector.load %arg4[%c16, %c0_3] : memref<128x128xf32, #tpu.memory_space<vmem>>, vector<1x32xf32>
    %cst = arith.constant dense<0.000000e+00> : vector<32x32xf32>
    %3 = tpu.matmul %0, %1, %cst {dimension_numbers = #tpu.dot_dimension_numbers<[1], [0], [0], [1], [0, 0, 1, 1], [], []>} : vector<32x16xf32>, vector<16x32xf32>, vector<32x32xf32> -> vector<32x32xf32>
    %4 = vector.broadcast %2 : vector<1x32xf32> to vector<32x32xf32>
    %5 = arith.addf %3, %4 : vector<32x32xf32>
    %cst_4 = arith.constant 0.000000e+00 : f32
    %6 = vector.broadcast %cst_4 : f32 to vector<32x32xf32>
    %7 = arith.cmpf oge, %5, %6 : vector<32x32xf32>
    %cst_5 = arith.constant 0.00999999977 : f32
    %8 = vector.broadcast %cst_5 : f32 to vector<32x32xf32>
    %9 = arith.mulf %8, %5 : vector<32x32xf32>
    %10 = arith.select %7, %5, %9 : vector<32x32xi1>, vector<32x32xf32>
    %c24 = arith.constant 24 : index
    %c0_6 = arith.constant 0 : index
    %11 = vector.load %arg4[%c24, %c0_6] : memref<128x128xf32, #tpu.memory_space<vmem>>, vector<32x16xf32>
    %c56 = arith.constant 56 : index
    %c0_7 = arith.constant 0 : index
    %12 = vector.load %arg4[%c56, %c0_7] : memref<128x128xf32, #tpu.memory_space<vmem>>, vector<1x16xf32>
    %cst_8 = arith.constant dense<0.000000e+00> : vector<32x16xf32>
    %13 = tpu.matmul %10, %11, %cst_8 {dimension_numbers = #tpu.dot_dimension_numbers<[1], [0], [0], [1], [0, 0, 1, 1], [], []>} : vector<32x32xf32>, vector<32x16xf32>, vector<32x16xf32> -> vector<32x16xf32>
    %14 = vector.broadcast %12 : vector<1x16xf32> to vector<32x16xf32>
    %15 = arith.addf %13, %14 : vector<32x16xf32>
    %16 = math.tanh %15 : vector<32x16xf32>
    %c64 = arith.constant 64 : index
    %c0_9 = arith.constant 0 : index
    %17 = vector.load %arg4[%c64, %c0_9] : memref<128x128xf32, #tpu.memory_space<vmem>>, vector<16x16xf32>
    %cst_10 = arith.constant dense<0.000000e+00> : vector<32x16xf32>
    %18 = tpu.matmul %16, %17, %cst_10 {dimension_numbers = #tpu.dot_dimension_numbers<[1], [0], [0], [1], [0, 0, 1, 1], [], []>} : vector<32x16xf32>, vector<16x16xf32>, vector<32x16xf32> -> vector<32x16xf32>
    %19 = tpu.iota {dimensions = array<i32: 0>} : vector<32x32xi32>
    %20 = tpu.iota {dimensions = array<i32: 1>} : vector<32x32xi32>
    %21 = arith.cmpi eq, %19, %20 : vector<32x32xi32>
    %22 = arith.extui %21 : vector<32x32xi1> to vector<32x32xi32>
    %23 = arith.sitofp %22 : vector<32x32xi32> to vector<32x32xf32>
    %24 = tpu.iota {dimensions = array<i32: 1>} : vector<32x16xi32>
    %c8_i32 = arith.constant 8 : i32
    %25 = vector.broadcast %c8_i32 : i32 to vector<32x16xi32>
    %26 = arith.cmpi slt, %24, %25 : vector<32x16xi32>
    %27 = arith.extui %26 : vector<32x16xi1> to vector<32x16xi32>
    %28 = arith.sitofp %27 : vector<32x16xi32> to vector<32x16xf32>
    %29 = arith.mulf %18, %28 : vector<32x16xf32>
    %cst_11 = arith.constant 1.000000e+00 : f32
    %30 = vector.broadcast %cst_11 : f32 to vector<32x16xf32>
    %31 = arith.subf %30, %28 : vector<32x16xf32>
    %32 = arith.mulf %18, %31 : vector<32x16xf32>
    %cst_12 = arith.constant dense<0.000000e+00> : vector<32x32xf32>
    %33 = tpu.matmul %29, %29, %cst_12 {dimension_numbers = #tpu.dot_dimension_numbers<[1], [1], [0], [0], [0, 0, 1, 0], [], []>} : vector<32x16xf32>, vector<32x16xf32>, vector<32x32xf32> -> vector<32x32xf32>
    %cst_13 = arith.constant dense<0.000000e+00> : vector<32x32xf32>
    %34 = tpu.matmul %32, %32, %cst_13 {dimension_numbers = #tpu.dot_dimension_numbers<[1], [1], [0], [0], [0, 0, 1, 0], [], []>} : vector<32x16xf32>, vector<32x16xf32>, vector<32x32xf32> -> vector<32x32xf32>
    %35 = arith.addf %33, %34 : vector<32x32xf32>
    %36 = arith.mulf %33, %23 : vector<32x32xf32>
    %cst_14 = arith.constant dense<0.000000e+00> : vector<32xf32>
    %37 = vector.multi_reduction <add>, %36, %cst_14 [1] : vector<32x32xf32> to vector<32xf32>
    %38 = vector.shape_cast %37 : vector<32xf32> to vector<32x1xf32>
    %cst_15 = arith.constant dense<0.000000e+00> : vector<32xf32>
    %39 = vector.multi_reduction <add>, %36, %cst_15 [0] : vector<32x32xf32> to vector<32xf32>
    %40 = vector.shape_cast %39 : vector<32xf32> to vector<1x32xf32>
    %41 = vector.broadcast %38 : vector<32x1xf32> to vector<32x32xf32>
    %42 = vector.broadcast %40 : vector<1x32xf32> to vector<32x32xf32>
    %43 = arith.addf %41, %42 : vector<32x32xf32>
    %cst_16 = arith.constant 2.000000e+00 : f32
    %44 = vector.broadcast %cst_16 : f32 to vector<32x32xf32>
    %45 = arith.mulf %44, %33 : vector<32x32xf32>
    %46 = arith.subf %43, %45 : vector<32x32xf32>
    %cst_17 = arith.constant 0.000000e+00 : f32
    %47 = vector.broadcast %cst_17 : f32 to vector<32x32xf32>
    %48 = arith.maximumf %46, %47 : vector<32x32xf32>
    %cst_18 = arith.constant 9.99999993E-9 : f32
    %49 = vector.broadcast %cst_18 : f32 to vector<32x32xf32>
    %50 = arith.addf %48, %49 : vector<32x32xf32>
    %51 = math.sqrt %50 : vector<32x32xf32>
    %52 = arith.mulf %35, %23 : vector<32x32xf32>
    %cst_19 = arith.constant dense<0.000000e+00> : vector<32xf32>
    %53 = vector.multi_reduction <add>, %52, %cst_19 [1] : vector<32x32xf32> to vector<32xf32>
    %54 = vector.shape_cast %53 : vector<32xf32> to vector<32x1xf32>
    %cst_20 = arith.constant dense<0.000000e+00> : vector<32xf32>
    %55 = vector.multi_reduction <add>, %52, %cst_20 [0] : vector<32x32xf32> to vector<32xf32>
    %56 = vector.shape_cast %55 : vector<32xf32> to vector<1x32xf32>
    %57 = vector.broadcast %54 : vector<32x1xf32> to vector<32x32xf32>
    %58 = vector.broadcast %56 : vector<1x32xf32> to vector<32x32xf32>
    %59 = arith.addf %57, %58 : vector<32x32xf32>
    %cst_21 = arith.constant 2.000000e+00 : f32
    %60 = vector.broadcast %cst_21 : f32 to vector<32x32xf32>
    %61 = arith.mulf %60, %35 : vector<32x32xf32>
    %62 = arith.subf %59, %61 : vector<32x32xf32>
    %cst_22 = arith.constant 0.000000e+00 : f32
    %63 = vector.broadcast %cst_22 : f32 to vector<32x32xf32>
    %64 = arith.maximumf %62, %63 : vector<32x32xf32>
    %cst_23 = arith.constant 9.99999993E-9 : f32
    %65 = vector.broadcast %cst_23 : f32 to vector<32x32xf32>
    %66 = arith.addf %64, %65 : vector<32x32xf32>
    %67 = math.sqrt %66 : vector<32x32xf32>
    %c0_24 = arith.constant 0 : index
    %68 = memref.load %arg0[%c0_24] : memref<2xf32, #tpu.memory_space<smem>>
    %c1 = arith.constant 1 : index
    %69 = memref.load %arg0[%c1] : memref<2xf32, #tpu.memory_space<smem>>
    %70 = vector.broadcast %69 : f32 to vector<32x32xf32>
    %71 = arith.mulf %70, %51 : vector<32x32xf32>
    %72 = arith.addf %67, %71 : vector<32x32xf32>
    %73 = vector.broadcast %68 : f32 to vector<32x32xf32>
    %74 = arith.mulf %73, %72 : vector<32x32xf32>
    %c0_25 = arith.constant 0 : index
    %c1_26 = arith.constant 1 : index
    %75 = vector.load %arg2[%c0_25, %c1_26] : memref<32x5xi32, #tpu.memory_space<vmem>>, vector<32x1xi32>
    %76 = vector.broadcast %75 : vector<32x1xi32> to vector<32x32xi32>
    %77 = arith.cmpi eq, %20, %76 : vector<32x32xi32>
    %78 = arith.extui %77 : vector<32x32xi1> to vector<32x32xi32>
    %79 = arith.sitofp %78 : vector<32x32xi32> to vector<32x32xf32>
    %80 = arith.mulf %74, %79 : vector<32x32xf32>
    %cst_27 = arith.constant dense<0.000000e+00> : vector<32xf32>
    %81 = vector.multi_reduction <add>, %80, %cst_27 [1] : vector<32x32xf32> to vector<32xf32>
    %82 = vector.shape_cast %81 : vector<32xf32> to vector<32x1xf32>
    %c0_28 = arith.constant 0 : index
    %c2 = arith.constant 2 : index
    %83 = vector.load %arg2[%c0_28, %c2] : memref<32x5xi32, #tpu.memory_space<vmem>>, vector<32x1xi32>
    %84 = vector.broadcast %83 : vector<32x1xi32> to vector<32x32xi32>
    %85 = arith.cmpi eq, %20, %84 : vector<32x32xi32>
    %86 = arith.extui %85 : vector<32x32xi1> to vector<32x32xi32>
    %87 = arith.sitofp %86 : vector<32x32xi32> to vector<32x32xf32>
    %88 = arith.mulf %74, %87 : vector<32x32xf32>
    %cst_29 = arith.constant dense<0.000000e+00> : vector<32xf32>
    %89 = vector.multi_reduction <add>, %88, %cst_29 [1] : vector<32x32xf32> to vector<32xf32>
    %90 = vector.shape_cast %89 : vector<32xf32> to vector<32x1xf32>
    %c0_30 = arith.constant 0 : index
    %c3 = arith.constant 3 : index
    %91 = vector.load %arg2[%c0_30, %c3] : memref<32x5xi32, #tpu.memory_space<vmem>>, vector<32x1xi32>
    %92 = vector.broadcast %91 : vector<32x1xi32> to vector<32x32xi32>
    %93 = arith.cmpi eq, %20, %92 : vector<32x32xi32>
    %94 = arith.extui %93 : vector<32x32xi1> to vector<32x32xi32>
    %95 = arith.sitofp %94 : vector<32x32xi32> to vector<32x32xf32>
    %96 = arith.mulf %74, %95 : vector<32x32xf32>
    %cst_31 = arith.constant dense<0.000000e+00> : vector<32xf32>
    %97 = vector.multi_reduction <add>, %96, %cst_31 [1] : vector<32x32xf32> to vector<32xf32>
    %98 = vector.shape_cast %97 : vector<32xf32> to vector<32x1xf32>
    %c0_32 = arith.constant 0 : index
    %c4 = arith.constant 4 : index
    %99 = vector.load %arg2[%c0_32, %c4] : memref<32x5xi32, #tpu.memory_space<vmem>>, vector<32x1xi32>
    %100 = vector.broadcast %99 : vector<32x1xi32> to vector<32x32xi32>
    %101 = arith.cmpi eq, %20, %100 : vector<32x32xi32>
    %102 = arith.extui %101 : vector<32x32xi1> to vector<32x32xi32>
    %103 = arith.sitofp %102 : vector<32x32xi32> to vector<32x32xf32>
    %104 = arith.mulf %74, %103 : vector<32x32xf32>
    %cst_33 = arith.constant dense<0.000000e+00> : vector<32xf32>
    %105 = vector.multi_reduction <add>, %104, %cst_33 [1] : vector<32x32xf32> to vector<32xf32>
    %106 = vector.shape_cast %105 : vector<32xf32> to vector<32x1xf32>
    %107 = arith.maximumf %82, %90 : vector<32x1xf32>
    %108 = arith.minimumf %82, %90 : vector<32x1xf32>
    %109 = arith.maximumf %98, %106 : vector<32x1xf32>
    %110 = arith.minimumf %98, %106 : vector<32x1xf32>
    %111 = arith.maximumf %108, %109 : vector<32x1xf32>
    %112 = arith.minimumf %108, %109 : vector<32x1xf32>
    %113 = arith.maximumf %107, %111 : vector<32x1xf32>
    %114 = arith.minimumf %107, %111 : vector<32x1xf32>
    %115 = arith.maximumf %112, %110 : vector<32x1xf32>
    %116 = arith.minimumf %112, %110 : vector<32x1xf32>
    %117 = arith.maximumf %114, %115 : vector<32x1xf32>
    %118 = arith.minimumf %114, %115 : vector<32x1xf32>
    %cst_34 = arith.constant 0.000000e+00 : f32
    %119 = vector.broadcast %cst_34 : f32 to vector<32x1xf32>
    %120 = arith.addf %119, %113 : vector<32x1xf32>
    %cst_35 = arith.constant 1.000000e+00 : f32
    %121 = vector.broadcast %cst_35 : f32 to vector<32x1xf32>
    %122 = arith.subf %120, %121 : vector<32x1xf32>
    %123 = arith.addf %120, %117 : vector<32x1xf32>
    %cst_36 = arith.constant 1.000000e+00 : f32
    %124 = vector.broadcast %cst_36 : f32 to vector<32x1xf32>
    %125 = arith.subf %123, %124 : vector<32x1xf32>
    %126 = arith.addf %123, %118 : vector<32x1xf32>
    %cst_37 = arith.constant 1.000000e+00 : f32
    %127 = vector.broadcast %cst_37 : f32 to vector<32x1xf32>
    %128 = arith.subf %126, %127 : vector<32x1xf32>
    %129 = arith.addf %126, %116 : vector<32x1xf32>
    %cst_38 = arith.constant 1.000000e+00 : f32
    %130 = vector.broadcast %cst_38 : f32 to vector<32x1xf32>
    %131 = arith.subf %129, %130 : vector<32x1xf32>
    %cst_39 = arith.constant 1.000000e+00 : f32
    %132 = vector.broadcast %cst_39 : f32 to vector<32x1xf32>
    %133 = arith.divf %122, %132 : vector<32x1xf32>
    %134 = arith.subf %113, %133 : vector<32x1xf32>
    %cst_40 = arith.constant 0.000000e+00 : f32
    %135 = vector.broadcast %cst_40 : f32 to vector<32x1xf32>
    %136 = arith.cmpf ogt, %134, %135 : vector<32x1xf32>
    %137 = arith.extui %136 : vector<32x1xi1> to vector<32x1xi32>
    %138 = arith.sitofp %137 : vector<32x1xi32> to vector<32x1xf32>
    %cst_41 = arith.constant 2.000000e+00 : f32
    %139 = vector.broadcast %cst_41 : f32 to vector<32x1xf32>
    %140 = arith.divf %125, %139 : vector<32x1xf32>
    %141 = arith.subf %117, %140 : vector<32x1xf32>
    %cst_42 = arith.constant 0.000000e+00 : f32
    %142 = vector.broadcast %cst_42 : f32 to vector<32x1xf32>
    %143 = arith.cmpf ogt, %141, %142 : vector<32x1xf32>
    %144 = arith.extui %143 : vector<32x1xi1> to vector<32x1xi32>
    %145 = arith.sitofp %144 : vector<32x1xi32> to vector<32x1xf32>
    %cst_43 = arith.constant 3.000000e+00 : f32
    %146 = vector.broadcast %cst_43 : f32 to vector<32x1xf32>
    %147 = arith.divf %128, %146 : vector<32x1xf32>
    %148 = arith.subf %118, %147 : vector<32x1xf32>
    %cst_44 = arith.constant 0.000000e+00 : f32
    %149 = vector.broadcast %cst_44 : f32 to vector<32x1xf32>
    %150 = arith.cmpf ogt, %148, %149 : vector<32x1xf32>
    %151 = arith.extui %150 : vector<32x1xi1> to vector<32x1xi32>
    %152 = arith.sitofp %151 : vector<32x1xi32> to vector<32x1xf32>
    %cst_45 = arith.constant 4.000000e+00 : f32
    %153 = vector.broadcast %cst_45 : f32 to vector<32x1xf32>
    %154 = arith.divf %131, %153 : vector<32x1xf32>
    %155 = arith.subf %116, %154 : vector<32x1xf32>
    %cst_46 = arith.constant 0.000000e+00 : f32
    %156 = vector.broadcast %cst_46 : f32 to vector<32x1xf32>
    %157 = arith.cmpf ogt, %155, %156 : vector<32x1xf32>
    %158 = arith.extui %157 : vector<32x1xi1> to vector<32x1xi32>
    %159 = arith.sitofp %158 : vector<32x1xi32> to vector<32x1xf32>
    %160 = arith.addf %138, %145 : vector<32x1xf32>
    %161 = arith.addf %160, %152 : vector<32x1xf32>
    %162 = arith.addf %161, %159 : vector<32x1xf32>
    %cst_47 = arith.constant 0.000000e+00 : f32
    %163 = vector.broadcast %cst_47 : f32 to vector<32x1xf32>
    %cst_48 = arith.constant 1.000000e+00 : f32
    %164 = vector.broadcast %cst_48 : f32 to vector<32x1xf32>
    %165 = arith.cmpf oeq, %162, %164 : vector<32x1xf32>
    %cst_49 = arith.constant 0.000000e+00 : f32
    %166 = vector.broadcast %cst_49 : f32 to vector<32x1xf32>
    %167 = arith.select %165, %122, %166 : vector<32x1xi1>, vector<32x1xf32>
    %168 = arith.addf %163, %167 : vector<32x1xf32>
    %cst_50 = arith.constant 2.000000e+00 : f32
    %169 = vector.broadcast %cst_50 : f32 to vector<32x1xf32>
    %170 = arith.cmpf oeq, %162, %169 : vector<32x1xf32>
    %cst_51 = arith.constant 0.000000e+00 : f32
    %171 = vector.broadcast %cst_51 : f32 to vector<32x1xf32>
    %172 = arith.select %170, %125, %171 : vector<32x1xi1>, vector<32x1xf32>
    %173 = arith.addf %168, %172 : vector<32x1xf32>
    %cst_52 = arith.constant 3.000000e+00 : f32
    %174 = vector.broadcast %cst_52 : f32 to vector<32x1xf32>
    %175 = arith.cmpf oeq, %162, %174 : vector<32x1xf32>
    %cst_53 = arith.constant 0.000000e+00 : f32
    %176 = vector.broadcast %cst_53 : f32 to vector<32x1xf32>
    %177 = arith.select %175, %128, %176 : vector<32x1xi1>, vector<32x1xf32>
    %178 = arith.addf %173, %177 : vector<32x1xf32>
    %cst_54 = arith.constant 4.000000e+00 : f32
    %179 = vector.broadcast %cst_54 : f32 to vector<32x1xf32>
    %180 = arith.cmpf oeq, %162, %179 : vector<32x1xf32>
    %cst_55 = arith.constant 0.000000e+00 : f32
    %181 = vector.broadcast %cst_55 : f32 to vector<32x1xf32>
    %182 = arith.select %180, %131, %181 : vector<32x1xi1>, vector<32x1xf32>
    %183 = arith.addf %178, %182 : vector<32x1xf32>
    %184 = arith.divf %183, %162 : vector<32x1xf32>
    %cst_56 = arith.constant 0.000000e+00 : f32
    %185 = vector.broadcast %cst_56 : f32 to vector<32x32xf32>
    %186 = arith.subf %82, %184 : vector<32x1xf32>
    %cst_57 = arith.constant 0.000000e+00 : f32
    %187 = vector.broadcast %cst_57 : f32 to vector<32x1xf32>
    %188 = arith.maximumf %186, %187 : vector<32x1xf32>
    %189 = vector.broadcast %188 : vector<32x1xf32> to vector<32x32xf32>
    %190 = arith.mulf %189, %79 : vector<32x32xf32>
    %191 = arith.addf %185, %190 : vector<32x32xf32>
    %192 = arith.subf %90, %184 : vector<32x1xf32>
    %cst_58 = arith.constant 0.000000e+00 : f32
    %193 = vector.broadcast %cst_58 : f32 to vector<32x1xf32>
    %194 = arith.maximumf %192, %193 : vector<32x1xf32>
    %195 = vector.broadcast %194 : vector<32x1xf32> to vector<32x32xf32>
    %196 = arith.mulf %195, %87 : vector<32x32xf32>
    %197 = arith.addf %191, %196 : vector<32x32xf32>
    %198 = arith.subf %98, %184 : vector<32x1xf32>
    %cst_59 = arith.constant 0.000000e+00 : f32
    %199 = vector.broadcast %cst_59 : f32 to vector<32x1xf32>
    %200 = arith.maximumf %198, %199 : vector<32x1xf32>
    %201 = vector.broadcast %200 : vector<32x1xf32> to vector<32x32xf32>
    %202 = arith.mulf %201, %95 : vector<32x32xf32>
    %203 = arith.addf %197, %202 : vector<32x32xf32>
    %204 = arith.subf %106, %184 : vector<32x1xf32>
    %cst_60 = arith.constant 0.000000e+00 : f32
    %205 = vector.broadcast %cst_60 : f32 to vector<32x1xf32>
    %206 = arith.maximumf %204, %205 : vector<32x1xf32>
    %207 = vector.broadcast %206 : vector<32x1xf32> to vector<32x32xf32>
    %208 = arith.mulf %207, %103 : vector<32x32xf32>
    %209 = arith.addf %203, %208 : vector<32x32xf32>
    %210 = arith.mulf %16, %28 : vector<32x16xf32>
    %cst_61 = arith.constant dense<0.000000e+00> : vector<32x16xf32>
    %211 = tpu.matmul %209, %210, %cst_61 {dimension_numbers = #tpu.dot_dimension_numbers<[1], [0], [0], [1], [0, 0, 1, 1], [], []>} : vector<32x32xf32>, vector<32x16xf32>, vector<32x16xf32> -> vector<32x16xf32>
    %c0_62 = arith.constant 0 : index
    %c0_63 = arith.constant 0 : index
    %212 = vector.load %arg3[%c0_62, %c0_63] : memref<32x32xf32, #tpu.memory_space<vmem>>, vector<32x32xf32>
    %213 = arith.addf %212, %23 : vector<32x32xf32>
    %cst_64 = arith.constant dense<0.000000e+00> : vector<32xf32>
    %214 = vector.multi_reduction <add>, %213, %cst_64 [1] : vector<32x32xf32> to vector<32xf32>
    %215 = vector.shape_cast %214 : vector<32xf32> to vector<32x1xf32>
    %216 = math.rsqrt %215 : vector<32x1xf32>
    %217 = vector.broadcast %216 : vector<32x1xf32> to vector<32x32xf32>
    %218 = arith.mulf %217, %23 : vector<32x32xf32>
    %cst_65 = arith.constant dense<0.000000e+00> : vector<32xf32>
    %219 = vector.multi_reduction <add>, %218, %cst_65 [0] : vector<32x32xf32> to vector<32xf32>
    %220 = vector.shape_cast %219 : vector<32xf32> to vector<1x32xf32>
    %221 = vector.broadcast %216 : vector<32x1xf32> to vector<32x32xf32>
    %222 = arith.mulf %213, %221 : vector<32x32xf32>
    %223 = vector.broadcast %220 : vector<1x32xf32> to vector<32x32xf32>
    %224 = arith.mulf %222, %223 : vector<32x32xf32>
    %225 = arith.truncf %224 : vector<32x32xf32> to vector<32x32xbf16>
    %c80 = arith.constant 80 : index
    %c0_66 = arith.constant 0 : index
    %226 = vector.load %arg4[%c80, %c0_66] : memref<128x128xf32, #tpu.memory_space<vmem>>, vector<16x16xf32>
    %227 = arith.truncf %226 : vector<16x16xf32> to vector<16x16xbf16>
    %c96 = arith.constant 96 : index
    %c0_67 = arith.constant 0 : index
    %228 = vector.load %arg4[%c96, %c0_67] : memref<128x128xf32, #tpu.memory_space<vmem>>, vector<1x16xf32>
    %229 = arith.truncf %0 : vector<32x16xf32> to vector<32x16xbf16>
    %cst_68 = arith.constant dense<0.000000e+00> : vector<32x16xf32>
    %230 = tpu.matmul %229, %227, %cst_68 {dimension_numbers = #tpu.dot_dimension_numbers<[1], [0], [0], [1], [0, 0, 1, 1], [], []>} : vector<32x16xbf16>, vector<16x16xbf16>, vector<32x16xf32> -> vector<32x16xf32>
    %231 = vector.broadcast %228 : vector<1x16xf32> to vector<32x16xf32>
    %232 = arith.addf %230, %231 : vector<32x16xf32>
    %233 = arith.truncf %232 : vector<32x16xf32> to vector<32x16xbf16>
    %cst_69 = arith.constant dense<0.000000e+00> : vector<32x16xf32>
    %234 = tpu.matmul %225, %233, %cst_69 {dimension_numbers = #tpu.dot_dimension_numbers<[1], [0], [0], [1], [0, 0, 1, 1], [], []>} : vector<32x32xbf16>, vector<32x16xbf16>, vector<32x16xf32> -> vector<32x16xf32>
    %cst_70 = arith.constant 0.000000e+00 : f32
    %235 = vector.broadcast %cst_70 : f32 to vector<32x16xf32>
    %236 = arith.maximumf %234, %235 : vector<32x16xf32>
    %c104 = arith.constant 104 : index
    %c0_71 = arith.constant 0 : index
    %237 = vector.load %arg4[%c104, %c0_71] : memref<128x128xf32, #tpu.memory_space<vmem>>, vector<16x8xf32>
    %238 = arith.truncf %237 : vector<16x8xf32> to vector<16x8xbf16>
    %c120 = arith.constant 120 : index
    %c0_72 = arith.constant 0 : index
    %239 = vector.load %arg4[%c120, %c0_72] : memref<128x128xf32, #tpu.memory_space<vmem>>, vector<1x8xf32>
    %240 = arith.truncf %236 : vector<32x16xf32> to vector<32x16xbf16>
    %cst_73 = arith.constant dense<0.000000e+00> : vector<32x8xf32>
    %241 = tpu.matmul %240, %238, %cst_73 {dimension_numbers = #tpu.dot_dimension_numbers<[1], [0], [0], [1], [0, 0, 1, 1], [], []>} : vector<32x16xbf16>, vector<16x8xbf16>, vector<32x8xf32> -> vector<32x8xf32>
    %242 = vector.broadcast %239 : vector<1x8xf32> to vector<32x8xf32>
    %243 = arith.addf %241, %242 : vector<32x8xf32>
    %244 = arith.truncf %243 : vector<32x8xf32> to vector<32x8xbf16>
    %cst_74 = arith.constant dense<0.000000e+00> : vector<32x8xf32>
    %245 = tpu.matmul %225, %244, %cst_74 {dimension_numbers = #tpu.dot_dimension_numbers<[1], [0], [0], [1], [0, 0, 1, 1], [], []>} : vector<32x32xbf16>, vector<32x8xbf16>, vector<32x8xf32> -> vector<32x8xf32>
    %cst_75 = arith.constant 0.000000e+00 : f32
    %246 = vector.broadcast %cst_75 : f32 to vector<32x128xf32>
    %c0_76 = arith.constant 0 : index
    %c0_77 = arith.constant 0 : index
    %247 = vector.load %arg5[%c0_76, %c0_77] : memref<32x128xf32, #tpu.memory_space<vmem>>, vector<32x128xf32>
    tpu.vector_store %arg5[%c0_76, %c0_77], %246 {strides = array<i32>} : memref<32x128xf32, #tpu.memory_space<vmem>>, vector<32x128xf32>,
    %c0_78 = arith.constant 0 : index
    %c0_79 = arith.constant 0 : index
    %248 = vector.load %arg5[%c0_78, %c0_79] : memref<32x128xf32, #tpu.memory_space<vmem>>, vector<32x16xf32>
    tpu.vector_store %arg5[%c0_78, %c0_79], %211 {strides = array<i32>} : memref<32x128xf32, #tpu.memory_space<vmem>>, vector<32x16xf32>,
    %c0_80 = arith.constant 0 : index
    %c16_81 = arith.constant 16 : index
    %249 = vector.load %arg5[%c0_80, %c16_81] : memref<32x128xf32, #tpu.memory_space<vmem>>, vector<32x8xf32>
    tpu.vector_store %arg5[%c0_80, %c16_81], %245 {strides = array<i32>} : memref<32x128xf32, #tpu.memory_space<vmem>>, vector<32x8xf32>,
    %c0_82 = arith.constant 0 : index
    %c24_83 = arith.constant 24 : index
    %250 = vector.load %arg5[%c0_82, %c24_83] : memref<32x128xf32, #tpu.memory_space<vmem>>, vector<32x32xf32>
    tpu.vector_store %arg5[%c0_82, %c24_83], %209 {strides = array<i32>} : memref<32x128xf32, #tpu.memory_space<vmem>>, vector<32x32xf32>,
    %c0_84 = arith.constant 0 : index
    %c56_85 = arith.constant 56 : index
    %251 = vector.load %arg5[%c0_84, %c56_85] : memref<32x128xf32, #tpu.memory_space<vmem>>, vector<32x16xf32>
    tpu.vector_store %arg5[%c0_84, %c56_85], %29 {strides = array<i32>} : memref<32x128xf32, #tpu.memory_space<vmem>>, vector<32x16xf32>,
    return
  }
}

</mosaic_0001>

<llo_original>
// kernel: custom-call.6
$region0: #{custom-call.6}
  %s0 = inlined_call_operand.vmem [shape: f32[32,16], index: 0, kind: input, shape index: {}]
  %s1 = inlined_call_operand.vmem [shape: f32[32,16], index: 1, kind: output, shape index: {0}]
  %s2 = inlined_call_operand.hbm [shape: f32[16], index: 2, kind: output, shape index: {1}]
  %3 = xla_tuple %s1, %s2
  $region1: #{custom-call.6} parent=0
    #allocation0 [shape = 'u8[16384]{0}', space=vmem, size = 0x4000, scoped, tag = 'operand span for operand 0']
    #allocation1 [shape = 'u8[16384]{0}', space=vmem, size = 0x4000, scoped, tag = 'operand span for operand 1']
    #allocation2 [shape = 'u8[4096]{0}', space=vmem, size = 0x1000, scoped, tag = 'operand span for operand 2']
    #allocation3 [shape = 'u8[512]{0}', space=vmem, size = 0x400, scoped, tag = 'packed  for operand 2']
    #allocation4 [shape = 's32[1]{0}', space=sflag, size = 0x4, scoped, tag = 'scoped memory for custom-call.6']
    #allocation5 [shape = 'f32[32,128]{1,0}', space=vmem, size = 0x4000, scoped, tag = 'scratch for Householder reflectors']
    %4 = vsyncpa [#allocation4], 0
    // Predicated region
    $region2: #{custom-call.6} parent=1 // pred_check
      _
    $region3: #{custom-call.6} parent=1 // pred_check_branch
      %6 = sbr.rel (0) target = $region5
    $region4: #{custom-call.6} parent=1 // pred_region
      // Predicated region
      $region6: #{custom-call.6} parent=4 // pred_check
        _
      $region7: #{custom-call.6} parent=4 // pred_check_branch
        %8 = sbr.rel (0) target = $region9
      $region8: #{custom-call.6} parent=4 // pred_region
        // Predicated region
        $region21: #{custom-call.6} parent=8 // pred_check
          _
        $region22: #{custom-call.6} parent=8 // pred_check_branch
          %29 = sbr.rel (0) target = $region24
        $region23: #{custom-call.6} parent=8 // pred_region
          loop: start=0, step=1, limit=1
          $region25: #{custom-call.6} parent=23 // loop_pre_header
            _
          $region26: #{custom-call.6} parent=23 // loop_header
            %s31 = sphi 0, %s35
            %p32 = scmp.ge.s32.totalorder %s31, 1
            %s36 = sphi %s0, %s0
            %s37 = sphi [#allocation0], [#allocation0]
          $region27: #{custom-call.6} parent=23 // loop_header_branch
            %34 = sbr.rel (%p32) target = $region31
          $region28: #{custom-call.6} parent=23 // loop_body
            %v38 = vld [vmem:[%s36] sm:$0xff]
            %39 = vst [vmem:[%s37] sm:$0xff] %v38
            %v40 = vld [vmem:[%s36 + $0x8] sm:$0xff]
            %41 = vst [vmem:[%s37 + $0x8] sm:$0xff] %v40
            %v42 = vld [vmem:[%s36 + $0x10] sm:$0xff]
            %43 = vst [vmem:[%s37 + $0x10] sm:$0xff] %v42
            %v44 = vld [vmem:[%s36 + $0x18] sm:$0xff]
            %45 = vst [vmem:[%s37 + $0x18] sm:$0xff] %v44
          $region29: #{custom-call.6} parent=23 // loop_footer
            %s35 = sadd.s32 1, %s31
          $region30: #{custom-call.6} parent=23 // loop_footer_branch
            %30 = sbr.rel target = $region26
          $region31: #{custom-call.6} parent=23 // loop_exit
            _
        $region24: #{custom-call.6} parent=8 // pred_fallthru
          _
        // Predicated region
        $region32: #{custom-call.6} parent=8 // pred_check
          _
        $region33: #{custom-call.6} parent=8 // pred_check_branch
          %47 = sbr.rel target = $region35
        $region34: #{custom-call.6} parent=8 // pred_region
          _
        $region35: #{custom-call.6} parent=8 // pred_fallthru
          _
      $region9: #{custom-call.6} parent=4 // pred_fallthru
        _
      // Predicated region
      $region10: #{custom-call.6} parent=4 // pred_check
        _
      $region11: #{custom-call.6} parent=4 // pred_check_branch
        %10 = sbr.rel target = $region13
      $region12: #{custom-call.6} parent=4 // pred_region
        loop: start=0, step=1, limit=1
        $region14: #{custom-call.6} parent=12 // loop_pre_header
          _
        $region15: #{custom-call.6} parent=12 // loop_header
          %s13 = sphi 0, %s17
          %p14 = scmp.ge.s32.totalorder %s13, 1
          %s18 = sphi %s0, %s0
          %s19 = sphi [#allocation0], [#allocation0]
        $region16: #{custom-call.6} parent=12 // loop_header_branch
          %16 = sbr.rel (%p14) target = $region20
        $region17: #{custom-call.6} parent=12 // loop_body
          %v20 = vld [vmem:[%s18] sm:$0xff]
          %21 = vst [vmem:[%s19] sm:$0xff] %v20
          %v22 = vld [vmem:[%s18 + $0x8] sm:$0xff]
          %23 = vst [vmem:[%s19 + $0x8] sm:$0xff] %v22
          %v24 = vld [vmem:[%s18 + $0x10] sm:$0xff]
          %25 = vst [vmem:[%s19 + $0x10] sm:$0xff] %v24
          %v26 = vld [vmem:[%s18 + $0x18] sm:$0xff]
          %27 = vst [vmem:[%s19 + $0x18] sm:$0xff] %v26
        $region18: #{custom-call.6} parent=12 // loop_footer
          %s17 = sadd.s32 1, %s13
        $region19: #{custom-call.6} parent=12 // loop_footer_branch
          %12 = sbr.rel target = $region15
        $region20: #{custom-call.6} parent=12 // loop_exit
          _
      $region13: #{custom-call.6} parent=4 // pred_fallthru
        _
    $region5: #{custom-call.6} parent=1 // pred_fallthru
      _
    %48 = vnop
    %v49 = vld [vmem:[#allocation0] sm:$0xff]
    %50 = vst [vmem:[#allocation1] sm:$0xff] %v49
    %s51 = scalar_lea.vmem [#allocation1], 8
    %s52 = scalar_lea.vmem [#allocation0], 8
    %v53 = vld [vmem:[%s52] sm:$0xff]
    %54 = vst [vmem:[%s51] sm:$0xff] %v53
    %s55 = scalar_lea.vmem [#allocation1], 16
    %s56 = scalar_lea.vmem [#allocation0], 16
    %v57 = vld [vmem:[%s56] sm:$0xff]
    %58 = vst [vmem:[%s55] sm:$0xff] %v57
    %s59 = scalar_lea.vmem [#allocation1], 24
    %s60 = scalar_lea.vmem [#allocation0], 24
    %v61 = vld [vmem:[%s60] sm:$0xff]
    %62 = vst [vmem:[%s59] sm:$0xff] %v61
    %63 = vst [vmem:[#allocation2] sm:$0x1] 0.0
    loop: start=0, step=1, limit=16
    $region36: #{custom-call.6} parent=1 // loop_pre_header
      _
    $region37: #{custom-call.6} parent=1 // loop_header
      %s65 = sphi 0, %s69
      %p66 = scmp.ge.s32.totalorder %s65, 16
    $region38: #{custom-call.6} parent=1 // loop_header_branch
      %68 = sbr.rel (%p66) target = $region42
    $region39: #{custom-call.6} parent=1 // loop_body
      %v70 = vld [vmem:[#allocation1] sm:$0xff]
      %v71 = vlaneseq
      %v72 = vshrl.u32 %v71, 7
      %v74 = vstv %s65
      %vm75 = vcmp.gt.s32.totalorder %v72, %v74
      %v76 = vsel %vm75, %v70, 0.0
      %v77 = vmul.f32 %v76, %v76
      %s78 = scalar_lea.vmem [#allocation1], 8
      %v79 = vld [vmem:[%s78] sm:$0xff]
      %v80 = vlaneseq
      %v81 = vshrl.u32 %v80, 7
      %v82 = vadd.s32 %v81, 8
      %v83 = vstv %s65
      %vm84 = vcmp.gt.s32.totalorder %v82, %v83
      %v85 = vsel %vm84, %v79, 0.0
      %v86 = vmul.f32 %v85, %v85
      %v87 = vadd.f32 %v77, %v86
      %s88 = scalar_lea.vmem [#allocation1], 16
      %v89 = vld [vmem:[%s88] sm:$0xff]
      %v90 = vlaneseq
      %v91 = vshrl.u32 %v90, 7
      %v92 = vadd.s32 %v91, 16
      %v93 = vstv %s65
      %vm94 = vcmp.gt.s32.totalorder %v92, %v93
      %v95 = vsel %vm94, %v89, 0.0
      %v96 = vmul.f32 %v95, %v95
      %v97 = vadd.f32 %v87, %v96
      %s98 = scalar_lea.vmem [#allocation1], 24
      %v99 = vld [vmem:[%s98] sm:$0xff]
      %v100 = vlaneseq
      %v101 = vshrl.u32 %v100, 7
      %v102 = vadd.s32 %v101, 24
      %v103 = vstv %s65
      %vm104 = vcmp.gt.s32.totalorder %v102, %v103
      %vm105 = vcmp.lt.s32.totalorder %v102, 32
      %vm106 = vmand %vm104, %vm105
      %v107 = vsel %vm106, %v99, 0.0
      %v108 = vmul.f32 %v107, %v107
      %v109 = vadd.f32 %v97, %v108
      %v110 = vrot.slane %v109, 4
      %v111 = vadd.f32 %v109, %v110
      %v112 = vrot.slane %v111, 2
      %v113 = vadd.f32 %v111, %v112
      %v114 = vrot.slane %v113, 1
      %v115 = vadd.f32 %v113, %v114
      %v116 = vrsqrt.pop %v115
      %v117 = vmul.f32 %v115, %v116
      %vm118 = vcmp.eq.f32.partialorder %v115, inf
      %v119 = vsel %vm118, %v115, %v117
      %vm120 = vcmp.eq.f32.partialorder %v115, 0.0
      %v121 = vand.u32 %v115, 2147483648
      %v122 = vsel %vm120, %v121, %v119
      %vm123 = vcmp.eq.f32.partialorder %v115, 0.0
      %s124 = sshrl.u32 %s65, 3
      %s125 = sand.u32 %s65, 7
      %s126 = smul.addr %s124, 8
      %s127 = sadd.s32 %s125, %s126
      %s128 = scalar_lea.vmem [#allocation1], %s127
      %v129 = vld [vmem:[%s128] ss:$0 sm:$0xff]
      %v130 = vand.u32 2147483647, %v129
      %v131 = vmax.f32 %v130, 0.0
      %v132 = vand.u32 2147483647, %v122
      %v133 = vmax.f32 %v131, %v132
      %v134 = vrcp.pop %v133
      %v135 = vmul.f32 %v130, %v134
      %v136 = vmul.f32 %v135, %v135
      %v137 = vrcp.pop %v133
      %v138 = vmul.f32 0.0, %v137
      %v139 = vmul.f32 %v138, %v138
      %v140 = vadd.f32 %v136, %v139
      %v141 = vrcp.pop %v133
      %v142 = vmul.f32 %v132, %v141
      %v143 = vmul.f32 %v142, %v142
      %v144 = vadd.f32 %v140, %v143
      %vm145 = vcmp.eq.f32.partialorder %v133, 0.0
      %v146 = vrsqrt.pop %v144
      %v147 = vmul.f32 %v144, %v146
      %vm148 = vcmp.eq.f32.partialorder %v144, inf
      %v149 = vsel %vm148, %v144, %v147
      %vm150 = vcmp.eq.f32.partialorder %v144, 0.0
      %v151 = vand.u32 %v144, 2147483648
      %v152 = vsel %vm150, %v151, %v149
      %v153 = vmul.f32 %v133, %v152
      %v154 = vsel %vm145, 0.0, %v153
      %vm155 = vcmp.lt.f32.partialorder %v129, 0.0
      %v156 = vxor.u32 %v154, 2147483648
      %v157 = vsel %vm155, %v154, %v156
      %v158 = vsub.f32 %v157, %v129
      %v159 = vrcp.pop %v157
      %v160 = vmul.f32 %v158, %v159
      %v161 = vsel %vm123, %v129, %v157
      %v162 = vsel %vm123, 0.0, %v160
      %v163 = vsub.f32 %v129, %v161
      %s164 = smov [#allocation1]
      %v165 = vlaneseq
      %v166 = vshrl.u32 %v165, 7
      %v167 = vmov %v166
      %v168 = vld [vmem:[%s164] sm:$0xff]
      %v170 = vstv %s65
      %vm171 = vcmp.gt.s32.totalorder %v167, %v170
      %v172 = vsel %vm171, %v168, 0.0
      %v173 = vrcp.pop %v163
      %v174 = vmul.f32 %v172, %v173
      %v175 = vsel %vm123, 0.0, %v174
      %v176 = vstv %s65
      %v177 = vlaneseq
      %v178 = vand.u32 %v177, 127
      %vm179 = vcmp.eq.s32.totalorder %v178, %v176
      %v180 = vsel %vm179, %v175, 0.0
      %181 = vadd.xlane.f32.xlu0 %v180
      %v182 = vpop.xlane.xlu0 %181
      %183 = vst [vmem:[#allocation5] sm:$0xff] %v182
      %s184 = scalar_lea.vmem %s164, 8
      %v185 = vld [vmem:[%s184] sm:$0xff]
      %v186 = vadd.s32 %v167, 8
      %v187 = vstv %s65
      %vm188 = vcmp.gt.s32.totalorder %v186, %v187
      %v189 = vsel %vm188, %v185, 0.0
      %v190 = vrcp.pop %v163
      %v191 = vmul.f32 %v189, %v190
      %v192 = vsel %vm123, 0.0, %v191
      %v193 = vstv %s65
      %v194 = vlaneseq
      %v195 = vand.u32 %v194, 127
      %vm196 = vcmp.eq.s32.totalorder %v195, %v193
      %v197 = vsel %vm196, %v192, 0.0
      %198 = vadd.xlane.f32.xlu0 %v197
      %v199 = vpop.xlane.xlu0 %198
      %s200 = scalar_lea.vmem [#allocation5], 8
      %201 = vst [vmem:[%s200] sm:$0xff] %v199
      %s202 = scalar_lea.vmem %s164, 16
      %v203 = vld [vmem:[%s202] sm:$0xff]
      %v204 = vadd.s32 %v167, 16
      %v205 = vstv %s65
      %vm206 = vcmp.gt.s32.totalorder %v204, %v205
      %v207 = vsel %vm206, %v203, 0.0
      %v208 = vrcp.pop %v163
      %v209 = vmul.f32 %v207, %v208
      %v210 = vsel %vm123, 0.0, %v209
      %v211 = vstv %s65
      %v212 = vlaneseq
      %v213 = vand.u32 %v212, 127
      %vm214 = vcmp.eq.s32.totalorder %v213, %v211
      %v215 = vsel %vm214, %v210, 0.0
      %216 = vadd.xlane.f32.xlu0 %v215
      %v217 = vpop.xlane.xlu0 %216
      %s218 = scalar_lea.vmem [#allocation5], 16
      %219 = vst [vmem:[%s218] sm:$0xff] %v217
      %s220 = scalar_lea.vmem %s164, 24
      %v221 = vld [vmem:[%s220] sm:$0xff]
      %v222 = vadd.s32 %v167, 24
      %v223 = vstv %s65
      %vm224 = vcmp.gt.s32.totalorder %v222, %v223
      %vm225 = vcmp.lt.s32.totalorder %v222, 32
      %vm226 = vmand %vm224, %vm225
      %v227 = vsel %vm226, %v221, 0.0
      %v228 = vrcp.pop %v163
      %v229 = vmul.f32 %v227, %v228
      %v230 = vsel %vm123, 0.0, %v229
      %v231 = vstv %s65
      %v232 = vlaneseq
      %v233 = vand.u32 %v232, 127
      %vm234 = vcmp.eq.s32.totalorder %v233, %v231
      %v235 = vsel %vm234, %v230, 0.0
      %236 = vadd.xlane.f32.xlu0 %v235
      %v237 = vpop.xlane.xlu0 %236
      %s238 = scalar_lea.vmem [#allocation5], 24
      %239 = vst [vmem:[%s238] sm:$0xff] %v237
      %s240 = scalar_lea.vmem [#allocation5], %s65
      %241 = vst [vmem:[%s240] sm:$0x1] 1.0
      %v242 = vstv %s65
      %v243 = vlaneseq
      %v244 = vand.u32 %v243, 127
      %vm245 = vcmp.eq.s32.totalorder %v244, %v242
      %v246 = vsel %vm245, %v162, 0.0
      %247 = vadd.xlane.f32.xlu0 %v246
      %v248 = vpop.xlane.xlu0 %247
      %v249 = vstv %s65
      %v250 = vlaneseq
      %v251 = vand.u32 %v250, 127
      %vm252 = vcmp.eq.s32.totalorder %v251, %v249
      %v253 = vld [vmem:[#allocation2] ss:$0 sm:$0xff]
      %v254 = vsel %vm252, %v248, %v253
      %255 = vst [vmem:[#allocation2] sm:$0x1] %v254
      %s256 = smov [#allocation1]
      %s257 = smov [#allocation5]
      %v258 = vlaneseq
      %v259 = vshrl.u32 %v258, 7
      %v260 = vmov %v259
      %v262 = vld [vmem:[%s257] sm:$0xff]
      %v263 = vld [vmem:[%s256] sm:$0xff]
      %v264 = vmul.f32 %v262, %v263
      %v265 = vadd.s32 %v260, 8
      %s266 = scalar_lea.vmem %s257, 8
      %v267 = vld [vmem:[%s266] sm:$0xff]
      %s268 = scalar_lea.vmem %s256, 8
      %v269 = vld [vmem:[%s268] sm:$0xff]
      %v270 = vmul.f32 %v267, %v269
      %v271 = vadd.f32 %v264, %v270
      %v272 = vadd.s32 %v260, 16
      %s273 = scalar_lea.vmem %s257, 16
      %v274 = vld [vmem:[%s273] sm:$0xff]
      %s275 = scalar_lea.vmem %s256, 16
      %v276 = vld [vmem:[%s275] sm:$0xff]
      %v277 = vmul.f32 %v274, %v276
      %v278 = vadd.f32 %v271, %v277
      %v279 = vadd.s32 %v260, 24
      %s280 = scalar_lea.vmem %s257, 24
      %v281 = vld [vmem:[%s280] sm:$0xff]
      %s282 = scalar_lea.vmem %s256, 24
      %v283 = vld [vmem:[%s282] sm:$0xff]
      %v284 = vmul.f32 %v281, %v283
      %vm285 = vcmp.lt.s32.totalorder %v279, 32
      %v286 = vsel %vm285, %v284, 0.0
      %v287 = vadd.f32 %v278, %v286
      %v288 = vrot.slane %v287, 4
      %v289 = vadd.f32 %v287, %v288
      %v290 = vrot.slane %v289, 2
      %v291 = vadd.f32 %v289, %v290
      %v292 = vrot.slane %v291, 1
      %v293 = vadd.f32 %v291, %v292
      %s294 = smov %s256
      %s295 = smov %s257
      %v296 = vlaneseq
      %v297 = vshrl.u32 %v296, 7
      %v298 = vmov %v297
      %v299 = vmul.f32 %v293, %v248
      %v301 = vlaneseq
      %v302 = vand.u32 %v301, 127
      %v303 = vld [vmem:[%s295] sm:$0xff]
      %v304 = vmul.f32 %v303, %v299
      %v305 = vld [vmem:[%s294] sm:$0xff]
      %v306 = vstv %s65
      %vm307 = vcmp.gt.s32.totalorder %v302, %v306
      %v308 = vsub.f32 %v305, %v304
      %v309 = vsel %vm307, %v308, %v305
      %v310 = vstv %s65
      %v311 = vlaneseq
      %v312 = vand.u32 %v311, 127
      %vm313 = vcmp.eq.s32.totalorder %v312, %v310
      %v314 = vstv %s65
      %vm315 = vcmp.ge.s32.totalorder %v298, %v314
      %vm316 = vmand %vm313, %vm315
      %v317 = vsel %vm316, %v303, %v309
      %318 = vst [vmem:[%s294] sm:$0xff] %v317
      %v319 = vadd.s32 %v298, 8
      %v320 = vlaneseq
      %v321 = vand.u32 %v320, 127
      %s322 = scalar_lea.vmem %s295, 8
      %v323 = vld [vmem:[%s322] sm:$0xff]
      %v324 = vmul.f32 %v323, %v299
      %s325 = scalar_lea.vmem %s294, 8
      %v326 = vld [vmem:[%s325] sm:$0xff]
      %v327 = vstv %s65
      %vm328 = vcmp.gt.s32.totalorder %v321, %v327
      %v329 = vsub.f32 %v326, %v324
      %v330 = vsel %vm328, %v329, %v326
      %v331 = vstv %s65
      %v332 = vlaneseq
      %v333 = vand.u32 %v332, 127
      %vm334 = vcmp.eq.s32.totalorder %v333, %v331
      %v335 = vstv %s65
      %vm336 = vcmp.ge.s32.totalorder %v319, %v335
      %vm337 = vmand %vm334, %vm336
      %v338 = vsel %vm337, %v323, %v330
      %339 = vst [vmem:[%s325] sm:$0xff] %v338
      %v340 = vadd.s32 %v298, 16
      %v341 = vlaneseq
      %v342 = vand.u32 %v341, 127
      %s343 = scalar_lea.vmem %s295, 16
      %v344 = vld [vmem:[%s343] sm:$0xff]
      %v345 = vmul.f32 %v344, %v299
      %s346 = scalar_lea.vmem %s294, 16
      %v347 = vld [vmem:[%s346] sm:$0xff]
      %v348 = vstv %s65
      %vm349 = vcmp.gt.s32.totalorder %v342, %v348
      %v350 = vsub.f32 %v347, %v345
      %v351 = vsel %vm349, %v350, %v347
      %v352 = vstv %s65
      %v353 = vlaneseq
      %v354 = vand.u32 %v353, 127
      %vm355 = vcmp.eq.s32.totalorder %v354, %v352
      %v356 = vstv %s65
      %vm357 = vcmp.ge.s32.totalorder %v340, %v356
      %vm358 = vmand %vm355, %vm357
      %v359 = vsel %vm358, %v344, %v351
      %360 = vst [vmem:[%s346] sm:$0xff] %v359
      %v361 = vadd.s32 %v298, 24
      %v362 = vlaneseq
      %v363 = vand.u32 %v362, 127
      %s364 = scalar_lea.vmem %s295, 24
      %v365 = vld [vmem:[%s364] sm:$0xff]
      %v366 = vmul.f32 %v365, %v299
      %s367 = scalar_lea.vmem %s294, 24
      %v368 = vld [vmem:[%s367] sm:$0xff]
      %v369 = vstv %s65
      %vm370 = vcmp.gt.s32.totalorder %v363, %v369
      %v371 = vsub.f32 %v368, %v366
      %v372 = vsel %vm370, %v371, %v368
      %v373 = vstv %s65
      %v374 = vlaneseq
      %v375 = vand.u32 %v374, 127
      %vm376 = vcmp.eq.s32.totalorder %v375, %v373
      %v377 = vstv %s65
      %vm378 = vcmp.ge.s32.totalorder %v361, %v377
      %vm379 = vmand %vm376, %vm378
      %v380 = vsel %vm379, %v365, %v372
      %381 = vst [vmem:[%s367] sm:$0xff] %v380
      %s382 = scalar_lea.vmem %s294, %s65
      %v383 = vld [vmem:[%s382] ss:$0 sm:$0xff]
      %v384 = vstv %s65
      %v385 = vlaneseq
      %v386 = vand.u32 %v385, 127
      %vm387 = vcmp.eq.s32.totalorder %v386, %v384
      %v388 = vsel %vm387, %v161, %v383
      %389 = vst [vmem:[%s382] sm:$0x1] %v388
    $region40: #{custom-call.6} parent=1 // loop_footer
      %s69 = sadd.s32 1, %s65
    $region41: #{custom-call.6} parent=1 // loop_footer_branch
      %64 = sbr.rel target = $region37
    $region42: #{custom-call.6} parent=1 // loop_exit
      _
    %s391 = sshllo.u32 0, 1
    %v393 = vld [vmem:[#allocation2] sm:%s391]
    %s394 = sshllo.u32 0, 1
    %395 = vst [vmem:[#allocation3] sm:%s394] %v393
    // Predicated region
    $region43: #{custom-call.6} parent=1 // pred_check
      _
    $region44: #{custom-call.6} parent=1 // pred_check_branch
      %397 = sbr.rel (0) target = $region46
    $region45: #{custom-call.6} parent=1 // pred_region
      // Predicated region
      $region47: #{custom-call.6} parent=45 // pred_check
        _
      $region48: #{custom-call.6} parent=45 // pred_check_branch
        %399 = sbr.rel (0) target = $region50
      $region49: #{custom-call.6} parent=45 // pred_region
        // Predicated region
        $region62: #{custom-call.6} parent=49 // pred_check
          _
        $region63: #{custom-call.6} parent=49 // pred_check_branch
          %420 = sbr.rel (0) target = $region65
        $region64: #{custom-call.6} parent=49 // pred_region
          loop: start=0, step=1, limit=1
          $region66: #{custom-call.6} parent=64 // loop_pre_header
            _
          $region67: #{custom-call.6} parent=64 // loop_header
            %s422 = sphi 0, %s426
            %p423 = scmp.ge.s32.totalorder %s422, 1
            %s427 = sphi [#allocation1], [#allocation1]
            %s428 = sphi %s1, %s1
          $region68: #{custom-call.6} parent=64 // loop_header_branch
            %425 = sbr.rel (%p423) target = $region72
          $region69: #{custom-call.6} parent=64 // loop_body
            %v429 = vld [vmem:[%s427] sm:$0xff]
            %430 = vst [vmem:[%s428] sm:$0xff] %v429
            %v431 = vld [vmem:[%s427 + $0x8] sm:$0xff]
            %432 = vst [vmem:[%s428 + $0x8] sm:$0xff] %v431
            %v433 = vld [vmem:[%s427 + $0x10] sm:$0xff]
            %434 = vst [vmem:[%s428 + $0x10] sm:$0xff] %v433
            %v435 = vld [vmem:[%s427 + $0x18] sm:$0xff]
            %436 = vst [vmem:[%s428 + $0x18] sm:$0xff] %v435
          $region70: #{custom-call.6} parent=64 // loop_footer
            %s426 = sadd.s32 1, %s422
          $region71: #{custom-call.6} parent=64 // loop_footer_branch
            %421 = sbr.rel target = $region67
          $region72: #{custom-call.6} parent=64 // loop_exit
            _
        $region65: #{custom-call.6} parent=49 // pred_fallthru
          _
        // Predicated region
        $region73: #{custom-call.6} parent=49 // pred_check
          _
        $region74: #{custom-call.6} parent=49 // pred_check_branch
          %438 = sbr.rel target = $region76
        $region75: #{custom-call.6} parent=49 // pred_region
          _
        $region76: #{custom-call.6} parent=49 // pred_fallthru
          _
      $region50: #{custom-call.6} parent=45 // pred_fallthru
        _
      // Predicated region
      $region51: #{custom-call.6} parent=45 // pred_check
        _
      $region52: #{custom-call.6} parent=45 // pred_check_branch
        %401 = sbr.rel target = $region54
      $region53: #{custom-call.6} parent=45 // pred_region
        loop: start=0, step=1, limit=1
        $region55: #{custom-call.6} parent=53 // loop_pre_header
          _
        $region56: #{custom-call.6} parent=53 // loop_header
          %s404 = sphi 0, %s408
          %p405 = scmp.ge.s32.totalorder %s404, 1
          %s409 = sphi [#allocation1], [#allocation1]
          %s410 = sphi %s1, %s1
        $region57: #{custom-call.6} parent=53 // loop_header_branch
          %407 = sbr.rel (%p405) target = $region61
        $region58: #{custom-call.6} parent=53 // loop_body
          %v411 = vld [vmem:[%s409] sm:$0xff]
          %412 = vst [vmem:[%s410] sm:$0xff] %v411
          %v413 = vld [vmem:[%s409 + $0x8] sm:$0xff]
          %414 = vst [vmem:[%s410 + $0x8] sm:$0xff] %v413
          %v415 = vld [vmem:[%s409 + $0x10] sm:$0xff]
          %416 = vst [vmem:[%s410 + $0x10] sm:$0xff] %v415
          %v417 = vld [vmem:[%s409 + $0x18] sm:$0xff]
          %418 = vst [vmem:[%s410 + $0x18] sm:$0xff] %v417
        $region59: #{custom-call.6} parent=53 // loop_footer
          %s408 = sadd.s32 1, %s404
        $region60: #{custom-call.6} parent=53 // loop_footer_branch
          %403 = sbr.rel target = $region56
        $region61: #{custom-call.6} parent=53 // loop_exit
          _
      $region54: #{custom-call.6} parent=45 // pred_fallthru
        _
    $region46: #{custom-call.6} parent=1 // pred_fallthru
      _
    %439 = vnop
    // Predicated region
    $region77: #{custom-call.6} parent=1 // pred_check
      _
    $region78: #{custom-call.6} parent=1 // pred_check_branch
      %441 = sbr.rel (0) target = $region80
    $region79: #{custom-call.6} parent=1 // pred_region
      %s443 = ssub.s32 16, 16
      %444 = vsyncadd [#allocation4], %s443
      %s446 = sshll.u32 [#allocation3], 4
      %s447 = int_to_ptr.vmem [resolvable:$true] %s446
      %449 = dma.vmem_to_hbm [thread:$0]  %s447, 16, %s2, [#allocation4]
    $region80: #{custom-call.6} parent=1 // pred_fallthru
      _
    // Predicated region
    $region81: #{custom-call.6} parent=1 // pred_check
      _
    $region82: #{custom-call.6} parent=1 // pred_check_branch
      %451 = sbr.rel (0) target = $region84
    $region83: #{custom-call.6} parent=1 // pred_region
      %452 = dma.done [#allocation4], 16
    $region84: #{custom-call.6} parent=1 // pred_fallthru
      _
    %453 = vsyncpa [#allocation4], 1

// kernel: custom-call.8
$region0: #{custom-call.8}
  %s0 = inlined_call_operand.vmem [shape: f32[1,16,16], index: 0, kind: input, shape index: {}]
  %s1 = inlined_call_operand.vmem [shape: f32[1,16,16], index: 1, kind: output, shape index: {}]
  $region1: #{custom-call.8} parent=0
    #allocation0 [shape = 'u8[8192]{0}', space=vmem, size = 0x2000, scoped, tag = 'operand span for operand 0']
    #allocation1 [shape = 'u8[8192]{0}', space=vmem, size = 0x2000, scoped, tag = 'operand span for operand 1']
    #allocation2 [shape = 'f32[16,16]{1,0}', space=vmem, size = 0x2000, scoped, tag = 'rescaled input a']
    // Predicated region
    $region2: #{custom-call.8} parent=1 // pred_check
      _
    $region3: #{custom-call.8} parent=1 // pred_check_branch
      %3 = sbr.rel (0) target = $region5
    $region4: #{custom-call.8} parent=1 // pred_region
      // Predicated region
      $region6: #{custom-call.8} parent=4 // pred_check
        _
      $region7: #{custom-call.8} parent=4 // pred_check_branch
        %5 = sbr.rel (0) target = $region9
      $region8: #{custom-call.8} parent=4 // pred_region
        // Predicated region
        $region21: #{custom-call.8} parent=8 // pred_check
          _
        $region22: #{custom-call.8} parent=8 // pred_check_branch
          %22 = sbr.rel (0) target = $region24
        $region23: #{custom-call.8} parent=8 // pred_region
          loop: start=0, step=1, limit=1
          $region25: #{custom-call.8} parent=23 // loop_pre_header
            _
          $region26: #{custom-call.8} parent=23 // loop_header
            %s24 = sphi 0, %s28
            %p25 = scmp.ge.s32.totalorder %s24, 1
            %s29 = sphi %s0, %s0
            %s30 = sphi [#allocation0], [#allocation0]
          $region27: #{custom-call.8} parent=23 // loop_header_branch
            %27 = sbr.rel (%p25) target = $region31
          $region28: #{custom-call.8} parent=23 // loop_body
            %v31 = vld [vmem:[%s29] sm:$0xff]
            %32 = vst [vmem:[%s30] sm:$0xff] %v31
            %v33 = vld [vmem:[%s29 + $0x8] sm:$0xff]
            %34 = vst [vmem:[%s30 + $0x8] sm:$0xff] %v33
          $region29: #{custom-call.8} parent=23 // loop_footer
            %s28 = sadd.s32 1, %s24
          $region30: #{custom-call.8} parent=23 // loop_footer_branch
            %23 = sbr.rel target = $region26
          $region31: #{custom-call.8} parent=23 // loop_exit
            _
        $region24: #{custom-call.8} parent=8 // pred_fallthru
          _
        // Predicated region
        $region32: #{custom-call.8} parent=8 // pred_check
          _
        $region33: #{custom-call.8} parent=8 // pred_check_branch
          %36 = sbr.rel target = $region35
        $region34: #{custom-call.8} parent=8 // pred_region
          _
        $region35: #{custom-call.8} parent=8 // pred_fallthru
          _
      $region9: #{custom-call.8} parent=4 // pred_fallthru
        _
      // Predicated region
      $region10: #{custom-call.8} parent=4 // pred_check
        _
      $region11: #{custom-call.8} parent=4 // pred_check_branch
        %7 = sbr.rel target = $region13
      $region12: #{custom-call.8} parent=4 // pred_region
        loop: start=0, step=1, limit=1
        $region14: #{custom-call.8} parent=12 // loop_pre_header
          _
        $region15: #{custom-call.8} parent=12 // loop_header
          %s10 = sphi 0, %s14
          %p11 = scmp.ge.s32.totalorder %s10, 1
          %s15 = sphi %s0, %s0
          %s16 = sphi [#allocation0], [#allocation0]
        $region16: #{custom-call.8} parent=12 // loop_header_branch
          %13 = sbr.rel (%p11) target = $region20
        $region17: #{custom-call.8} parent=12 // loop_body
          %v17 = vld [vmem:[%s15] sm:$0xff]
          %18 = vst [vmem:[%s16] sm:$0xff] %v17
          %v19 = vld [vmem:[%s15 + $0x8] sm:$0xff]
          %20 = vst [vmem:[%s16 + $0x8] sm:$0xff] %v19
        $region18: #{custom-call.8} parent=12 // loop_footer
          %s14 = sadd.s32 1, %s10
        $region19: #{custom-call.8} parent=12 // loop_footer_branch
          %9 = sbr.rel target = $region15
        $region20: #{custom-call.8} parent=12 // loop_exit
          _
      $region13: #{custom-call.8} parent=4 // pred_fallthru
        _
    $region5: #{custom-call.8} parent=1 // pred_fallthru
      _
    %37 = vnop
    %v38 = vlaneseq
    %v39 = vand.u32 %v38, 127
    %vm40 = vcmp.lt.s32.totalorder %v39, 16
    %v41 = vlaneseq
    %v42 = vshrl.u32 %v41, 7
    %vm44 = vcmp.eq.s32.totalorder %v42, %v39
    %v45 = vld [vmem:[#allocation0] sm:$0xff]
    %v46 = vsel %vm44, %v45, 0.0
    %47 = vadd.xlane.f32.xlu0 %v46
    %v48 = vpop.xlane.xlu0 %47
    %vm49 = vcmp.le.s32.totalorder %v42, %v39
    %vm50 = vmand %vm49, %vm40
    %v51 = vsel %vm50, %v45, 0.0
    %v52 = vrcp.pop %v48
    %v53 = vmul.f32 %v51, %v52
    %54 = vst [vmem:[#allocation2] sm:$0xff] %v53
    %s55 = scalar_lea.vmem [#allocation0], 8
    %s56 = scalar_lea.vmem [#allocation2], 8
    %v57 = vlaneseq
    %v58 = vshrl.u32 %v57, 7
    %v59 = vadd.s32 %v58, 8
    %vm60 = vcmp.eq.s32.totalorder %v59, %v39
    %v61 = vld [vmem:[%s55] sm:$0xff]
    %v62 = vsel %vm60, %v61, 0.0
    %63 = vadd.xlane.f32.xlu0 %v62
    %v64 = vpop.xlane.xlu0 %63
    %vm65 = vcmp.le.s32.totalorder %v59, %v39
    %vm66 = vmand %vm65, %vm40
    %v67 = vsel %vm66, %v61, 0.0
    %v68 = vrcp.pop %v64
    %v69 = vmul.f32 %v67, %v68
    %70 = vst [vmem:[%s56] sm:$0xff] %v69
    %v71 = vlaneseq
    %v72 = vand.u32 %v71, 127
    %v73 = vlaneseq
    %v74 = vshrl.u32 %v73, 7
    %vm76 = vcmp.eq.s32.totalorder %v72, %v74
    %v77 = vsel %vm76, -1.0, 0.0
    %v78 = vlaneseq
    %v79 = vand.u32 %v78, 127
    %v80 = vlaneseq
    %v81 = vshrl.u32 %v80, 7
    %v82 = vadd.s32 %v81, 8
    %vm83 = vcmp.eq.s32.totalorder %v79, %v82
    %v84 = vlaneseq
    %v85 = vand.u32 %v84, 127
    %vm86 = vcmp.eq.s32.totalorder %v85, 15
    %v87 = vsel %vm86, 1.0, -1.0
    %v88 = vsel %vm83, %v87, 0.0
    %s89 = scalar_lea.vmem [#allocation2], 14
    %v90 = vld [vmem:[%s89] ss:$0 sm:$0xff]
    %v91 = vxor.u32 %v90, 2147483648
    %v92 = vlaneseq
    %v93 = vand.u32 %v92, 127
    %vm94 = vcmp.eq.s32.totalorder %v93, 14
    %v95 = vmul.f32 %v91, %v88
    %96 = vadd.xlane.f32.xlu0 %v95
    %v97 = vpop.xlane.xlu0 %96
    %v98 = vsel %vm94, %v97, %v88
    %s99 = scalar_lea.vmem [#allocation2], 13
    %v100 = vld [vmem:[%s99] ss:$0 sm:$0xff]
    %v101 = vxor.u32 %v100, 2147483648
    %v102 = vlaneseq
    %v103 = vand.u32 %v102, 127
    %vm104 = vcmp.eq.s32.totalorder %v103, 13
    %v105 = vmul.f32 %v101, %v98
    %106 = vadd.xlane.f32.xlu0 %v105
    %v107 = vpop.xlane.xlu0 %106
    %v108 = vsel %vm104, %v107, %v98
    %s109 = scalar_lea.vmem [#allocation2], 12
    %v110 = vld [vmem:[%s109] ss:$0 sm:$0xff]
    %v111 = vxor.u32 %v110, 2147483648
    %v112 = vlaneseq
    %v113 = vand.u32 %v112, 127
    %vm114 = vcmp.eq.s32.totalorder %v113, 12
    %v115 = vmul.f32 %v111, %v108
    %116 = vadd.xlane.f32.xlu0 %v115
    %v117 = vpop.xlane.xlu0 %116
    %v118 = vsel %vm114, %v117, %v108
    %s119 = scalar_lea.vmem [#allocation2], 11
    %v120 = vld [vmem:[%s119] ss:$0 sm:$0xff]
    %v121 = vxor.u32 %v120, 2147483648
    %v122 = vlaneseq
    %v123 = vand.u32 %v122, 127
    %vm124 = vcmp.eq.s32.totalorder %v123, 11
    %v125 = vmul.f32 %v121, %v118
    %126 = vadd.xlane.f32.xlu0 %v125
    %v127 = vpop.xlane.xlu0 %126
    %v128 = vsel %vm124, %v127, %v118
    %s129 = scalar_lea.vmem [#allocation2], 10
    %v130 = vld [vmem:[%s129] ss:$0 sm:$0xff]
    %v131 = vxor.u32 %v130, 2147483648
    %v132 = vlaneseq
    %v133 = vand.u32 %v132, 127
    %vm134 = vcmp.eq.s32.totalorder %v133, 10
    %v135 = vmul.f32 %v131, %v128
    %136 = vadd.xlane.f32.xlu0 %v135
    %v137 = vpop.xlane.xlu0 %136
    %v138 = vsel %vm134, %v137, %v128
    %s139 = scalar_lea.vmem [#allocation2], 9
    %v140 = vld [vmem:[%s139] ss:$0 sm:$0xff]
    %v141 = vxor.u32 %v140, 2147483648
    %v142 = vlaneseq
    %v143 = vand.u32 %v142, 127
    %vm144 = vcmp.eq.s32.totalorder %v143, 9
    %v145 = vmul.f32 %v141, %v138
    %146 = vadd.xlane.f32.xlu0 %v145
    %v147 = vpop.xlane.xlu0 %146
    %v148 = vsel %vm144, %v147, %v138
    %s149 = scalar_lea.vmem [#allocation2], 8
    %v150 = vld [vmem:[%s149] ss:$0 sm:$0xff]
    %v151 = vxor.u32 %v150, 2147483648
    %v152 = vlaneseq
    %v153 = vand.u32 %v152, 127
    %vm154 = vcmp.eq.s32.totalorder %v153, 8
    %v155 = vmul.f32 %v151, %v148
    %156 = vadd.xlane.f32.xlu0 %v155
    %v157 = vpop.xlane.xlu0 %156
    %v158 = vsel %vm154, %v157, %v148
    %s159 = scalar_lea.vmem [#allocation2], 7
    %v160 = vld [vmem:[%s159] ss:$0 sm:$0xff]
    %v161 = vxor.u32 %v160, 2147483648
    %v162 = vlaneseq
    %v163 = vand.u32 %v162, 127
    %vm164 = vcmp.eq.s32.totalorder %v163, 7
    %v165 = vmul.f32 %v161, %v77
    %166 = vadd.xlane.f32.xlu0 %v165
    %v167 = vpop.xlane.xlu0 %166
    %v168 = vsel %vm164, %v167, %v77
    %v169 = vmul.f32 %v161, %v158
    %170 = vadd.xlane.f32.xlu0 %v169
    %v171 = vpop.xlane.xlu0 %170
    %v172 = vsel %vm164, %v171, %v158
    %s173 = scalar_lea.vmem [#allocation2], 6
    %v174 = vld [vmem:[%s173] ss:$0 sm:$0xff]
    %v175 = vxor.u32 %v174, 2147483648
    %v176 = vlaneseq
    %v177 = vand.u32 %v176, 127
    %vm178 = vcmp.eq.s32.totalorder %v177, 6
    %v179 = vmul.f32 %v175, %v168
    %180 = vadd.xlane.f32.xlu0 %v179
    %v181 = vpop.xlane.xlu0 %180
    %v182 = vsel %vm178, %v181, %v168
    %v183 = vmul.f32 %v175, %v172
    %184 = vadd.xlane.f32.xlu0 %v183
    %v185 = vpop.xlane.xlu0 %184
    %v186 = vsel %vm178, %v185, %v172
    %s187 = scalar_lea.vmem [#allocation2], 5
    %v188 = vld [vmem:[%s187] ss:$0 sm:$0xff]
    %v189 = vxor.u32 %v188, 2147483648
    %v190 = vlaneseq
    %v191 = vand.u32 %v190, 127
    %vm192 = vcmp.eq.s32.totalorder %v191, 5
    %v193 = vmul.f32 %v189, %v182
    %194 = vadd.xlane.f32.xlu0 %v193
    %v195 = vpop.xlane.xlu0 %194
    %v196 = vsel %vm192, %v195, %v182
    %v197 = vmul.f32 %v189, %v186
    %198 = vadd.xlane.f32.xlu0 %v197
    %v199 = vpop.xlane.xlu0 %198
    %v200 = vsel %vm192, %v199, %v186
    %s201 = scalar_lea.vmem [#allocation2], 4
    %v202 = vld [vmem:[%s201] ss:$0 sm:$0xff]
    %v203 = vxor.u32 %v202, 2147483648
    %v204 = vlaneseq
    %v205 = vand.u32 %v204, 127
    %vm206 = vcmp.eq.s32.totalorder %v205, 4
    %v207 = vmul.f32 %v203, %v196
    %208 = vadd.xlane.f32.xlu0 %v207
    %v209 = vpop.xlane.xlu0 %208
    %v210 = vsel %vm206, %v209, %v196
    %v211 = vmul.f32 %v203, %v200
    %212 = vadd.xlane.f32.xlu0 %v211
    %v213 = vpop.xlane.xlu0 %212
    %v214 = vsel %vm206, %v213, %v200
    %s215 = scalar_lea.vmem [#allocation2], 3
    %v216 = vld [vmem:[%s215] ss:$0 sm:$0xff]
    %v217 = vxor.u32 %v216, 2147483648
    %v218 = vlaneseq
    %v219 = vand.u32 %v218, 127
    %vm220 = vcmp.eq.s32.totalorder %v219, 3
    %v221 = vmul.f32 %v217, %v210
    %222 = vadd.xlane.f32.xlu0 %v221
    %v223 = vpop.xlane.xlu0 %222
    %v224 = vsel %vm220, %v223, %v210
    %v225 = vmul.f32 %v217, %v214
    %226 = vadd.xlane.f32.xlu0 %v225
    %v227 = vpop.xlane.xlu0 %226
    %v228 = vsel %vm220, %v227, %v214
    %s229 = scalar_lea.vmem [#allocation2], 2
    %v230 = vld [vmem:[%s229] ss:$0 sm:$0xff]
    %v231 = vxor.u32 %v230, 2147483648
    %v232 = vlaneseq
    %v233 = vand.u32 %v232, 127
    %vm234 = vcmp.eq.s32.totalorder %v233, 2
    %v235 = vmul.f32 %v231, %v224
    %236 = vadd.xlane.f32.xlu0 %v235
    %v237 = vpop.xlane.xlu0 %236
    %v238 = vsel %vm234, %v237, %v224
    %v239 = vmul.f32 %v231, %v228
    %240 = vadd.xlane.f32.xlu0 %v239
    %v241 = vpop.xlane.xlu0 %240
    %v242 = vsel %vm234, %v241, %v228
    %s243 = scalar_lea.vmem [#allocation2], 1
    %v244 = vld [vmem:[%s243] ss:$0 sm:$0xff]
    %v245 = vxor.u32 %v244, 2147483648
    %v246 = vlaneseq
    %v247 = vand.u32 %v246, 127
    %vm248 = vcmp.eq.s32.totalorder %v247, 1
    %v249 = vmul.f32 %v245, %v238
    %250 = vadd.xlane.f32.xlu0 %v249
    %v251 = vpop.xlane.xlu0 %250
    %v252 = vsel %vm248, %v251, %v238
    %v253 = vmul.f32 %v245, %v242
    %254 = vadd.xlane.f32.xlu0 %v253
    %v255 = vpop.xlane.xlu0 %254
    %v256 = vsel %vm248, %v255, %v242
    %v257 = vld [vmem:[#allocation2] ss:$0 sm:$0xff]
    %v258 = vxor.u32 %v257, 2147483648
    %v259 = vlaneseq
    %v260 = vand.u32 %v259, 127
    %vm261 = vcmp.eq.s32.totalorder %v260, 0
    %v262 = vmul.f32 %v258, %v252
    %263 = vadd.xlane.f32.xlu0 %v262
    %v264 = vpop.xlane.xlu0 %263
    %v265 = vsel %vm261, %v264, %v252
    %v266 = vmul.f32 %v258, %v256
    %267 = vadd.xlane.f32.xlu0 %v266
    %v268 = vpop.xlane.xlu0 %267
    %v269 = vsel %vm261, %v268, %v256
    %v270 = vrcp.pop %v48
    %v271 = vmul.f32 %v265, %v270
    %vm272 = vweird.f32 %v48
    %v273 = vsel %vm272, %v265, %v271
    %274 = vst [vmem:[#allocation1] sm:$0xff] %v273
    %v275 = vrcp.pop %v64
    %v276 = vmul.f32 %v269, %v275
    %vm277 = vweird.f32 %v64
    %v278 = vsel %vm277, %v269, %v276
    %s279 = scalar_lea.vmem [#allocation1], 8
    %280 = vst [vmem:[%s279] sm:$0xff] %v278
    // Predicated region
    $region36: #{custom-call.8} parent=1 // pred_check
      _
    $region37: #{custom-call.8} parent=1 // pred_check_branch
      %282 = sbr.rel (0) target = $region39
    $region38: #{custom-call.8} parent=1 // pred_region
      // Predicated region
      $region40: #{custom-call.8} parent=38 // pred_check
        _
      $region41: #{custom-call.8} parent=38 // pred_check_branch
        %284 = sbr.rel (0) target = $region43
      $region42: #{custom-call.8} parent=38 // pred_region
        // Predicated region
        $region55: #{custom-call.8} parent=42 // pred_check
          _
        $region56: #{custom-call.8} parent=42 // pred_check_branch
          %301 = sbr.rel (0) target = $region58
        $region57: #{custom-call.8} parent=42 // pred_region
          loop: start=0, step=1, limit=1
          $region59: #{custom-call.8} parent=57 // loop_pre_header
            _
          $region60: #{custom-call.8} parent=57 // loop_header
            %s303 = sphi 0, %s307
            %p304 = scmp.ge.s32.totalorder %s303, 1
            %s308 = sphi [#allocation1], [#allocation1]
            %s309 = sphi %s1, %s1
          $region61: #{custom-call.8} parent=57 // loop_header_branch
            %306 = sbr.rel (%p304) target = $region65
          $region62: #{custom-call.8} parent=57 // loop_body
            %v310 = vld [vmem:[%s308] sm:$0xff]
            %311 = vst [vmem:[%s309] sm:$0xff] %v310
            %v312 = vld [vmem:[%s308 + $0x8] sm:$0xff]
            %313 = vst [vmem:[%s309 + $0x8] sm:$0xff] %v312
          $region63: #{custom-call.8} parent=57 // loop_footer
            %s307 = sadd.s32 1, %s303
          $region64: #{custom-call.8} parent=57 // loop_footer_branch
            %302 = sbr.rel target = $region60
          $region65: #{custom-call.8} parent=57 // loop_exit
            _
        $region58: #{custom-call.8} parent=42 // pred_fallthru
          _
        // Predicated region
        $region66: #{custom-call.8} parent=42 // pred_check
          _
        $region67: #{custom-call.8} parent=42 // pred_check_branch
          %315 = sbr.rel target = $region69
        $region68: #{custom-call.8} parent=42 // pred_region
          _
        $region69: #{custom-call.8} parent=42 // pred_fallthru
          _
      $region43: #{custom-call.8} parent=38 // pred_fallthru
        _
      // Predicated region
      $region44: #{custom-call.8} parent=38 // pred_check
        _
      $region45: #{custom-call.8} parent=38 // pred_check_branch
        %286 = sbr.rel target = $region47
      $region46: #{custom-call.8} parent=38 // pred_region
        loop: start=0, step=1, limit=1
        $region48: #{custom-call.8} parent=46 // loop_pre_header
          _
        $region49: #{custom-call.8} parent=46 // loop_header
          %s289 = sphi 0, %s293
          %p290 = scmp.ge.s32.totalorder %s289, 1
          %s294 = sphi [#allocation1], [#allocation1]
          %s295 = sphi %s1, %s1
        $region50: #{custom-call.8} parent=46 // loop_header_branch
          %292 = sbr.rel (%p290) target = $region54
        $region51: #{custom-call.8} parent=46 // loop_body
          %v296 = vld [vmem:[%s294] sm:$0xff]
          %297 = vst [vmem:[%s295] sm:$0xff] %v296
          %v298 = vld [vmem:[%s294 + $0x8] sm:$0xff]
          %299 = vst [vmem:[%s295 + $0x8] sm:$0xff] %v298
        $region52: #{custom-call.8} parent=46 // loop_footer
          %s293 = sadd.s32 1, %s289
        $region53: #{custom-call.8} parent=46 // loop_footer_branch
          %288 = sbr.rel target = $region49
        $region54: #{custom-call.8} parent=46 // loop_exit
          _
      $region47: #{custom-call.8} parent=38 // pred_fallthru
        _
    $region39: #{custom-call.8} parent=1 // pred_fallthru
      _
    %316 = vnop

// kernel: school_forward.2
$region0: #{school_forward.2}
  #allocation0 [shape = 'u32[]', space=smem, size = 0x4, offset = 0x4, fixed_abs, tag = 'smem constant byte address 0x4 - core index']
  #allocation1 [shape = 'u32[144,128]{1,0:T(1,128)}', space=vmem, size = 0x12000, scoped, tag = 'internal scratch']
  %s0 = inlined_call_operand.vmem [shape: f32[32,16], index: 0, kind: input, shape index: {}]
  %s1 = inlined_call_operand.vmem [shape: f32[128,128], index: 1, kind: input, shape index: {}]
  %s2 = inlined_call_operand.vmem [shape: f32[32,16], index: 2, kind: output, shape index: {}]
  %s3 = sld [smem:[#allocation0]]
  $region18: #{school_forward.2} parent=0
    _
  %s5 = ssub.s32 1, %s3
  %s6 = scalar_select 0, %s5, %s3
  // Predicated region
  $region2: #{school_forward.2} parent=0 // pred_check
    _
  $region3: #{school_forward.2} parent=0 // pred_check_branch
    %8 = sbr.rel (0) target = $region5
  $region4: #{school_forward.2} parent=0 // pred_region
    _
  $region5: #{school_forward.2} parent=0 // pred_fallthru
    _
  // Predicated region
  $region6: #{school_forward.2} parent=0 // pred_check
    _
  $region7: #{school_forward.2} parent=0 // pred_check_branch
    %10 = sbr.rel (0) target = $region9
  $region8: #{school_forward.2} parent=0 // pred_region
    _
  $region9: #{school_forward.2} parent=0 // pred_fallthru
    _
  %v11 = vld [vmem:[%s0] sm:$0xff]
  %v12 = vld [vmem:[%s0 + $0x8] sm:$0xff]
  %v13 = vld [vmem:[%s0 + $0x10] sm:$0xff]
  %v14 = vld [vmem:[%s0 + $0x18] sm:$0xff]
  %v15 = vld [vmem:[%s1] sm:$0xff]
  %v16 = vld [vmem:[%s1 + $0x8] sm:$0xff]
  %v17 = vld [vmem:[%s1 + $0x10] sm:$0x1]
  %v18 = vlaneseq
  %v19 = vshrl.u32 %v18, 7
  %v20 = vsub.s32 0, %v19
  %v21 = vrot.slane %v17, %v20
  %vm22 = vcmask 130048
  %v24 = vsel %vm22, %v11, 0
  %v27 = vsel %vm22, %v12, 0
  %v30 = vsel %vm22, %v13, 0
  %v33 = vsel %vm22, %v14, 0
  %35 = vmatprep.subr.mxu0 0.0
  %36 = vmatpush1.msra.mxu0 %v15
  %37 = vmatprep.subr.mxu0 0.0
  %38 = vmatpush1.msra.mxu0 %v16
  %39 = vmatprep.subr.mxu0 0.0
  %40 = vmatpush1.msra.mxu0 0.0
  %41 = vmatprep.subr.mxu0 0.0
  %42 = vmatpush1.msra.mxu0 0.0
  %43 = vmatprep.subr.mxu0 0.0
  %44 = vmatpush1.msra.mxu0 0.0
  %45 = vmatprep.subr.mxu0 0.0
  %46 = vmatpush1.msra.mxu0 0.0
  %47 = vmatprep.subr.mxu0 0.0
  %48 = vmatpush1.msra.mxu0 0.0
  %49 = vmatprep.subr.mxu0 0.0
  %50 = vmatpush1.msra.mxu0 0.0
  %51 = vmatprep.subr.mxu0 0.0
  %52 = vmatpush1.msra.mxu0 0.0
  %53 = vmatprep.subr.mxu0 0.0
  %54 = vmatpush1.msra.mxu0 0.0
  %55 = vmatprep.subr.mxu0 0.0
  %56 = vmatpush1.msra.mxu0 0.0
  %57 = vmatprep.subr.mxu0 0.0
  %58 = vmatpush1.msra.mxu0 0.0
  %59 = vmatprep.subr.mxu0 0.0
  %60 = vmatpush1.msra.mxu0 0.0
  %61 = vmatprep.subr.mxu0 0.0
  %62 = vmatpush1.msra.mxu0 0.0
  %63 = vmatprep.subr.mxu0 0.0
  %64 = vmatpush1.msra.mxu0 0.0
  %65 = vmatprep.subr.mxu0 0.0
  %66 = vmatpush1.msra.mxu0 0.0
  %67 = vmatprep.subr.mxu0 0.0
  %68 = vmatpush1.msra.mxu0 0.0
  %69 = vmatprep.subr.mxu0 0.0
  %70 = vmatpush1.msra.mxu0 0.0
  %71 = vmatprep.subr.mxu0 0.0
  %72 = vmatpush1.msra.mxu0 0.0
  %73 = vmatprep.subr.mxu0 0.0
  %74 = vmatpush1.msra.mxu0 0.0
  %75 = vmatprep.subr.mxu0 0.0
  %76 = vmatpush1.msra.mxu0 0.0
  %77 = vmatprep.subr.mxu0 0.0
  %78 = vmatpush1.msra.mxu0 0.0
  %79 = vmatprep.subr.mxu0 0.0
  %80 = vmatpush1.msra.mxu0 0.0
  %81 = vmatprep.subr.mxu0 0.0
  %82 = vmatpush1.msra.mxu0 0.0
  %83 = vmatprep.subr.mxu0 0.0
  %84 = vmatpush1.msra.mxu0 0.0
  %85 = vmatprep.subr.mxu0 0.0
  %86 = vmatpush1.msra.mxu0 0.0
  %87 = vmatprep.subr.mxu0 0.0
  %88 = vmatpush1.msra.mxu0 0.0
  %89 = vmatprep.subr.mxu0 0.0
  %90 = vmatpush1.msra.mxu0 0.0
  %91 = vmatprep.subr.mxu0 0.0
  %92 = vmatpush1.msra.mxu0 0.0
  %93 = vmatprep.subr.mxu0 0.0
  %94 = vmatpush1.msra.mxu0 0.0
  %95 = vmatprep.subr.mxu0 0.0
  %96 = vmatpush1.msra.mxu0 0.0
  %97 = vmatprep.subr.mxu0 0.0
  %98 = vmatpush1.msra.mxu0 0.0
  %99 = vmatprep.mubr.f32.mxu0 0.0
  %100 = vmatmul.mubr.f32.gmra.mrb[0].mxu0 %v24
  %v101 = vpop.f32.mrb[0].mxu0
  %v102 = vadd.f32 %v21, %v101
  %v103 = vpop.f32.mrb[0].mxu0
  %104 = vmatprep.mubr.f32.mxu0 0.0
  %105 = vmatmul.mubr.f32.gmra.mrb[0].mxu0 %v27
  %v106 = vpop.f32.mrb[0].mxu0
  %v107 = vadd.f32 %v21, %v106
  %v108 = vpop.f32.mrb[0].mxu0
  %109 = vmatprep.mubr.f32.mxu0 0.0
  %110 = vmatmul.mubr.f32.gmra.mrb[0].mxu0 %v30
  %v111 = vpop.f32.mrb[0].mxu0
  %v112 = vadd.f32 %v21, %v111
  %v113 = vpop.f32.mrb[0].mxu0
  %114 = vmatprep.mubr.f32.mxu0 0.0
  %115 = vmatmul.mubr.f32.gmra.mrb[0].mxu0 %v33
  %v116 = vpop.f32.mrb[0].mxu0
  %v117 = vadd.f32 %v21, %v116
  %v118 = vpop.f32.mrb[0].mxu0
  %119 = vdwg.mxu0
  %vm120 = vcmp.ge.f32.partialorder %v102, 0.0
  %vm121 = vcmp.ge.f32.partialorder %v107, 0.0
  %vm122 = vcmp.ge.f32.partialorder %v112, 0.0
  %vm123 = vcmp.ge.f32.partialorder %v117, 0.0
  %v124 = vmul.f32 %v102, 0.01
  %v125 = vmul.f32 %v107, 0.01
  %v126 = vmul.f32 %v112, 0.01
  %v127 = vmul.f32 %v117, 0.01
  %v128 = vsel %vm120, %v102, %v124
  %v129 = vsel %vm121, %v107, %v125
  %v130 = vsel %vm122, %v112, %v126
  %v131 = vsel %vm123, %v117, %v127
  %v132 = vld [vmem:[%s1 + $0x18] sm:$0xff]
  %v133 = vld [vmem:[%s1 + $0x20] sm:$0xff]
  %v134 = vld [vmem:[%s1 + $0x28] sm:$0xff]
  %v135 = vld [vmem:[%s1 + $0x30] sm:$0xff]
  %v136 = vld [vmem:[%s1 + $0x38] sm:$0x1]
  %v137 = vlaneseq
  %v138 = vshrl.u32 %v137, 7
  %v139 = vsub.s32 0, %v138
  %v140 = vrot.slane %v136, %v139
  %vm141 = vcmask 261120
  %v143 = vsel %vm141, %v128, 0
  %v146 = vsel %vm141, %v129, 0
  %v149 = vsel %vm141, %v130, 0
  %v152 = vsel %vm141, %v131, 0
  %154 = vmatprep.subr.mxu0 0.0
  %155 = vmatpush1.msra.mxu0 %v132
  %156 = vmatprep.subr.mxu0 0.0
  %157 = vmatpush1.msra.mxu0 %v133
  %158 = vmatprep.subr.mxu0 0.0
  %159 = vmatpush1.msra.mxu0 %v134
  %160 = vmatprep.subr.mxu0 0.0
  %161 = vmatpush1.msra.mxu0 %v135
  %162 = vmatprep.subr.mxu0 0.0
  %163 = vmatpush1.msra.mxu0 0.0
  %164 = vmatprep.subr.mxu0 0.0
  %165 = vmatpush1.msra.mxu0 0.0
  %166 = vmatprep.subr.mxu0 0.0
  %167 = vmatpush1.msra.mxu0 0.0
  %168 = vmatprep.subr.mxu0 0.0
  %169 = vmatpush1.msra.mxu0 0.0
  %170 = vmatprep.subr.mxu0 0.0
  %171 = vmatpush1.msra.mxu0 0.0
  %172 = vmatprep.subr.mxu0 0.0
  %173 = vmatpush1.msra.mxu0 0.0
  %174 = vmatprep.subr.mxu0 0.0
  %175 = vmatpush1.msra.mxu0 0.0
  %176 = vmatprep.subr.mxu0 0.0
  %177 = vmatpush1.msra.mxu0 0.0
  %178 = vmatprep.subr.mxu0 0.0
  %179 = vmatpush1.msra.mxu0 0.0
  %180 = vmatprep.subr.mxu0 0.0
  %181 = vmatpush1.msra.mxu0 0.0
  %182 = vmatprep.subr.mxu0 0.0
  %183 = vmatpush1.msra.mxu0 0.0
  %184 = vmatprep.subr.mxu0 0.0
  %185 = vmatpush1.msra.mxu0 0.0
  %186 = vmatprep.subr.mxu0 0.0
  %187 = vmatpush1.msra.mxu0 0.0
  %188 = vmatprep.subr.mxu0 0.0
  %189 = vmatpush1.msra.mxu0 0.0
  %190 = vmatprep.subr.mxu0 0.0
  %191 = vmatpush1.msra.mxu0 0.0
  %192 = vmatprep.subr.mxu0 0.0
  %193 = vmatpush1.msra.mxu0 0.0
  %194 = vmatprep.subr.mxu0 0.0
  %195 = vmatpush1.msra.mxu0 0.0
  %196 = vmatprep.subr.mxu0 0.0
  %197 = vmatpush1.msra.mxu0 0.0
  %198 = vmatprep.subr.mxu0 0.0
  %199 = vmatpush1.msra.mxu0 0.0
  %200 = vmatprep.subr.mxu0 0.0
  %201 = vmatpush1.msra.mxu0 0.0
  %202 = vmatprep.subr.mxu0 0.0
  %203 = vmatpush1.msra.mxu0 0.0
  %204 = vmatprep.subr.mxu0 0.0
  %205 = vmatpush1.msra.mxu0 0.0
  %206 = vmatprep.subr.mxu0 0.0
  %207 = vmatpush1.msra.mxu0 0.0
  %208 = vmatprep.subr.mxu0 0.0
  %209 = vmatpush1.msra.mxu0 0.0
  %210 = vmatprep.subr.mxu0 0.0
  %211 = vmatpush1.msra.mxu0 0.0
  %212 = vmatprep.subr.mxu0 0.0
  %213 = vmatpush1.msra.mxu0 0.0
  %214 = vmatprep.subr.mxu0 0.0
  %215 = vmatpush1.msra.mxu0 0.0
  %216 = vmatprep.subr.mxu0 0.0
  %217 = vmatpush1.msra.mxu0 0.0
  %218 = vmatprep.mubr.f32.mxu0 0.0
  %219 = vmatmul.mubr.f32.gmra.mrb[0].mxu0 %v143
  %v220 = vpop.f32.mrb[0].mxu0
  %v221 = vadd.f32 %v140, %v220
  %v222 = vpop.f32.mrb[0].mxu0
  %223 = vmatprep.mubr.f32.mxu0 0.0
  %224 = vmatmul.mubr.f32.gmra.mrb[0].mxu0 %v146
  %v225 = vpop.f32.mrb[0].mxu0
  %v226 = vadd.f32 %v140, %v225
  %v227 = vpop.f32.mrb[0].mxu0
  %228 = vmatprep.mubr.f32.mxu0 0.0
  %229 = vmatmul.mubr.f32.gmra.mrb[0].mxu0 %v149
  %v230 = vpop.f32.mrb[0].mxu0
  %v231 = vadd.f32 %v140, %v230
  %v232 = vpop.f32.mrb[0].mxu0
  %233 = vmatprep.mubr.f32.mxu0 0.0
  %234 = vmatmul.mubr.f32.gmra.mrb[0].mxu0 %v152
  %v235 = vpop.f32.mrb[0].mxu0
  %v236 = vadd.f32 %v140, %v235
  %v237 = vpop.f32.mrb[0].mxu0
  %238 = vdwg.mxu0
  %v239 = vtanh.pop %v221
  %v240 = vtanh.pop %v226
  %v241 = vtanh.pop %v231
  %v242 = vtanh.pop %v236
  %243 = vst.msk [vmem:[%s2] sm:$0xff] %vm22, %v239
  %244 = vst.msk [vmem:[%s2 + $0x8] sm:$0xff] %vm22, %v240
  %245 = vst.msk [vmem:[%s2 + $0x10] sm:$0xff] %vm22, %v241
  %246 = vst.msk [vmem:[%s2 + $0x18] sm:$0xff] %vm22, %v242
  // Predicated region
  $region10: #{school_forward.2} parent=0 // pred_check
    _
  $region11: #{school_forward.2} parent=0 // pred_check_branch
    %248 = sbr.rel (0) target = $region13
  $region12: #{school_forward.2} parent=0 // pred_region
    _
  $region13: #{school_forward.2} parent=0 // pred_fallthru
    _
  // Predicated region
  $region14: #{school_forward.2} parent=0 // pred_check
    _
  $region15: #{school_forward.2} parent=0 // pred_check_branch
    %250 = sbr.rel (0) target = $region17
  $region16: #{school_forward.2} parent=0 // pred_region
    _
  $region17: #{school_forward.2} parent=0 // pred_fallthru
    _

// kernel: school_forward.3
$region0: #{school_forward.3}
  #allocation0 [shape = 'u32[]', space=smem, size = 0x4, offset = 0x4, fixed_abs, tag = 'smem constant byte address 0x4 - core index']
  #allocation1 [shape = 'u32[144,128]{1,0:T(1,128)}', space=vmem, size = 0x12000, scoped, tag = 'internal scratch']
  %s0 = inlined_call_operand.vmem [shape: f32[2], index: 0, kind: input, shape index: {}]
  %s1 = inlined_call_operand.vmem [shape: f32[32,16], index: 1, kind: input, shape index: {}]
  %s2 = inlined_call_operand.vmem [shape: s32[32,5], index: 2, kind: input, shape index: {}]
  %s3 = inlined_call_operand.vmem [shape: f32[32,32], index: 3, kind: input, shape index: {}]
  %s4 = inlined_call_operand.vmem [shape: f32[128,128], index: 4, kind: input, shape index: {}]
  %s5 = inlined_call_operand.vmem [shape: f32[32,128], index: 5, kind: output, shape index: {}]
  %s6 = sld [smem:[#allocation0]]
  $region34: #{school_forward.3} parent=0
    _
  %s8 = ssub.s32 1, %s6
  %s9 = scalar_select 0, %s8, %s6
  $region1: #{school_forward.3} parent=0
    #allocation2 [shape = 'u8[512]{0}', space=smem, size = 0x200, scoped, tag = 'input window, operand 0, single buffered']
    #allocation3 [shape = 's32[1]{0}', space=sflag, size = 0x4, scoped, tag = 'scoped memory for school_forward.3']
    %10 = vsyncpa [#allocation3], 0
    // Predicated region
    $region2: #{school_forward.3} parent=1 // pred_check
      _
    $region3: #{school_forward.3} parent=1 // pred_check_branch
      %12 = sbr.rel (0) target = $region5
    $region4: #{school_forward.3} parent=1 // pred_region
      %s14 = ssub.s32 16, 16
      %15 = vsyncadd [#allocation3], %s14
      %s17 = sshll.u32 %s0, 4
      %s18 = int_to_ptr.vmem [resolvable:$true] %s17
      %20 = dma.vmem_to_smem %s18, 16, [#allocation2], [#allocation3]
    $region5: #{school_forward.3} parent=1 // pred_fallthru
      _
    // Predicated region
    $region6: #{school_forward.3} parent=1 // pred_check
      _
    $region7: #{school_forward.3} parent=1 // pred_check_branch
      %22 = sbr.rel (0) target = $region9
    $region8: #{school_forward.3} parent=1 // pred_region
      _
    $region9: #{school_forward.3} parent=1 // pred_fallthru
      _
    // Predicated region
    $region10: #{school_forward.3} parent=1 // pred_check
      _
    $region11: #{school_forward.3} parent=1 // pred_check_branch
      %24 = sbr.rel (0) target = $region13
    $region12: #{school_forward.3} parent=1 // pred_region
      _
    $region13: #{school_forward.3} parent=1 // pred_fallthru
      _
    // Predicated region
    $region14: #{school_forward.3} parent=1 // pred_check
      _
    $region15: #{school_forward.3} parent=1 // pred_check_branch
      %26 = sbr.rel (0) target = $region17
    $region16: #{school_forward.3} parent=1 // pred_region
      _
    $region17: #{school_forward.3} parent=1 // pred_fallthru
      _
    // Predicated region
    $region18: #{school_forward.3} parent=1 // pred_check
      _
    $region19: #{school_forward.3} parent=1 // pred_check_branch
      %28 = sbr.rel (0) target = $region21
    $region20: #{school_forward.3} parent=1 // pred_region
      _
    $region21: #{school_forward.3} parent=1 // pred_fallthru
      _
    // Predicated region
    $region22: #{school_forward.3} parent=1 // pred_check
      _
    $region23: #{school_forward.3} parent=1 // pred_check_branch
      %30 = sbr.rel (0) target = $region25
    $region24: #{school_forward.3} parent=1 // pred_region
      %31 = dma.done [#allocation3], 16
    $region25: #{school_forward.3} parent=1 // pred_fallthru
      _
    %32 = sfence
    %v34 = vld [vmem:[%s1] sm:$0xff]
    %v35 = vld [vmem:[%s1 + $0x8] sm:$0xff]
    %v36 = vld [vmem:[%s1 + $0x10] sm:$0xff]
    %v37 = vld [vmem:[%s1 + $0x18] sm:$0xff]
    %v38 = vld [vmem:[%s4] sm:$0xff]
    %v39 = vld [vmem:[%s4 + $0x8] sm:$0xff]
    %v40 = vld [vmem:[%s4 + $0x10] sm:$0x1]
    %v41 = vlaneseq
    %v42 = vshrl.u32 %v41, 7
    %v43 = vsub.s32 0, %v42
    %v44 = vrot.slane %v40, %v43
    %vm45 = vcmask 130048
    %v47 = vsel %vm45, %v34, 0
    %v50 = vsel %vm45, %v35, 0
    %v53 = vsel %vm45, %v36, 0
    %v56 = vsel %vm45, %v37, 0
    %58 = vmatprep.subr.mxu0 0.0
    %59 = vmatpush1.msra.mxu0 %v38
    %60 = vmatprep.subr.mxu0 0.0
    %61 = vmatpush1.msra.mxu0 %v39
    %62 = vmatprep.subr.mxu0 0.0
    %63 = vmatpush1.msra.mxu0 0.0
    %64 = vmatprep.subr.mxu0 0.0
    %65 = vmatpush1.msra.mxu0 0.0
    %66 = vmatprep.subr.mxu0 0.0
    %67 = vmatpush1.msra.mxu0 0.0
    %68 = vmatprep.subr.mxu0 0.0
    %69 = vmatpush1.msra.mxu0 0.0
    %70 = vmatprep.subr.mxu0 0.0
    %71 = vmatpush1.msra.mxu0 0.0
    %72 = vmatprep.subr.mxu0 0.0
    %73 = vmatpush1.msra.mxu0 0.0
    %74 = vmatprep.subr.mxu0 0.0
    %75 = vmatpush1.msra.mxu0 0.0
    %76 = vmatprep.subr.mxu0 0.0
    %77 = vmatpush1.msra.mxu0 0.0
    %78 = vmatprep.subr.mxu0 0.0
    %79 = vmatpush1.msra.mxu0 0.0
    %80 = vmatprep.subr.mxu0 0.0
    %81 = vmatpush1.msra.mxu0 0.0
    %82 = vmatprep.subr.mxu0 0.0
    %83 = vmatpush1.msra.mxu0 0.0
    %84 = vmatprep.subr.mxu0 0.0
    %85 = vmatpush1.msra.mxu0 0.0
    %86 = vmatprep.subr.mxu0 0.0
    %87 = vmatpush1.msra.mxu0 0.0
    %88 = vmatprep.subr.mxu0 0.0
    %89 = vmatpush1.msra.mxu0 0.0
    %90 = vmatprep.subr.mxu0 0.0
    %91 = vmatpush1.msra.mxu0 0.0
    %92 = vmatprep.subr.mxu0 0.0
    %93 = vmatpush1.msra.mxu0 0.0
    %94 = vmatprep.subr.mxu0 0.0
    %95 = vmatpush1.msra.mxu0 0.0
    %96 = vmatprep.subr.mxu0 0.0
    %97 = vmatpush1.msra.mxu0 0.0
    %98 = vmatprep.subr.mxu0 0.0
    %99 = vmatpush1.msra.mxu0 0.0
    %100 = vmatprep.subr.mxu0 0.0
    %101 = vmatpush1.msra.mxu0 0.0
    %102 = vmatprep.subr.mxu0 0.0
    %103 = vmatpush1.msra.mxu0 0.0
    %104 = vmatprep.subr.mxu0 0.0
    %105 = vmatpush1.msra.mxu0 0.0
    %106 = vmatprep.subr.mxu0 0.0
    %107 = vmatpush1.msra.mxu0 0.0
    %108 = vmatprep.subr.mxu0 0.0
    %109 = vmatpush1.msra.mxu0 0.0
    %110 = vmatprep.subr.mxu0 0.0
    %111 = vmatpush1.msra.mxu0 0.0
    %112 = vmatprep.subr.mxu0 0.0
    %113 = vmatpush1.msra.mxu0 0.0
    %114 = vmatprep.subr.mxu0 0.0
    %115 = vmatpush1.msra.mxu0 0.0
    %116 = vmatprep.subr.mxu0 0.0
    %117 = vmatpush1.msra.mxu0 0.0
    %118 = vmatprep.subr.mxu0 0.0
    %119 = vmatpush1.msra.mxu0 0.0
    %120 = vmatprep.subr.mxu0 0.0
    %121 = vmatpush1.msra.mxu0 0.0
    %122 = vmatprep.mubr.f32.mxu0 0.0
    %123 = vmatmul.mubr.f32.gmra.mrb[0].mxu0 %v47
    %v124 = vpop.f32.mrb[0].mxu0
    %v125 = vadd.f32 %v44, %v124
    %v126 = vpop.f32.mrb[0].mxu0
    %127 = vmatprep.mubr.f32.mxu0 0.0
    %128 = vmatmul.mubr.f32.gmra.mrb[0].mxu0 %v50
    %v129 = vpop.f32.mrb[0].mxu0
    %v130 = vadd.f32 %v44, %v129
    %v131 = vpop.f32.mrb[0].mxu0
    %132 = vmatprep.mubr.f32.mxu0 0.0
    %133 = vmatmul.mubr.f32.gmra.mrb[0].mxu0 %v53
    %v134 = vpop.f32.mrb[0].mxu0
    %v135 = vadd.f32 %v44, %v134
    %v136 = vpop.f32.mrb[0].mxu0
    %137 = vmatprep.mubr.f32.mxu0 0.0
    %138 = vmatmul.mubr.f32.gmra.mrb[0].mxu0 %v56
    %v139 = vpop.f32.mrb[0].mxu0
    %v140 = vadd.f32 %v44, %v139
    %v141 = vpop.f32.mrb[0].mxu0
    %142 = vdwg.mxu0
    %vm143 = vcmp.ge.f32.partialorder %v125, 0.0
    %vm144 = vcmp.ge.f32.partialorder %v130, 0.0
    %vm145 = vcmp.ge.f32.partialorder %v135, 0.0
    %vm146 = vcmp.ge.f32.partialorder %v140, 0.0
    %v147 = vmul.f32 %v125, 0.01
    %v148 = vmul.f32 %v130, 0.01
    %v149 = vmul.f32 %v135, 0.01
    %v150 = vmul.f32 %v140, 0.01
    %v151 = vsel %vm143, %v125, %v147
    %v152 = vsel %vm144, %v130, %v148
    %v153 = vsel %vm145, %v135, %v149
    %v154 = vsel %vm146, %v140, %v150
    %v155 = vld [vmem:[%s4 + $0x18] sm:$0xff]
    %v156 = vld [vmem:[%s4 + $0x20] sm:$0xff]
    %v157 = vld [vmem:[%s4 + $0x28] sm:$0xff]
    %v158 = vld [vmem:[%s4 + $0x30] sm:$0xff]
    %v159 = vld [vmem:[%s4 + $0x38] sm:$0x1]
    %v160 = vlaneseq
    %v161 = vshrl.u32 %v160, 7
    %v162 = vsub.s32 0, %v161
    %v163 = vrot.slane %v159, %v162
    %vm164 = vcmask 261120
    %v166 = vsel %vm164, %v151, 0
    %v169 = vsel %vm164, %v152, 0
    %v172 = vsel %vm164, %v153, 0
    %v175 = vsel %vm164, %v154, 0
    %177 = vmatprep.subr.mxu0 0.0
    %178 = vmatpush1.msra.mxu0 %v155
    %179 = vmatprep.subr.mxu0 0.0
    %180 = vmatpush1.msra.mxu0 %v156
    %181 = vmatprep.subr.mxu0 0.0
    %182 = vmatpush1.msra.mxu0 %v157
    %183 = vmatprep.subr.mxu0 0.0
    %184 = vmatpush1.msra.mxu0 %v158
    %185 = vmatprep.subr.mxu0 0.0
    %186 = vmatpush1.msra.mxu0 0.0
    %187 = vmatprep.subr.mxu0 0.0
    %188 = vmatpush1.msra.mxu0 0.0
    %189 = vmatprep.subr.mxu0 0.0
    %190 = vmatpush1.msra.mxu0 0.0
    %191 = vmatprep.subr.mxu0 0.0
    %192 = vmatpush1.msra.mxu0 0.0
    %193 = vmatprep.subr.mxu0 0.0
    %194 = vmatpush1.msra.mxu0 0.0
    %195 = vmatprep.subr.mxu0 0.0
    %196 = vmatpush1.msra.mxu0 0.0
    %197 = vmatprep.subr.mxu0 0.0
    %198 = vmatpush1.msra.mxu0 0.0
    %199 = vmatprep.subr.mxu0 0.0
    %200 = vmatpush1.msra.mxu0 0.0
    %201 = vmatprep.subr.mxu0 0.0
    %202 = vmatpush1.msra.mxu0 0.0
    %203 = vmatprep.subr.mxu0 0.0
    %204 = vmatpush1.msra.mxu0 0.0
    %205 = vmatprep.subr.mxu0 0.0
    %206 = vmatpush1.msra.mxu0 0.0
    %207 = vmatprep.subr.mxu0 0.0
    %208 = vmatpush1.msra.mxu0 0.0
    %209 = vmatprep.subr.mxu0 0.0
    %210 = vmatpush1.msra.mxu0 0.0
    %211 = vmatprep.subr.mxu0 0.0
    %212 = vmatpush1.msra.mxu0 0.0
    %213 = vmatprep.subr.mxu0 0.0
    %214 = vmatpush1.msra.mxu0 0.0
    %215 = vmatprep.subr.mxu0 0.0
    %216 = vmatpush1.msra.mxu0 0.0
    %217 = vmatprep.subr.mxu0 0.0
    %218 = vmatpush1.msra.mxu0 0.0
    %219 = vmatprep.subr.mxu0 0.0
    %220 = vmatpush1.msra.mxu0 0.0
    %221 = vmatprep.subr.mxu0 0.0
    %222 = vmatpush1.msra.mxu0 0.0
    %223 = vmatprep.subr.mxu0 0.0
    %224 = vmatpush1.msra.mxu0 0.0
    %225 = vmatprep.subr.mxu0 0.0
    %226 = vmatpush1.msra.mxu0 0.0
    %227 = vmatprep.subr.mxu0 0.0
    %228 = vmatpush1.msra.mxu0 0.0
    %229 = vmatprep.subr.mxu0 0.0
    %230 = vmatpush1.msra.mxu0 0.0
    %231 = vmatprep.subr.mxu0 0.0
    %232 = vmatpush1.msra.mxu0 0.0
    %233 = vmatprep.subr.mxu0 0.0
    %234 = vmatpush1.msra.mxu0 0.0
    %235 = vmatprep.subr.mxu0 0.0
    %236 = vmatpush1.msra.mxu0 0.0
    %237 = vmatprep.subr.mxu0 0.0
    %238 = vmatpush1.msra.mxu0 0.0
    %239 = vmatprep.subr.mxu0 0.0
    %240 = vmatpush1.msra.mxu0 0.0
    %241 = vmatprep.mubr.f32.mxu0 0.0
    %242 = vmatmul.mubr.f32.gmra.mrb[0].mxu0 %v166
    %v243 = vpop.f32.mrb[0].mxu0
    %v244 = vadd.f32 %v163, %v243
    %v245 = vpop.f32.mrb[0].mxu0
    %246 = vmatprep.mubr.f32.mxu0 0.0
    %247 = vmatmul.mubr.f32.gmra.mrb[0].mxu0 %v169
    %v248 = vpop.f32.mrb[0].mxu0
    %v249 = vadd.f32 %v163, %v248
    %v250 = vpop.f32.mrb[0].mxu0
    %251 = vmatprep.mubr.f32.mxu0 0.0
    %252 = vmatmul.mubr.f32.gmra.mrb[0].mxu0 %v172
    %v253 = vpop.f32.mrb[0].mxu0
    %v254 = vadd.f32 %v163, %v253
    %v255 = vpop.f32.mrb[0].mxu0
    %256 = vmatprep.mubr.f32.mxu0 0.0
    %257 = vmatmul.mubr.f32.gmra.mrb[0].mxu0 %v175
    %v258 = vpop.f32.mrb[0].mxu0
    %v259 = vadd.f32 %v163, %v258
    %v260 = vpop.f32.mrb[0].mxu0
    %261 = vdwg.mxu0
    %v262 = vtanh.pop %v244
    %v263 = vtanh.pop %v249
    %v264 = vtanh.pop %v254
    %v265 = vtanh.pop %v259
    %v266 = vld [vmem:[%s4 + $0x40] sm:$0xff]
    %v267 = vld [vmem:[%s4 + $0x48] sm:$0xff]
    %v269 = vsel %vm45, %v262, 0
    %v272 = vsel %vm45, %v263, 0
    %v275 = vsel %vm45, %v264, 0
    %v278 = vsel %vm45, %v265, 0
    %280 = vmatprep.subr.mxu0 0.0
    %281 = vmatpush1.msra.mxu0 %v266
    %282 = vmatprep.subr.mxu0 0.0
    %283 = vmatpush1.msra.mxu0 %v267
    %284 = vmatprep.subr.mxu0 0.0
    %285 = vmatpush1.msra.mxu0 0.0
    %286 = vmatprep.subr.mxu0 0.0
    %287 = vmatpush1.msra.mxu0 0.0
    %288 = vmatprep.subr.mxu0 0.0
    %289 = vmatpush1.msra.mxu0 0.0
    %290 = vmatprep.subr.mxu0 0.0
    %291 = vmatpush1.msra.mxu0 0.0
    %292 = vmatprep.subr.mxu0 0.0
    %293 = vmatpush1.msra.mxu0 0.0
    %294 = vmatprep.subr.mxu0 0.0
    %295 = vmatpush1.msra.mxu0 0.0
    %296 = vmatprep.subr.mxu0 0.0
    %297 = vmatpush1.msra.mxu0 0.0
    %298 = vmatprep.subr.mxu0 0.0
    %299 = vmatpush1.msra.mxu0 0.0
    %300 = vmatprep.subr.mxu0 0.0
    %301 = vmatpush1.msra.mxu0 0.0
    %302 = vmatprep.subr.mxu0 0.0
    %303 = vmatpush1.msra.mxu0 0.0
    %304 = vmatprep.subr.mxu0 0.0
    %305 = vmatpush1.msra.mxu0 0.0
    %306 = vmatprep.subr.mxu0 0.0
    %307 = vmatpush1.msra.mxu0 0.0
    %308 = vmatprep.subr.mxu0 0.0
    %309 = vmatpush1.msra.mxu0 0.0
    %310 = vmatprep.subr.mxu0 0.0
    %311 = vmatpush1.msra.mxu0 0.0
    %312 = vmatprep.subr.mxu0 0.0
    %313 = vmatpush1.msra.mxu0 0.0
    %314 = vmatprep.subr.mxu0 0.0
    %315 = vmatpush1.msra.mxu0 0.0
    %316 = vmatprep.subr.mxu0 0.0
    %317 = vmatpush1.msra.mxu0 0.0
    %318 = vmatprep.subr.mxu0 0.0
    %319 = vmatpush1.msra.mxu0 0.0
    %320 = vmatprep.subr.mxu0 0.0
    %321 = vmatpush1.msra.mxu0 0.0
    %322 = vmatprep.subr.mxu0 0.0
    %323 = vmatpush1.msra.mxu0 0.0
    %324 = vmatprep.subr.mxu0 0.0
    %325 = vmatpush1.msra.mxu0 0.0
    %326 = vmatprep.subr.mxu0 0.0
    %327 = vmatpush1.msra.mxu0 0.0
    %328 = vmatprep.subr.mxu0 0.0
    %329 = vmatpush1.msra.mxu0 0.0
    %330 = vmatprep.subr.mxu0 0.0
    %331 = vmatpush1.msra.mxu0 0.0
    %332 = vmatprep.subr.mxu0 0.0
    %333 = vmatpush1.msra.mxu0 0.0
    %334 = vmatprep.subr.mxu0 0.0
    %335 = vmatpush1.msra.mxu0 0.0
    %336 = vmatprep.subr.mxu0 0.0
    %337 = vmatpush1.msra.mxu0 0.0
    %338 = vmatprep.subr.mxu0 0.0
    %339 = vmatpush1.msra.mxu0 0.0
    %340 = vmatprep.subr.mxu0 0.0
    %341 = vmatpush1.msra.mxu0 0.0
    %342 = vmatprep.subr.mxu0 0.0
    %343 = vmatpush1.msra.mxu0 0.0
    %344 = vmatprep.mubr.f32.mxu0 0.0
    %345 = vmatmul.mubr.f32.gmra.mrb[0].mxu0 %v269
    %v346 = vpop.f32.mrb[0].mxu0
    %v347 = vadd.f32 0.0, %v346
    %v348 = vpop.f32.mrb[0].mxu0
    %349 = vmatprep.mubr.f32.mxu0 0.0
    %350 = vmatmul.mubr.f32.gmra.mrb[0].mxu0 %v272
    %v351 = vpop.f32.mrb[0].mxu0
    %v352 = vadd.f32 0.0, %v351
    %v353 = vpop.f32.mrb[0].mxu0
    %354 = vmatprep.mubr.f32.mxu0 0.0
    %355 = vmatmul.mubr.f32.gmra.mrb[0].mxu0 %v275
    %v356 = vpop.f32.mrb[0].mxu0
    %v357 = vadd.f32 0.0, %v356
    %v358 = vpop.f32.mrb[0].mxu0
    %359 = vmatprep.mubr.f32.mxu0 0.0
    %360 = vmatmul.mubr.f32.gmra.mrb[0].mxu0 %v278
    %v361 = vpop.f32.mrb[0].mxu0
    %v362 = vadd.f32 0.0, %v361
    %v363 = vpop.f32.mrb[0].mxu0
    %364 = vdwg.mxu0
    %v365 = vlaneseq
    %v366 = vshrl.u32 %v365, 7
    %v367 = vadd.s32 %v366, 8
    %v368 = vadd.s32 %v366, 16
    %v369 = vadd.s32 %v366, 24
    %v370 = vlaneseq
    %v371 = vand.u32 %v370, 127
    %vm372 = vcmp.eq.s32.totalorder %v366, %v371
    %vm373 = vcmp.eq.s32.totalorder %v367, %v371
    %vm374 = vcmp.eq.s32.totalorder %v368, %v371
    %vm375 = vcmp.eq.s32.totalorder %v369, %v371
    %v376 = vsel %vm372, 1, 0
    %v377 = vsel %vm373, 1, 0
    %v378 = vsel %vm374, 1, 0
    %v379 = vsel %vm375, 1, 0
    %v380 = vcvt.s32.f32 %v376
    %v381 = vcvt.s32.f32 %v377
    %v382 = vcvt.s32.f32 %v378
    %v383 = vcvt.s32.f32 %v379
    %vm384 = vcmp.lt.s32.totalorder %v371, 8
    %v385 = vsel %vm384, 1, 0
    %v386 = vcvt.s32.f32 %v385
    %v387 = vmul.f32 %v347, %v386
    %v388 = vmul.f32 %v352, %v386
    %v389 = vmul.f32 %v357, %v386
    %v390 = vmul.f32 %v362, %v386
    %v391 = vsub.f32 1.0, %v386
    %v392 = vmul.f32 %v347, %v391
    %v393 = vmul.f32 %v352, %v391
    %v394 = vmul.f32 %v357, %v391
    %v395 = vmul.f32 %v362, %v391
    %v397 = vsel %vm45, %v387, 0
    %v400 = vsel %vm45, %v388, 0
    %v403 = vsel %vm45, %v389, 0
    %v406 = vsel %vm45, %v390, 0
    %408 = vmatprep.subr.mxu0 0.0
    %409 = vmatpush1.xpose.msra.mxu0 %v397
    %410 = vmatprep.subr.mxu0 0.0
    %411 = vmatpush1.xpose.msra.mxu0 %v400
    %412 = vmatprep.subr.mxu0 0.0
    %413 = vmatpush1.xpose.msra.mxu0 %v403
    %414 = vmatprep.subr.mxu0 0.0
    %415 = vmatpush1.xpose.msra.mxu0 %v406
    %416 = vmatprep.subr.mxu0 0.0
    %417 = vmatpush1.xpose.msra.mxu0 0.0
    %418 = vmatprep.subr.mxu0 0.0
    %419 = vmatpush1.xpose.msra.mxu0 0.0
    %420 = vmatprep.subr.mxu0 0.0
    %421 = vmatpush1.xpose.msra.mxu0 0.0
    %422 = vmatprep.subr.mxu0 0.0
    %423 = vmatpush1.xpose.msra.mxu0 0.0
    %424 = vmatprep.subr.mxu0 0.0
    %425 = vmatpush1.xpose.msra.mxu0 0.0
    %426 = vmatprep.subr.mxu0 0.0
    %427 = vmatpush1.xpose.msra.mxu0 0.0
    %428 = vmatprep.subr.mxu0 0.0
    %429 = vmatpush1.xpose.msra.mxu0 0.0
    %430 = vmatprep.subr.mxu0 0.0
    %431 = vmatpush1.xpose.msra.mxu0 0.0
    %432 = vmatprep.subr.mxu0 0.0
    %433 = vmatpush1.xpose.msra.mxu0 0.0
    %434 = vmatprep.subr.mxu0 0.0
    %435 = vmatpush1.xpose.msra.mxu0 0.0
    %436 = vmatprep.subr.mxu0 0.0
    %437 = vmatpush1.xpose.msra.mxu0 0.0
    %438 = vmatprep.subr.mxu0 0.0
    %439 = vmatpush1.xpose.msra.mxu0 0.0
    %440 = vmatprep.subr.mxu0 0.0
    %441 = vmatpush1.xpose.msra.mxu0 0.0
    %442 = vmatprep.subr.mxu0 0.0
    %443 = vmatpush1.xpose.msra.mxu0 0.0
    %444 = vmatprep.subr.mxu0 0.0
    %445 = vmatpush1.xpose.msra.mxu0 0.0
    %446 = vmatprep.subr.mxu0 0.0
    %447 = vmatpush1.xpose.msra.mxu0 0.0
    %448 = vmatprep.subr.mxu0 0.0
    %449 = vmatpush1.xpose.msra.mxu0 0.0
    %450 = vmatprep.subr.mxu0 0.0
    %451 = vmatpush1.xpose.msra.mxu0 0.0
    %452 = vmatprep.subr.mxu0 0.0
    %453 = vmatpush1.xpose.msra.mxu0 0.0
    %454 = vmatprep.subr.mxu0 0.0
    %455 = vmatpush1.xpose.msra.mxu0 0.0
    %456 = vmatprep.subr.mxu0 0.0
    %457 = vmatpush1.xpose.msra.mxu0 0.0
    %458 = vmatprep.subr.mxu0 0.0
    %459 = vmatpush1.xpose.msra.mxu0 0.0
    %460 = vmatprep.subr.mxu0 0.0
    %461 = vmatpush1.xpose.msra.mxu0 0.0
    %462 = vmatprep.subr.mxu0 0.0
    %463 = vmatpush1.xpose.msra.mxu0 0.0
    %464 = vmatprep.subr.mxu0 0.0
    %465 = vmatpush1.xpose.msra.mxu0 0.0
    %466 = vmatprep.subr.mxu0 0.0
    %467 = vmatpush1.xpose.msra.mxu0 0.0
    %468 = vmatprep.subr.mxu0 0.0
    %469 = vmatpush1.xpose.msra.mxu0 0.0
    %470 = vmatprep.subr.mxu0 0.0
    %471 = vmatpush1.xpose.msra.mxu0 0.0
    %472 = vmatprep.mubr.f32.mxu0 0.0
    %473 = vmatmul.mubr.f32.gmra.mrb[0].mxu0 %v397
    %v474 = vpop.f32.mrb[0].mxu0
    %v475 = vadd.f32 0.0, %v474
    %v476 = vpop.f32.mrb[0].mxu0
    %477 = vmatprep.mubr.f32.mxu0 0.0
    %478 = vmatmul.mubr.f32.gmra.mrb[0].mxu0 %v400
    %v479 = vpop.f32.mrb[0].mxu0
    %v480 = vadd.f32 0.0, %v479
    %v481 = vpop.f32.mrb[0].mxu0
    %482 = vmatprep.mubr.f32.mxu0 0.0
    %483 = vmatmul.mubr.f32.gmra.mrb[0].mxu0 %v403
    %v484 = vpop.f32.mrb[0].mxu0
    %v485 = vadd.f32 0.0, %v484
    %v486 = vpop.f32.mrb[0].mxu0
    %487 = vmatprep.mubr.f32.mxu0 0.0
    %488 = vmatmul.mubr.f32.gmra.mrb[0].mxu0 %v406
    %v489 = vpop.f32.mrb[0].mxu0
    %v490 = vadd.f32 0.0, %v489
    %v491 = vpop.f32.mrb[0].mxu0
    %492 = vdwg.mxu0
    %v494 = vsel %vm45, %v392, 0
    %v497 = vsel %vm45, %v393, 0
    %v500 = vsel %vm45, %v394, 0
    %v503 = vsel %vm45, %v395, 0
    %505 = vmatprep.subr.mxu0 0.0
    %506 = vmatpush1.xpose.msra.mxu0 %v494
    %507 = vmatprep.subr.mxu0 0.0
    %508 = vmatpush1.xpose.msra.mxu0 %v497
    %509 = vmatprep.subr.mxu0 0.0
    %510 = vmatpush1.xpose.msra.mxu0 %v500
    %511 = vmatprep.subr.mxu0 0.0
    %512 = vmatpush1.xpose.msra.mxu0 %v503
    %513 = vmatprep.subr.mxu0 0.0
    %514 = vmatpush1.xpose.msra.mxu0 0.0
    %515 = vmatprep.subr.mxu0 0.0
    %516 = vmatpush1.xpose.msra.mxu0 0.0
    %517 = vmatprep.subr.mxu0 0.0
    %518 = vmatpush1.xpose.msra.mxu0 0.0
    %519 = vmatprep.subr.mxu0 0.0
    %520 = vmatpush1.xpose.msra.mxu0 0.0
    %521 = vmatprep.subr.mxu0 0.0
    %522 = vmatpush1.xpose.msra.mxu0 0.0
    %523 = vmatprep.subr.mxu0 0.0
    %524 = vmatpush1.xpose.msra.mxu0 0.0
    %525 = vmatprep.subr.mxu0 0.0
    %526 = vmatpush1.xpose.msra.mxu0 0.0
    %527 = vmatprep.subr.mxu0 0.0
    %528 = vmatpush1.xpose.msra.mxu0 0.0
    %529 = vmatprep.subr.mxu0 0.0
    %530 = vmatpush1.xpose.msra.mxu0 0.0
    %531 = vmatprep.subr.mxu0 0.0
    %532 = vmatpush1.xpose.msra.mxu0 0.0
    %533 = vmatprep.subr.mxu0 0.0
    %534 = vmatpush1.xpose.msra.mxu0 0.0
    %535 = vmatprep.subr.mxu0 0.0
    %536 = vmatpush1.xpose.msra.mxu0 0.0
    %537 = vmatprep.subr.mxu0 0.0
    %538 = vmatpush1.xpose.msra.mxu0 0.0
    %539 = vmatprep.subr.mxu0 0.0
    %540 = vmatpush1.xpose.msra.mxu0 0.0
    %541 = vmatprep.subr.mxu0 0.0
    %542 = vmatpush1.xpose.msra.mxu0 0.0
    %543 = vmatprep.subr.mxu0 0.0
    %544 = vmatpush1.xpose.msra.mxu0 0.0
    %545 = vmatprep.subr.mxu0 0.0
    %546 = vmatpush1.xpose.msra.mxu0 0.0
    %547 = vmatprep.subr.mxu0 0.0
    %548 = vmatpush1.xpose.msra.mxu0 0.0
    %549 = vmatprep.subr.mxu0 0.0
    %550 = vmatpush1.xpose.msra.mxu0 0.0
    %551 = vmatprep.subr.mxu0 0.0
    %552 = vmatpush1.xpose.msra.mxu0 0.0
    %553 = vmatprep.subr.mxu0 0.0
    %554 = vmatpush1.xpose.msra.mxu0 0.0
    %555 = vmatprep.subr.mxu0 0.0
    %556 = vmatpush1.xpose.msra.mxu0 0.0
    %557 = vmatprep.subr.mxu0 0.0
    %558 = vmatpush1.xpose.msra.mxu0 0.0
    %559 = vmatprep.subr.mxu0 0.0
    %560 = vmatpush1.xpose.msra.mxu0 0.0
    %561 = vmatprep.subr.mxu0 0.0
    %562 = vmatpush1.xpose.msra.mxu0 0.0
    %563 = vmatprep.subr.mxu0 0.0
    %564 = vmatpush1.xpose.msra.mxu0 0.0
    %565 = vmatprep.subr.mxu0 0.0
    %566 = vmatpush1.xpose.msra.mxu0 0.0
    %567 = vmatprep.subr.mxu0 0.0
    %568 = vmatpush1.xpose.msra.mxu0 0.0
    %569 = vmatprep.mubr.f32.mxu0 0.0
    %570 = vmatmul.mubr.f32.gmra.mrb[0].mxu0 %v494
    %v571 = vpop.f32.mrb[0].mxu0
    %v572 = vadd.f32 0.0, %v571
    %v573 = vpop.f32.mrb[0].mxu0
    %574 = vmatprep.mubr.f32.mxu0 0.0
    %575 = vmatmul.mubr.f32.gmra.mrb[0].mxu0 %v497
    %v576 = vpop.f32.mrb[0].mxu0
    %v577 = vadd.f32 0.0, %v576
    %v578 = vpop.f32.mrb[0].mxu0
    %579 = vmatprep.mubr.f32.mxu0 0.0
    %580 = vmatmul.mubr.f32.gmra.mrb[0].mxu0 %v500
    %v581 = vpop.f32.mrb[0].mxu0
    %v582 = vadd.f32 0.0, %v581
    %v583 = vpop.f32.mrb[0].mxu0
    %584 = vmatprep.mubr.f32.mxu0 0.0
    %585 = vmatmul.mubr.f32.gmra.mrb[0].mxu0 %v503
    %v586 = vpop.f32.mrb[0].mxu0
    %v587 = vadd.f32 0.0, %v586
    %v588 = vpop.f32.mrb[0].mxu0
    %589 = vdwg.mxu0
    %v590 = vadd.f32 %v475, %v572
    %v591 = vadd.f32 %v480, %v577
    %v592 = vadd.f32 %v485, %v582
    %v593 = vadd.f32 %v490, %v587
    %v594 = vmul.f32 %v475, %v380
    %v595 = vmul.f32 %v480, %v381
    %v596 = vmul.f32 %v485, %v382
    %v597 = vmul.f32 %v490, %v383
    %v598 = vsel %vm164, %v594, 0.0
    %599 = vadd.xlane.f32.xlu0 %v598
    %v600 = vpop.xlane.xlu0 %599
    %v601 = vsel %vm164, %v595, 0.0
    %602 = vadd.xlane.f32.xlu0 %v601
    %v603 = vpop.xlane.xlu0 %602
    %v604 = vsel %vm164, %v596, 0.0
    %605 = vadd.xlane.f32.xlu0 %v604
    %v606 = vpop.xlane.xlu0 %605
    %v607 = vsel %vm164, %v597, 0.0
    %608 = vadd.xlane.f32.xlu0 %v607
    %v609 = vpop.xlane.xlu0 %608
    %v610 = vadd.f32 %v598, %v601
    %v611 = vadd.f32 %v610, %v604
    %v612 = vadd.f32 %v611, %v607
    %v613 = vrot.slane %v612, 4
    %v614 = vadd.f32 %v612, %v613
    %v615 = vrot.slane %v614, 2
    %v616 = vadd.f32 %v614, %v615
    %v617 = vrot.slane %v616, 1
    %v618 = vadd.f32 %v616, %v617
    %v619 = vadd.f32 %v600, %v618
    %v620 = vadd.f32 %v603, %v618
    %v621 = vadd.f32 %v606, %v618
    %v622 = vadd.f32 %v609, %v618
    %v623 = vmul.f32 %v475, 2.0
    %v624 = vmul.f32 %v480, 2.0
    %v625 = vmul.f32 %v485, 2.0
    %v626 = vmul.f32 %v490, 2.0
    %v627 = vsub.f32 %v619, %v623
    %v628 = vsub.f32 %v620, %v624
    %v629 = vsub.f32 %v621, %v625
    %v630 = vsub.f32 %v622, %v626
    %v631 = vmax.f32 %v627, 0.0
    %v632 = vmax.f32 %v628, 0.0
    %v633 = vmax.f32 %v629, 0.0
    %v634 = vmax.f32 %v630, 0.0
    %v635 = vadd.f32 %v631, 1e-08
    %v636 = vadd.f32 %v632, 1e-08
    %v637 = vadd.f32 %v633, 1e-08
    %v638 = vadd.f32 %v634, 1e-08
    %v639 = vrsqrt.pop %v635
    %v640 = vmul.f32 %v635, %v639
    %vm641 = vcmp.eq.f32.partialorder %v635, inf
    %v642 = vsel %vm641, %v635, %v640
    %vm643 = vcmp.eq.f32.partialorder %v635, 0.0
    %v644 = vand.u32 %v635, 2147483648
    %v645 = vsel %vm643, %v644, %v642
    %v646 = vrsqrt.pop %v636
    %v647 = vmul.f32 %v636, %v646
    %vm648 = vcmp.eq.f32.partialorder %v636, inf
    %v649 = vsel %vm648, %v636, %v647
    %vm650 = vcmp.eq.f32.partialorder %v636, 0.0
    %v651 = vand.u32 %v636, 2147483648
    %v652 = vsel %vm650, %v651, %v649
    %v653 = vrsqrt.pop %v637
    %v654 = vmul.f32 %v637, %v653
    %vm655 = vcmp.eq.f32.partialorder %v637, inf
    %v656 = vsel %vm655, %v637, %v654
    %vm657 = vcmp.eq.f32.partialorder %v637, 0.0
    %v658 = vand.u32 %v637, 2147483648
    %v659 = vsel %vm657, %v658, %v656
    %v660 = vrsqrt.pop %v638
    %v661 = vmul.f32 %v638, %v660
    %vm662 = vcmp.eq.f32.partialorder %v638, inf
    %v663 = vsel %vm662, %v638, %v661
    %vm664 = vcmp.eq.f32.partialorder %v638, 0.0
    %v665 = vand.u32 %v638, 2147483648
    %v666 = vsel %vm664, %v665, %v663
    %v667 = vmul.f32 %v590, %v380
    %v668 = vmul.f32 %v591, %v381
    %v669 = vmul.f32 %v592, %v382
    %v670 = vmul.f32 %v593, %v383
    %v671 = vsel %vm164, %v667, 0.0
    %672 = vadd.xlane.f32.xlu0 %v671
    %v673 = vpop.xlane.xlu0 %672
    %v674 = vsel %vm164, %v668, 0.0
    %675 = vadd.xlane.f32.xlu0 %v674
    %v676 = vpop.xlane.xlu0 %675
    %v677 = vsel %vm164, %v669, 0.0
    %678 = vadd.xlane.f32.xlu0 %v677
    %v679 = vpop.xlane.xlu0 %678
    %v680 = vsel %vm164, %v670, 0.0
    %681 = vadd.xlane.f32.xlu0 %v680
    %v682 = vpop.xlane.xlu0 %681
    %v683 = vadd.f32 %v671, %v674
    %v684 = vadd.f32 %v683, %v677
    %v685 = vadd.f32 %v684, %v680
    %v686 = vrot.slane %v685, 4
    %v687 = vadd.f32 %v685, %v686
    %v688 = vrot.slane %v687, 2
    %v689 = vadd.f32 %v687, %v688
    %v690 = vrot.slane %v689, 1
    %v691 = vadd.f32 %v689, %v690
    %v692 = vadd.f32 %v673, %v691
    %v693 = vadd.f32 %v676, %v691
    %v694 = vadd.f32 %v679, %v691
    %v695 = vadd.f32 %v682, %v691
    %v696 = vmul.f32 %v590, 2.0
    %v697 = vmul.f32 %v591, 2.0
    %v698 = vmul.f32 %v592, 2.0
    %v699 = vmul.f32 %v593, 2.0
    %v700 = vsub.f32 %v692, %v696
    %v701 = vsub.f32 %v693, %v697
    %v702 = vsub.f32 %v694, %v698
    %v703 = vsub.f32 %v695, %v699
    %v704 = vmax.f32 %v700, 0.0
    %v705 = vmax.f32 %v701, 0.0
    %v706 = vmax.f32 %v702, 0.0
    %v707 = vmax.f32 %v703, 0.0
    %v708 = vadd.f32 %v704, 1e-08
    %v709 = vadd.f32 %v705, 1e-08
    %v710 = vadd.f32 %v706, 1e-08
    %v711 = vadd.f32 %v707, 1e-08
    %v712 = vrsqrt.pop %v708
    %v713 = vmul.f32 %v708, %v712
    %vm714 = vcmp.eq.f32.partialorder %v708, inf
    %v715 = vsel %vm714, %v708, %v713
    %vm716 = vcmp.eq.f32.partialorder %v708, 0.0
    %v717 = vand.u32 %v708, 2147483648
    %v718 = vsel %vm716, %v717, %v715
    %v719 = vrsqrt.pop %v709
    %v720 = vmul.f32 %v709, %v719
    %vm721 = vcmp.eq.f32.partialorder %v709, inf
    %v722 = vsel %vm721, %v709, %v720
    %vm723 = vcmp.eq.f32.partialorder %v709, 0.0
    %v724 = vand.u32 %v709, 2147483648
    %v725 = vsel %vm723, %v724, %v722
    %v726 = vrsqrt.pop %v710
    %v727 = vmul.f32 %v710, %v726
    %vm728 = vcmp.eq.f32.partialorder %v710, inf
    %v729 = vsel %vm728, %v710, %v727
    %vm730 = vcmp.eq.f32.partialorder %v710, 0.0
    %v731 = vand.u32 %v710, 2147483648
    %v732 = vsel %vm730, %v731, %v729
    %v733 = vrsqrt.pop %v711
    %v734 = vmul.f32 %v711, %v733
    %vm735 = vcmp.eq.f32.partialorder %v711, inf
    %v736 = vsel %vm735, %v711, %v734
    %vm737 = vcmp.eq.f32.partialorder %v711, 0.0
    %v738 = vand.u32 %v711, 2147483648
    %v739 = vsel %vm737, %v738, %v736
    %s740 = sld [smem:[#allocation2]]
    %s741 = sld [smem:[#allocation2 + $0x1]]
    %v742 = vstv %s741
    %v743 = vmul.f32 %v742, %v645
    %v744 = vmul.f32 %v742, %v652
    %v745 = vmul.f32 %v742, %v659
    %v746 = vmul.f32 %v742, %v666
    %v747 = vadd.f32 %v718, %v743
    %v748 = vadd.f32 %v725, %v744
    %v749 = vadd.f32 %v732, %v745
    %v750 = vadd.f32 %v739, %v746
    %v751 = vstv %s740
    %v752 = vmul.f32 %v751, %v747
    %v753 = vmul.f32 %v751, %v748
    %v754 = vmul.f32 %v751, %v749
    %v755 = vmul.f32 %v751, %v750
    %v756 = vld [vmem:[%s2] sm:$0xff]
    %v757 = vld [vmem:[%s2 + $0x8] sm:$0xff]
    %v758 = vld [vmem:[%s2 + $0x10] sm:$0xff]
    %v759 = vld [vmem:[%s2 + $0x18] sm:$0xff]
    %760 = vset.pattern.permute.xlu0 1
    %761 = vperm.xlu0 %760, %v756
    %v762 = vpop.permute.xlu0 %761
    %763 = vset.pattern.permute.xlu0 1
    %764 = vperm.xlu0 %763, %v757
    %v765 = vpop.permute.xlu0 %764
    %766 = vset.pattern.permute.xlu0 1
    %767 = vperm.xlu0 %766, %v758
    %v768 = vpop.permute.xlu0 %767
    %769 = vset.pattern.permute.xlu0 1
    %770 = vperm.xlu0 %769, %v759
    %v771 = vpop.permute.xlu0 %770
    %vm772 = vcmp.eq.s32.totalorder %v371, %v762
    %vm773 = vcmp.eq.s32.totalorder %v371, %v765
    %vm774 = vcmp.eq.s32.totalorder %v371, %v768
    %vm775 = vcmp.eq.s32.totalorder %v371, %v771
    %v776 = vsel %vm772, 1, 0
    %v777 = vsel %vm773, 1, 0
    %v778 = vsel %vm774, 1, 0
    %v779 = vsel %vm775, 1, 0
    %v780 = vcvt.s32.f32 %v776
    %v781 = vcvt.s32.f32 %v777
    %v782 = vcvt.s32.f32 %v778
    %v783 = vcvt.s32.f32 %v779
    %v784 = vmul.f32 %v752, %v780
    %v785 = vmul.f32 %v753, %v781
    %v786 = vmul.f32 %v754, %v782
    %v787 = vmul.f32 %v755, %v783
    %v788 = vsel %vm164, %v784, 0.0
    %789 = vadd.xlane.f32.xlu0 %v788
    %v790 = vpop.xlane.xlu0 %789
    %v791 = vsel %vm164, %v785, 0.0
    %792 = vadd.xlane.f32.xlu0 %v791
    %v793 = vpop.xlane.xlu0 %792
    %v794 = vsel %vm164, %v786, 0.0
    %795 = vadd.xlane.f32.xlu0 %v794
    %v796 = vpop.xlane.xlu0 %795
    %v797 = vsel %vm164, %v787, 0.0
    %798 = vadd.xlane.f32.xlu0 %v797
    %v799 = vpop.xlane.xlu0 %798
    %800 = vset.pattern.permute.xlu0 2
    %801 = vperm.xlu0 %800, %v756
    %v802 = vpop.permute.xlu0 %801
    %803 = vset.pattern.permute.xlu0 2
    %804 = vperm.xlu0 %803, %v757
    %v805 = vpop.permute.xlu0 %804
    %806 = vset.pattern.permute.xlu0 2
    %807 = vperm.xlu0 %806, %v758
    %v808 = vpop.permute.xlu0 %807
    %809 = vset.pattern.permute.xlu0 2
    %810 = vperm.xlu0 %809, %v759
    %v811 = vpop.permute.xlu0 %810
    %vm812 = vcmp.eq.s32.totalorder %v371, %v802
    %vm813 = vcmp.eq.s32.totalorder %v371, %v805
    %vm814 = vcmp.eq.s32.totalorder %v371, %v808
    %vm815 = vcmp.eq.s32.totalorder %v371, %v811
    %v816 = vsel %vm812, 1, 0
    %v817 = vsel %vm813, 1, 0
    %v818 = vsel %vm814, 1, 0
    %v819 = vsel %vm815, 1, 0
    %v820 = vcvt.s32.f32 %v816
    %v821 = vcvt.s32.f32 %v817
    %v822 = vcvt.s32.f32 %v818
    %v823 = vcvt.s32.f32 %v819
    %v824 = vmul.f32 %v752, %v820
    %v825 = vmul.f32 %v753, %v821
    %v826 = vmul.f32 %v754, %v822
    %v827 = vmul.f32 %v755, %v823
    %v828 = vsel %vm164, %v824, 0.0
    %829 = vadd.xlane.f32.xlu0 %v828
    %v830 = vpop.xlane.xlu0 %829
    %v831 = vsel %vm164, %v825, 0.0
    %832 = vadd.xlane.f32.xlu0 %v831
    %v833 = vpop.xlane.xlu0 %832
    %v834 = vsel %vm164, %v826, 0.0
    %835 = vadd.xlane.f32.xlu0 %v834
    %v836 = vpop.xlane.xlu0 %835
    %v837 = vsel %vm164, %v827, 0.0
    %838 = vadd.xlane.f32.xlu0 %v837
    %v839 = vpop.xlane.xlu0 %838
    %840 = vset.pattern.permute.xlu0 3
    %841 = vperm.xlu0 %840, %v756
    %v842 = vpop.permute.xlu0 %841
    %843 = vset.pattern.permute.xlu0 3
    %844 = vperm.xlu0 %843, %v757
    %v845 = vpop.permute.xlu0 %844
    %846 = vset.pattern.permute.xlu0 3
    %847 = vperm.xlu0 %846, %v758
    %v848 = vpop.permute.xlu0 %847
    %849 = vset.pattern.permute.xlu0 3
    %850 = vperm.xlu0 %849, %v759
    %v851 = vpop.permute.xlu0 %850
    %vm852 = vcmp.eq.s32.totalorder %v371, %v842
    %vm853 = vcmp.eq.s32.totalorder %v371, %v845
    %vm854 = vcmp.eq.s32.totalorder %v371, %v848
    %vm855 = vcmp.eq.s32.totalorder %v371, %v851
    %v856 = vsel %vm852, 1, 0
    %v857 = vsel %vm853, 1, 0
    %v858 = vsel %vm854, 1, 0
    %v859 = vsel %vm855, 1, 0
    %v860 = vcvt.s32.f32 %v856
    %v861 = vcvt.s32.f32 %v857
    %v862 = vcvt.s32.f32 %v858
    %v863 = vcvt.s32.f32 %v859
    %v864 = vmul.f32 %v752, %v860
    %v865 = vmul.f32 %v753, %v861
    %v866 = vmul.f32 %v754, %v862
    %v867 = vmul.f32 %v755, %v863
    %v868 = vsel %vm164, %v864, 0.0
    %869 = vadd.xlane.f32.xlu0 %v868
    %v870 = vpop.xlane.xlu0 %869
    %v871 = vsel %vm164, %v865, 0.0
    %872 = vadd.xlane.f32.xlu0 %v871
    %v873 = vpop.xlane.xlu0 %872
    %v874 = vsel %vm164, %v866, 0.0
    %875 = vadd.xlane.f32.xlu0 %v874
    %v876 = vpop.xlane.xlu0 %875
    %v877 = vsel %vm164, %v867, 0.0
    %878 = vadd.xlane.f32.xlu0 %v877
    %v879 = vpop.xlane.xlu0 %878
    %880 = vset.pattern.permute.xlu0 4
    %881 = vperm.xlu0 %880, %v756
    %v882 = vpop.permute.xlu0 %881
    %883 = vset.pattern.permute.xlu0 4
    %884 = vperm.xlu0 %883, %v757
    %v885 = vpop.permute.xlu0 %884
    %886 = vset.pattern.permute.xlu0 4
    %887 = vperm.xlu0 %886, %v758
    %v888 = vpop.permute.xlu0 %887
    %889 = vset.pattern.permute.xlu0 4
    %890 = vperm.xlu0 %889, %v759
    %v891 = vpop.permute.xlu0 %890
    %vm892 = vcmp.eq.s32.totalorder %v371, %v882
    %vm893 = vcmp.eq.s32.totalorder %v371, %v885
    %vm894 = vcmp.eq.s32.totalorder %v371, %v888
    %vm895 = vcmp.eq.s32.totalorder %v371, %v891
    %v896 = vsel %vm892, 1, 0
    %v897 = vsel %vm893, 1, 0
    %v898 = vsel %vm894, 1, 0
    %v899 = vsel %vm895, 1, 0
    %v900 = vcvt.s32.f32 %v896
    %v901 = vcvt.s32.f32 %v897
    %v902 = vcvt.s32.f32 %v898
    %v903 = vcvt.s32.f32 %v899
    %v904 = vmul.f32 %v752, %v900
    %v905 = vmul.f32 %v753, %v901
    %v906 = vmul.f32 %v754, %v902
    %v907 = vmul.f32 %v755, %v903
    %v908 = vsel %vm164, %v904, 0.0
    %909 = vadd.xlane.f32.xlu0 %v908
    %v910 = vpop.xlane.xlu0 %909
    %v911 = vsel %vm164, %v905, 0.0
    %912 = vadd.xlane.f32.xlu0 %v911
    %v913 = vpop.xlane.xlu0 %912
    %v914 = vsel %vm164, %v906, 0.0
    %915 = vadd.xlane.f32.xlu0 %v914
    %v916 = vpop.xlane.xlu0 %915
    %v917 = vsel %vm164, %v907, 0.0
    %918 = vadd.xlane.f32.xlu0 %v917
    %v919 = vpop.xlane.xlu0 %918
    %v920 = vmax.f32 %v790, %v830
    %v921 = vmax.f32 %v793, %v833
    %v922 = vmax.f32 %v796, %v836
    %v923 = vmax.f32 %v799, %v839
    %v924 = vmin.f32 %v790, %v830
    %v925 = vmin.f32 %v793, %v833
    %v926 = vmin.f32 %v796, %v836
    %v927 = vmin.f32 %v799, %v839
    %v928 = vmax.f32 %v870, %v910
    %v929 = vmax.f32 %v873, %v913
    %v930 = vmax.f32 %v876, %v916
    %v931 = vmax.f32 %v879, %v919
    %v932 = vmin.f32 %v870, %v910
    %v933 = vmin.f32 %v873, %v913
    %v934 = vmin.f32 %v876, %v916
    %v935 = vmin.f32 %v879, %v919
    %v936 = vmax.f32 %v924, %v928
    %v937 = vmax.f32 %v925, %v929
    %v938 = vmax.f32 %v926, %v930
    %v939 = vmax.f32 %v927, %v931
    %v940 = vmin.f32 %v924, %v928
    %v941 = vmin.f32 %v925, %v929
    %v942 = vmin.f32 %v926, %v930
    %v943 = vmin.f32 %v927, %v931
    %v944 = vmax.f32 %v920, %v936
    %v945 = vmax.f32 %v921, %v937
    %v946 = vmax.f32 %v922, %v938
    %v947 = vmax.f32 %v923, %v939
    %v948 = vmin.f32 %v920, %v936
    %v949 = vmin.f32 %v921, %v937
    %v950 = vmin.f32 %v922, %v938
    %v951 = vmin.f32 %v923, %v939
    %v952 = vmax.f32 %v940, %v932
    %v953 = vmax.f32 %v941, %v933
    %v954 = vmax.f32 %v942, %v934
    %v955 = vmax.f32 %v943, %v935
    %v956 = vmin.f32 %v940, %v932
    %v957 = vmin.f32 %v941, %v933
    %v958 = vmin.f32 %v942, %v934
    %v959 = vmin.f32 %v943, %v935
    %v960 = vmax.f32 %v948, %v952
    %v961 = vmax.f32 %v949, %v953
    %v962 = vmax.f32 %v950, %v954
    %v963 = vmax.f32 %v951, %v955
    %v964 = vmin.f32 %v948, %v952
    %v965 = vmin.f32 %v949, %v953
    %v966 = vmin.f32 %v950, %v954
    %v967 = vmin.f32 %v951, %v955
    %v968 = vadd.f32 %v944, 0.0
    %v969 = vadd.f32 %v945, 0.0
    %v970 = vadd.f32 %v946, 0.0
    %v971 = vadd.f32 %v947, 0.0
    %v972 = vsub.f32 %v968, 1.0
    %v973 = vsub.f32 %v969, 1.0
    %v974 = vsub.f32 %v970, 1.0
    %v975 = vsub.f32 %v971, 1.0
    %v976 = vadd.f32 %v968, %v960
    %v977 = vadd.f32 %v969, %v961
    %v978 = vadd.f32 %v970, %v962
    %v979 = vadd.f32 %v971, %v963
    %v980 = vsub.f32 %v976, 1.0
    %v981 = vsub.f32 %v977, 1.0
    %v982 = vsub.f32 %v978, 1.0
    %v983 = vsub.f32 %v979, 1.0
    %v984 = vadd.f32 %v976, %v964
    %v985 = vadd.f32 %v977, %v965
    %v986 = vadd.f32 %v978, %v966
    %v987 = vadd.f32 %v979, %v967
    %v988 = vsub.f32 %v984, 1.0
    %v989 = vsub.f32 %v985, 1.0
    %v990 = vsub.f32 %v986, 1.0
    %v991 = vsub.f32 %v987, 1.0
    %v992 = vadd.f32 %v984, %v956
    %v993 = vadd.f32 %v985, %v957
    %v994 = vadd.f32 %v986, %v958
    %v995 = vadd.f32 %v987, %v959
    %v996 = vsub.f32 %v992, 1.0
    %v997 = vsub.f32 %v993, 1.0
    %v998 = vsub.f32 %v994, 1.0
    %v999 = vsub.f32 %v995, 1.0
    %v1000 = vsub.f32 %v944, %v972
    %v1001 = vsub.f32 %v945, %v973
    %v1002 = vsub.f32 %v946, %v974
    %v1003 = vsub.f32 %v947, %v975
    %vm1004 = vcmp.gt.f32.partialorder %v1000, 0.0
    %vm1005 = vcmp.gt.f32.partialorder %v1001, 0.0
    %vm1006 = vcmp.gt.f32.partialorder %v1002, 0.0
    %vm1007 = vcmp.gt.f32.partialorder %v1003, 0.0
    %v1008 = vsel %vm1004, 1, 0
    %v1009 = vsel %vm1005, 1, 0
    %v1010 = vsel %vm1006, 1, 0
    %v1011 = vsel %vm1007, 1, 0
    %v1012 = vcvt.s32.f32 %v1008
    %v1013 = vcvt.s32.f32 %v1009
    %v1014 = vcvt.s32.f32 %v1010
    %v1015 = vcvt.s32.f32 %v1011
    %v1016 = vrcp.pop 2.0
    %v1017 = vmul.f32 %v980, %v1016
    %v1018 = vmul.f32 %v981, %v1016
    %v1019 = vmul.f32 %v982, %v1016
    %v1020 = vmul.f32 %v983, %v1016
    %v1021 = vsub.f32 %v960, %v1017
    %v1022 = vsub.f32 %v961, %v1018
    %v1023 = vsub.f32 %v962, %v1019
    %v1024 = vsub.f32 %v963, %v1020
    %vm1025 = vcmp.gt.f32.partialorder %v1021, 0.0
    %vm1026 = vcmp.gt.f32.partialorder %v1022, 0.0
    %vm1027 = vcmp.gt.f32.partialorder %v1023, 0.0
    %vm1028 = vcmp.gt.f32.partialorder %v1024, 0.0
    %v1029 = vsel %vm1025, 1, 0
    %v1030 = vsel %vm1026, 1, 0
    %v1031 = vsel %vm1027, 1, 0
    %v1032 = vsel %vm1028, 1, 0
    %v1033 = vcvt.s32.f32 %v1029
    %v1034 = vcvt.s32.f32 %v1030
    %v1035 = vcvt.s32.f32 %v1031
    %v1036 = vcvt.s32.f32 %v1032
    %v1037 = vrcp.pop 3.0
    %v1038 = vmul.f32 %v988, %v1037
    %v1039 = vmul.f32 %v989, %v1037
    %v1040 = vmul.f32 %v990, %v1037
    %v1041 = vmul.f32 %v991, %v1037
    %v1042 = vsub.f32 %v964, %v1038
    %v1043 = vsub.f32 %v965, %v1039
    %v1044 = vsub.f32 %v966, %v1040
    %v1045 = vsub.f32 %v967, %v1041
    %vm1046 = vcmp.gt.f32.partialorder %v1042, 0.0
    %vm1047 = vcmp.gt.f32.partialorder %v1043, 0.0
    %vm1048 = vcmp.gt.f32.partialorder %v1044, 0.0
    %vm1049 = vcmp.gt.f32.partialorder %v1045, 0.0
    %v1050 = vsel %vm1046, 1, 0
    %v1051 = vsel %vm1047, 1, 0
    %v1052 = vsel %vm1048, 1, 0
    %v1053 = vsel %vm1049, 1, 0
    %v1054 = vcvt.s32.f32 %v1050
    %v1055 = vcvt.s32.f32 %v1051
    %v1056 = vcvt.s32.f32 %v1052
    %v1057 = vcvt.s32.f32 %v1053
    %v1058 = vrcp.pop 4.0
    %v1059 = vmul.f32 %v996, %v1058
    %v1060 = vmul.f32 %v997, %v1058
    %v1061 = vmul.f32 %v998, %v1058
    %v1062 = vmul.f32 %v999, %v1058
    %v1063 = vsub.f32 %v956, %v1059
    %v1064 = vsub.f32 %v957, %v1060
    %v1065 = vsub.f32 %v958, %v1061
    %v1066 = vsub.f32 %v959, %v1062
    %vm1067 = vcmp.gt.f32.partialorder %v1063, 0.0
    %vm1068 = vcmp.gt.f32.partialorder %v1064, 0.0
    %vm1069 = vcmp.gt.f32.partialorder %v1065, 0.0
    %vm1070 = vcmp.gt.f32.partialorder %v1066, 0.0
    %v1071 = vsel %vm1067, 1, 0
    %v1072 = vsel %vm1068, 1, 0
    %v1073 = vsel %vm1069, 1, 0
    %v1074 = vsel %vm1070, 1, 0
    %v1075 = vcvt.s32.f32 %v1071
    %v1076 = vcvt.s32.f32 %v1072
    %v1077 = vcvt.s32.f32 %v1073
    %v1078 = vcvt.s32.f32 %v1074
    %v1079 = vadd.f32 %v1012, %v1033
    %v1080 = vadd.f32 %v1013, %v1034
    %v1081 = vadd.f32 %v1014, %v1035
    %v1082 = vadd.f32 %v1015, %v1036
    %v1083 = vadd.f32 %v1079, %v1054
    %v1084 = vadd.f32 %v1080, %v1055
    %v1085 = vadd.f32 %v1081, %v1056
    %v1086 = vadd.f32 %v1082, %v1057
    %v1087 = vadd.f32 %v1083, %v1075
    %v1088 = vadd.f32 %v1084, %v1076
    %v1089 = vadd.f32 %v1085, %v1077
    %v1090 = vadd.f32 %v1086, %v1078
    %vm1091 = vcmp.eq.f32.partialorder %v1087, 1.0
    %vm1092 = vcmp.eq.f32.partialorder %v1088, 1.0
    %vm1093 = vcmp.eq.f32.partialorder %v1089, 1.0
    %vm1094 = vcmp.eq.f32.partialorder %v1090, 1.0
    %v1095 = vsel %vm1091, %v972, 0.0
    %v1096 = vsel %vm1092, %v973, 0.0
    %v1097 = vsel %vm1093, %v974, 0.0
    %v1098 = vsel %vm1094, %v975, 0.0
    %v1099 = vadd.f32 %v1095, 0.0
    %v1100 = vadd.f32 %v1096, 0.0
    %v1101 = vadd.f32 %v1097, 0.0
    %v1102 = vadd.f32 %v1098, 0.0
    %vm1103 = vcmp.eq.f32.partialorder %v1087, 2.0
    %vm1104 = vcmp.eq.f32.partialorder %v1088, 2.0
    %vm1105 = vcmp.eq.f32.partialorder %v1089, 2.0
    %vm1106 = vcmp.eq.f32.partialorder %v1090, 2.0
    %v1107 = vsel %vm1103, %v980, 0.0
    %v1108 = vsel %vm1104, %v981, 0.0
    %v1109 = vsel %vm1105, %v982, 0.0
    %v1110 = vsel %vm1106, %v983, 0.0
    %v1111 = vadd.f32 %v1099, %v1107
    %v1112 = vadd.f32 %v1100, %v1108
    %v1113 = vadd.f32 %v1101, %v1109
    %v1114 = vadd.f32 %v1102, %v1110
    %vm1115 = vcmp.eq.f32.partialorder %v1087, 3.0
    %vm1116 = vcmp.eq.f32.partialorder %v1088, 3.0
    %vm1117 = vcmp.eq.f32.partialorder %v1089, 3.0
    %vm1118 = vcmp.eq.f32.partialorder %v1090, 3.0
    %v1119 = vsel %vm1115, %v988, 0.0
    %v1120 = vsel %vm1116, %v989, 0.0
    %v1121 = vsel %vm1117, %v990, 0.0
    %v1122 = vsel %vm1118, %v991, 0.0
    %v1123 = vadd.f32 %v1111, %v1119
    %v1124 = vadd.f32 %v1112, %v1120
    %v1125 = vadd.f32 %v1113, %v1121
    %v1126 = vadd.f32 %v1114, %v1122
    %vm1127 = vcmp.eq.f32.partialorder %v1087, 4.0
    %vm1128 = vcmp.eq.f32.partialorder %v1088, 4.0
    %vm1129 = vcmp.eq.f32.partialorder %v1089, 4.0
    %vm1130 = vcmp.eq.f32.partialorder %v1090, 4.0
    %v1131 = vsel %vm1127, %v996, 0.0
    %v1132 = vsel %vm1128, %v997, 0.0
    %v1133 = vsel %vm1129, %v998, 0.0
    %v1134 = vsel %vm1130, %v999, 0.0
    %v1135 = vadd.f32 %v1123, %v1131
    %v1136 = vadd.f32 %v1124, %v1132
    %v1137 = vadd.f32 %v1125, %v1133
    %v1138 = vadd.f32 %v1126, %v1134
    %v1139 = vrcp.pop %v1087
    %v1140 = vmul.f32 %v1135, %v1139
    %v1141 = vrcp.pop %v1088
    %v1142 = vmul.f32 %v1136, %v1141
    %v1143 = vrcp.pop %v1089
    %v1144 = vmul.f32 %v1137, %v1143
    %v1145 = vrcp.pop %v1090
    %v1146 = vmul.f32 %v1138, %v1145
    %v1147 = vsub.f32 %v790, %v1140
    %v1148 = vsub.f32 %v793, %v1142
    %v1149 = vsub.f32 %v796, %v1144
    %v1150 = vsub.f32 %v799, %v1146
    %v1151 = vmax.f32 %v1147, 0.0
    %v1152 = vmax.f32 %v1148, 0.0
    %v1153 = vmax.f32 %v1149, 0.0
    %v1154 = vmax.f32 %v1150, 0.0
    %v1155 = vmul.f32 %v1151, %v780
    %v1156 = vmul.f32 %v1152, %v781
    %v1157 = vmul.f32 %v1153, %v782
    %v1158 = vmul.f32 %v1154, %v783
    %v1159 = vadd.f32 %v1155, 0.0
    %v1160 = vadd.f32 %v1156, 0.0
    %v1161 = vadd.f32 %v1157, 0.0
    %v1162 = vadd.f32 %v1158, 0.0
    %v1163 = vsub.f32 %v830, %v1140
    %v1164 = vsub.f32 %v833, %v1142
    %v1165 = vsub.f32 %v836, %v1144
    %v1166 = vsub.f32 %v839, %v1146
    %v1167 = vmax.f32 %v1163, 0.0
    %v1168 = vmax.f32 %v1164, 0.0
    %v1169 = vmax.f32 %v1165, 0.0
    %v1170 = vmax.f32 %v1166, 0.0
    %v1171 = vmul.f32 %v1167, %v820
    %v1172 = vmul.f32 %v1168, %v821
    %v1173 = vmul.f32 %v1169, %v822
    %v1174 = vmul.f32 %v1170, %v823
    %v1175 = vadd.f32 %v1159, %v1171
    %v1176 = vadd.f32 %v1160, %v1172
    %v1177 = vadd.f32 %v1161, %v1173
    %v1178 = vadd.f32 %v1162, %v1174
    %v1179 = vsub.f32 %v870, %v1140
    %v1180 = vsub.f32 %v873, %v1142
    %v1181 = vsub.f32 %v876, %v1144
    %v1182 = vsub.f32 %v879, %v1146
    %v1183 = vmax.f32 %v1179, 0.0
    %v1184 = vmax.f32 %v1180, 0.0
    %v1185 = vmax.f32 %v1181, 0.0
    %v1186 = vmax.f32 %v1182, 0.0
    %v1187 = vmul.f32 %v1183, %v860
    %v1188 = vmul.f32 %v1184, %v861
    %v1189 = vmul.f32 %v1185, %v862
    %v1190 = vmul.f32 %v1186, %v863
    %v1191 = vadd.f32 %v1175, %v1187
    %v1192 = vadd.f32 %v1176, %v1188
    %v1193 = vadd.f32 %v1177, %v1189
    %v1194 = vadd.f32 %v1178, %v1190
    %v1195 = vsub.f32 %v910, %v1140
    %v1196 = vsub.f32 %v913, %v1142
    %v1197 = vsub.f32 %v916, %v1144
    %v1198 = vsub.f32 %v919, %v1146
    %v1199 = vmax.f32 %v1195, 0.0
    %v1200 = vmax.f32 %v1196, 0.0
    %v1201 = vmax.f32 %v1197, 0.0
    %v1202 = vmax.f32 %v1198, 0.0
    %v1203 = vmul.f32 %v1199, %v900
    %v1204 = vmul.f32 %v1200, %v901
    %v1205 = vmul.f32 %v1201, %v902
    %v1206 = vmul.f32 %v1202, %v903
    %v1207 = vadd.f32 %v1191, %v1203
    %v1208 = vadd.f32 %v1192, %v1204
    %v1209 = vadd.f32 %v1193, %v1205
    %v1210 = vadd.f32 %v1194, %v1206
    %v1211 = vmul.f32 %v262, %v386
    %v1212 = vmul.f32 %v263, %v386
    %v1213 = vmul.f32 %v264, %v386
    %v1214 = vmul.f32 %v265, %v386
    %v1216 = vsel %vm164, %v1207, 0
    %v1219 = vsel %vm164, %v1208, 0
    %v1222 = vsel %vm164, %v1209, 0
    %v1225 = vsel %vm164, %v1210, 0
    %1227 = vmatprep.subr.mxu0 0.0
    %1228 = vmatpush1.msra.mxu0 %v1211
    %1229 = vmatprep.subr.mxu0 0.0
    %1230 = vmatpush1.msra.mxu0 %v1212
    %1231 = vmatprep.subr.mxu0 0.0
    %1232 = vmatpush1.msra.mxu0 %v1213
    %1233 = vmatprep.subr.mxu0 0.0
    %1234 = vmatpush1.msra.mxu0 %v1214
    %1235 = vmatprep.subr.mxu0 0.0
    %1236 = vmatpush1.msra.mxu0 0.0
    %1237 = vmatprep.subr.mxu0 0.0
    %1238 = vmatpush1.msra.mxu0 0.0
    %1239 = vmatprep.subr.mxu0 0.0
    %1240 = vmatpush1.msra.mxu0 0.0
    %1241 = vmatprep.subr.mxu0 0.0
    %1242 = vmatpush1.msra.mxu0 0.0
    %1243 = vmatprep.subr.mxu0 0.0
    %1244 = vmatpush1.msra.mxu0 0.0
    %1245 = vmatprep.subr.mxu0 0.0
    %1246 = vmatpush1.msra.mxu0 0.0
    %1247 = vmatprep.subr.mxu0 0.0
    %1248 = vmatpush1.msra.mxu0 0.0
    %1249 = vmatprep.subr.mxu0 0.0
    %1250 = vmatpush1.msra.mxu0 0.0
    %1251 = vmatprep.subr.mxu0 0.0
    %1252 = vmatpush1.msra.mxu0 0.0
    %1253 = vmatprep.subr.mxu0 0.0
    %1254 = vmatpush1.msra.mxu0 0.0
    %1255 = vmatprep.subr.mxu0 0.0
    %1256 = vmatpush1.msra.mxu0 0.0
    %1257 = vmatprep.subr.mxu0 0.0
    %1258 = vmatpush1.msra.mxu0 0.0
    %1259 = vmatprep.subr.mxu0 0.0
    %1260 = vmatpush1.msra.mxu0 0.0
    %1261 = vmatprep.subr.mxu0 0.0
    %1262 = vmatpush1.msra.mxu0 0.0
    %1263 = vmatprep.subr.mxu0 0.0
    %1264 = vmatpush1.msra.mxu0 0.0
    %1265 = vmatprep.subr.mxu0 0.0
    %1266 = vmatpush1.msra.mxu0 0.0
    %1267 = vmatprep.subr.mxu0 0.0
    %1268 = vmatpush1.msra.mxu0 0.0
    %1269 = vmatprep.subr.mxu0 0.0
    %1270 = vmatpush1.msra.mxu0 0.0
    %1271 = vmatprep.subr.mxu0 0.0
    %1272 = vmatpush1.msra.mxu0 0.0
    %1273 = vmatprep.subr.mxu0 0.0
    %1274 = vmatpush1.msra.mxu0 0.0
    %1275 = vmatprep.subr.mxu0 0.0
    %1276 = vmatpush1.msra.mxu0 0.0
    %1277 = vmatprep.subr.mxu0 0.0
    %1278 = vmatpush1.msra.mxu0 0.0
    %1279 = vmatprep.subr.mxu0 0.0
    %1280 = vmatpush1.msra.mxu0 0.0
    %1281 = vmatprep.subr.mxu0 0.0
    %1282 = vmatpush1.msra.mxu0 0.0
    %1283 = vmatprep.subr.mxu0 0.0
    %1284 = vmatpush1.msra.mxu0 0.0
    %1285 = vmatprep.subr.mxu0 0.0
    %1286 = vmatpush1.msra.mxu0 0.0
    %1287 = vmatprep.subr.mxu0 0.0
    %1288 = vmatpush1.msra.mxu0 0.0
    %1289 = vmatprep.subr.mxu0 0.0
    %1290 = vmatpush1.msra.mxu0 0.0
    %1291 = vmatprep.mubr.f32.mxu0 0.0
    %1292 = vmatmul.mubr.f32.gmra.mrb[0].mxu0 %v1216
    %v1293 = vpop.f32.mrb[0].mxu0
    %v1294 = vadd.f32 0.0, %v1293
    %v1295 = vpop.f32.mrb[0].mxu0
    %1296 = vmatprep.mubr.f32.mxu0 0.0
    %1297 = vmatmul.mubr.f32.gmra.mrb[0].mxu0 %v1219
    %v1298 = vpop.f32.mrb[0].mxu0
    %v1299 = vadd.f32 0.0, %v1298
    %v1300 = vpop.f32.mrb[0].mxu0
    %1301 = vmatprep.mubr.f32.mxu0 0.0
    %1302 = vmatmul.mubr.f32.gmra.mrb[0].mxu0 %v1222
    %v1303 = vpop.f32.mrb[0].mxu0
    %v1304 = vadd.f32 0.0, %v1303
    %v1305 = vpop.f32.mrb[0].mxu0
    %1306 = vmatprep.mubr.f32.mxu0 0.0
    %1307 = vmatmul.mubr.f32.gmra.mrb[0].mxu0 %v1225
    %v1308 = vpop.f32.mrb[0].mxu0
    %v1309 = vadd.f32 0.0, %v1308
    %v1310 = vpop.f32.mrb[0].mxu0
    %1311 = vdwg.mxu0
    %v1312 = vld [vmem:[%s3] sm:$0xff]
    %v1313 = vld [vmem:[%s3 + $0x8] sm:$0xff]
    %v1314 = vld [vmem:[%s3 + $0x10] sm:$0xff]
    %v1315 = vld [vmem:[%s3 + $0x18] sm:$0xff]
    %v1316 = vadd.f32 %v1312, %v380
    %v1317 = vadd.f32 %v1313, %v381
    %v1318 = vadd.f32 %v1314, %v382
    %v1319 = vadd.f32 %v1315, %v383
    %v1320 = vsel %vm164, %v1316, 0.0
    %1321 = vadd.xlane.f32.xlu0 %v1320
    %v1322 = vpop.xlane.xlu0 %1321
    %v1323 = vsel %vm164, %v1317, 0.0
    %1324 = vadd.xlane.f32.xlu0 %v1323
    %v1325 = vpop.xlane.xlu0 %1324
    %v1326 = vsel %vm164, %v1318, 0.0
    %1327 = vadd.xlane.f32.xlu0 %v1326
    %v1328 = vpop.xlane.xlu0 %1327
    %v1329 = vsel %vm164, %v1319, 0.0
    %1330 = vadd.xlane.f32.xlu0 %v1329
    %v1331 = vpop.xlane.xlu0 %1330
    %v1332 = vrsqrt.pop %v1322
    %v1333 = vrsqrt.pop %v1325
    %v1334 = vrsqrt.pop %v1328
    %v1335 = vrsqrt.pop %v1331
    %v1336 = vmul.f32 %v1332, %v380
    %v1337 = vmul.f32 %v1333, %v381
    %v1338 = vmul.f32 %v1334, %v382
    %v1339 = vmul.f32 %v1335, %v383
    %v1340 = vsel %vm164, %v1336, 0.0
    %v1341 = vsel %vm164, %v1337, 0.0
    %v1342 = vadd.f32 %v1340, %v1341
    %v1343 = vsel %vm164, %v1338, 0.0
    %v1344 = vadd.f32 %v1342, %v1343
    %v1345 = vsel %vm164, %v1339, 0.0
    %v1346 = vadd.f32 %v1344, %v1345
    %v1347 = vrot.slane %v1346, 4
    %v1348 = vadd.f32 %v1346, %v1347
    %v1349 = vrot.slane %v1348, 2
    %v1350 = vadd.f32 %v1348, %v1349
    %v1351 = vrot.slane %v1350, 1
    %v1352 = vadd.f32 %v1350, %v1351
    %v1353 = vmul.f32 %v1316, %v1332
    %v1354 = vmul.f32 %v1317, %v1333
    %v1355 = vmul.f32 %v1318, %v1334
    %v1356 = vmul.f32 %v1319, %v1335
    %v1357 = vmul.f32 %v1353, %v1352
    %v1358 = vmul.f32 %v1354, %v1352
    %v1359 = vmul.f32 %v1355, %v1352
    %v1360 = vmul.f32 %v1356, %v1352
    %v1361 = vpack.c.bf16 %v1358, %v1357
    %v1362 = vpack.c.bf16 %v1360, %v1359
    %v1363 = vld [vmem:[%s4 + $0x50] sm:$0xff]
    %v1364 = vld [vmem:[%s4 + $0x58] sm:$0xff]
    %v1365 = vpack.c.bf16 %v1364, %v1363
    %v1366 = vld [vmem:[%s4 + $0x60] sm:$0x1]
    %v1367 = vpack.c.bf16 %v35, %v34
    %v1368 = vpack.c.bf16 %v37, %v36
    %v1369 = vlaneseq
    %v1370 = vshrl.u32 %v1369, 7
    %v1371 = vsub.s32 0, %v1370
    %v1372 = vrot.slane %v1366, %v1371
    %v1374 = vsel %vm45, %v1367, 0
    %v1377 = vsel %vm45, %v1368, 0
    %1379 = vmatprep.subr.bf16.mxu0 0
    %1380 = vmatpush1.bf16.msra.mxu0 %v1365
    %1381 = vmatprep.subr.bf16.mxu0 0
    %1382 = vmatpush1.bf16.msra.mxu0 0
    %1383 = vmatprep.subr.bf16.mxu0 0
    %1384 = vmatpush1.bf16.msra.mxu0 0
    %1385 = vmatprep.subr.bf16.mxu0 0
    %1386 = vmatpush1.bf16.msra.mxu0 0
    %1387 = vmatprep.subr.bf16.mxu0 0
    %1388 = vmatpush1.bf16.msra.mxu0 0
    %1389 = vmatprep.subr.bf16.mxu0 0
    %1390 = vmatpush1.bf16.msra.mxu0 0
    %1391 = vmatprep.subr.bf16.mxu0 0
    %1392 = vmatpush1.bf16.msra.mxu0 0
    %1393 = vmatprep.subr.bf16.mxu0 0
    %1394 = vmatpush1.bf16.msra.mxu0 0
    %1395 = vmatprep.subr.bf16.mxu0 0
    %1396 = vmatpush1.bf16.msra.mxu0 0
    %1397 = vmatprep.subr.bf16.mxu0 0
    %1398 = vmatpush1.bf16.msra.mxu0 0
    %1399 = vmatprep.subr.bf16.mxu0 0
    %1400 = vmatpush1.bf16.msra.mxu0 0
    %1401 = vmatprep.subr.bf16.mxu0 0
    %1402 = vmatpush1.bf16.msra.mxu0 0
    %1403 = vmatprep.subr.bf16.mxu0 0
    %1404 = vmatpush1.bf16.msra.mxu0 0
    %1405 = vmatprep.subr.bf16.mxu0 0
    %1406 = vmatpush1.bf16.msra.mxu0 0
    %1407 = vmatprep.subr.bf16.mxu0 0
    %1408 = vmatpush1.bf16.msra.mxu0 0
    %1409 = vmatprep.subr.bf16.mxu0 0
    %1410 = vmatpush1.bf16.msra.mxu0 0
    %1411 = vmatprep.mubr.bf16.mxu0 0
    %1412 = vmatmul.mubr.bf16.gmra.mrb[0].mxu0 %v1374
    %v1413 = vpop.f32.mrb[0].mxu0
    %v1414 = vadd.f32 %v1372, %v1413
    %v1415 = vpop.f32.mrb[0].mxu0
    %v1416 = vpop.f32.mrb[0].mxu0
    %v1417 = vadd.f32 %v1372, %v1416
    %v1418 = vpop.f32.mrb[0].mxu0
    %1419 = vmatprep.mubr.bf16.mxu0 0
    %1420 = vmatmul.mubr.bf16.gmra.mrb[0].mxu0 %v1377
    %v1421 = vpop.f32.mrb[0].mxu0
    %v1422 = vadd.f32 %v1372, %v1421
    %v1423 = vpop.f32.mrb[0].mxu0
    %v1424 = vpop.f32.mrb[0].mxu0
    %v1425 = vadd.f32 %v1372, %v1424
    %v1426 = vpop.f32.mrb[0].mxu0
    %1427 = vdwg.mxu0
    %v1428 = vpack.c.bf16 %v1417, %v1414
    %v1429 = vpack.c.bf16 %v1425, %v1422
    %v1431 = vsel %vm164, %v1361, 0
    %v1434 = vsel %vm164, %v1362, 0
    %1436 = vmatprep.subr.bf16.mxu0 0
    %1437 = vmatpush1.bf16.msra.mxu0 %v1428
    %1438 = vmatprep.subr.bf16.mxu0 0
    %1439 = vmatpush1.bf16.msra.mxu0 %v1429
    %1440 = vmatprep.subr.bf16.mxu0 0
    %1441 = vmatpush1.bf16.msra.mxu0 0
    %1442 = vmatprep.subr.bf16.mxu0 0
    %1443 = vmatpush1.bf16.msra.mxu0 0
    %1444 = vmatprep.subr.bf16.mxu0 0
    %1445 = vmatpush1.bf16.msra.mxu0 0
    %1446 = vmatprep.subr.bf16.mxu0 0
    %1447 = vmatpush1.bf16.msra.mxu0 0
    %1448 = vmatprep.subr.bf16.mxu0 0
    %1449 = vmatpush1.bf16.msra.mxu0 0
    %1450 = vmatprep.subr.bf16.mxu0 0
    %1451 = vmatpush1.bf16.msra.mxu0 0
    %1452 = vmatprep.subr.bf16.mxu0 0
    %1453 = vmatpush1.bf16.msra.mxu0 0
    %1454 = vmatprep.subr.bf16.mxu0 0
    %1455 = vmatpush1.bf16.msra.mxu0 0
    %1456 = vmatprep.subr.bf16.mxu0 0
    %1457 = vmatpush1.bf16.msra.mxu0 0
    %1458 = vmatprep.subr.bf16.mxu0 0
    %1459 = vmatpush1.bf16.msra.mxu0 0
    %1460 = vmatprep.subr.bf16.mxu0 0
    %1461 = vmatpush1.bf16.msra.mxu0 0
    %1462 = vmatprep.subr.bf16.mxu0 0
    %1463 = vmatpush1.bf16.msra.mxu0 0
    %1464 = vmatprep.subr.bf16.mxu0 0
    %1465 = vmatpush1.bf16.msra.mxu0 0
    %1466 = vmatprep.subr.bf16.mxu0 0
    %1467 = vmatpush1.bf16.msra.mxu0 0
    %1468 = vmatprep.mubr.bf16.mxu0 0
    %1469 = vmatmul.mubr.bf16.gmra.mrb[0].mxu0 %v1431
    %v1470 = vpop.f32.mrb[0].mxu0
    %v1471 = vadd.f32 0.0, %v1470
    %v1472 = vpop.f32.mrb[0].mxu0
    %v1473 = vpop.f32.mrb[0].mxu0
    %v1474 = vadd.f32 0.0, %v1473
    %v1475 = vpop.f32.mrb[0].mxu0
    %1476 = vmatprep.mubr.bf16.mxu0 0
    %1477 = vmatmul.mubr.bf16.gmra.mrb[0].mxu0 %v1434
    %v1478 = vpop.f32.mrb[0].mxu0
    %v1479 = vadd.f32 0.0, %v1478
    %v1480 = vpop.f32.mrb[0].mxu0
    %v1481 = vpop.f32.mrb[0].mxu0
    %v1482 = vadd.f32 0.0, %v1481
    %v1483 = vpop.f32.mrb[0].mxu0
    %1484 = vdwg.mxu0
    %v1485 = vmax.f32 %v1471, 0.0
    %v1486 = vmax.f32 %v1474, 0.0
    %v1487 = vmax.f32 %v1479, 0.0
    %v1488 = vmax.f32 %v1482, 0.0
    %v1489 = vld [vmem:[%s4 + $0x68] sm:$0xff]
    %v1490 = vld [vmem:[%s4 + $0x70] sm:$0xff]
    %v1491 = vpack.c.bf16 %v1490, %v1489
    %v1492 = vld [vmem:[%s4 + $0x78] sm:$0x1]
    %v1493 = vpack.c.bf16 %v1486, %v1485
    %v1494 = vpack.c.bf16 %v1488, %v1487
    %v1495 = vlaneseq
    %v1496 = vshrl.u32 %v1495, 7
    %v1497 = vsub.s32 0, %v1496
    %v1498 = vrot.slane %v1492, %v1497
    %v1500 = vsel %vm45, %v1493, 0
    %v1503 = vsel %vm45, %v1494, 0
    %1505 = vmatprep.subr.bf16.mxu0 0
    %1506 = vmatpush1.bf16.msra.mxu0 %v1491
    %1507 = vmatprep.subr.bf16.mxu0 0
    %1508 = vmatpush1.bf16.msra.mxu0 0
    %1509 = vmatprep.subr.bf16.mxu0 0
    %1510 = vmatpush1.bf16.msra.mxu0 0
    %1511 = vmatprep.subr.bf16.mxu0 0
    %1512 = vmatpush1.bf16.msra.mxu0 0
    %1513 = vmatprep.subr.bf16.mxu0 0
    %1514 = vmatpush1.bf16.msra.mxu0 0
    %1515 = vmatprep.subr.bf16.mxu0 0
    %1516 = vmatpush1.bf16.msra.mxu0 0
    %1517 = vmatprep.subr.bf16.mxu0 0
    %1518 = vmatpush1.bf16.msra.mxu0 0
    %1519 = vmatprep.subr.bf16.mxu0 0
    %1520 = vmatpush1.bf16.msra.mxu0 0
    %1521 = vmatprep.subr.bf16.mxu0 0
    %1522 = vmatpush1.bf16.msra.mxu0 0
    %1523 = vmatprep.subr.bf16.mxu0 0
    %1524 = vmatpush1.bf16.msra.mxu0 0
    %1525 = vmatprep.subr.bf16.mxu0 0
    %1526 = vmatpush1.bf16.msra.mxu0 0
    %1527 = vmatprep.subr.bf16.mxu0 0
    %1528 = vmatpush1.bf16.msra.mxu0 0
    %1529 = vmatprep.subr.bf16.mxu0 0
    %1530 = vmatpush1.bf16.msra.mxu0 0
    %1531 = vmatprep.subr.bf16.mxu0 0
    %1532 = vmatpush1.bf16.msra.mxu0 0
    %1533 = vmatprep.subr.bf16.mxu0 0
    %1534 = vmatpush1.bf16.msra.mxu0 0
    %1535 = vmatprep.subr.bf16.mxu0 0
    %1536 = vmatpush1.bf16.msra.mxu0 0
    %1537 = vmatprep.mubr.bf16.mxu0 0
    %1538 = vmatmul.mubr.bf16.gmra.mrb[0].mxu0 %v1500
    %v1539 = vpop.f32.mrb[0].mxu0
    %v1540 = vadd.f32 %v1498, %v1539
    %v1541 = vpop.f32.mrb[0].mxu0
    %v1542 = vpop.f32.mrb[0].mxu0
    %v1543 = vadd.f32 %v1498, %v1542
    %v1544 = vpop.f32.mrb[0].mxu0
    %1545 = vmatprep.mubr.bf16.mxu0 0
    %1546 = vmatmul.mubr.bf16.gmra.mrb[0].mxu0 %v1503
    %v1547 = vpop.f32.mrb[0].mxu0
    %v1548 = vadd.f32 %v1498, %v1547
    %v1549 = vpop.f32.mrb[0].mxu0
    %v1550 = vpop.f32.mrb[0].mxu0
    %v1551 = vadd.f32 %v1498, %v1550
    %v1552 = vpop.f32.mrb[0].mxu0
    %1553 = vdwg.mxu0
    %v1554 = vpack.c.bf16 %v1543, %v1540
    %v1555 = vpack.c.bf16 %v1551, %v1548
    %1556 = vmatprep.subr.bf16.mxu0 0
    %1557 = vmatpush1.bf16.msra.mxu0 %v1554
    %1558 = vmatprep.subr.bf16.mxu0 0
    %1559 = vmatpush1.bf16.msra.mxu0 %v1555
    %1560 = vmatprep.subr.bf16.mxu0 0
    %1561 = vmatpush1.bf16.msra.mxu0 0
    %1562 = vmatprep.subr.bf16.mxu0 0
    %1563 = vmatpush1.bf16.msra.mxu0 0
    %1564 = vmatprep.subr.bf16.mxu0 0
    %1565 = vmatpush1.bf16.msra.mxu0 0
    %1566 = vmatprep.subr.bf16.mxu0 0
    %1567 = vmatpush1.bf16.msra.mxu0 0
    %1568 = vmatprep.subr.bf16.mxu0 0
    %1569 = vmatpush1.bf16.msra.mxu0 0
    %1570 = vmatprep.subr.bf16.mxu0 0
    %1571 = vmatpush1.bf16.msra.mxu0 0
    %1572 = vmatprep.subr.bf16.mxu0 0
    %1573 = vmatpush1.bf16.msra.mxu0 0
    %1574 = vmatprep.subr.bf16.mxu0 0
    %1575 = vmatpush1.bf16.msra.mxu0 0
    %1576 = vmatprep.subr.bf16.mxu0 0
    %1577 = vmatpush1.bf16.msra.mxu0 0
    %1578 = vmatprep.subr.bf16.mxu0 0
    %1579 = vmatpush1.bf16.msra.mxu0 0
    %1580 = vmatprep.subr.bf16.mxu0 0
    %1581 = vmatpush1.bf16.msra.mxu0 0
    %1582 = vmatprep.subr.bf16.mxu0 0
    %1583 = vmatpush1.bf16.msra.mxu0 0
    %1584 = vmatprep.subr.bf16.mxu0 0
    %1585 = vmatpush1.bf16.msra.mxu0 0
    %1586 = vmatprep.subr.bf16.mxu0 0
    %1587 = vmatpush1.bf16.msra.mxu0 0
    %1588 = vmatprep.mubr.bf16.mxu0 0
    %1589 = vmatmul.mubr.bf16.gmra.mrb[0].mxu0 %v1431
    %v1590 = vpop.f32.mrb[0].mxu0
    %v1591 = vadd.f32 0.0, %v1590
    %v1592 = vpop.f32.mrb[0].mxu0
    %v1593 = vpop.f32.mrb[0].mxu0
    %v1594 = vadd.f32 0.0, %v1593
    %v1595 = vpop.f32.mrb[0].mxu0
    %1596 = vmatprep.mubr.bf16.mxu0 0
    %1597 = vmatmul.mubr.bf16.gmra.mrb[0].mxu0 %v1434
    %v1598 = vpop.f32.mrb[0].mxu0
    %v1599 = vadd.f32 0.0, %v1598
    %v1600 = vpop.f32.mrb[0].mxu0
    %v1601 = vpop.f32.mrb[0].mxu0
    %v1602 = vadd.f32 0.0, %v1601
    %v1603 = vpop.f32.mrb[0].mxu0
    %1604 = vdwg.mxu0
    %1605 = vst [vmem:[%s5] sm:$0xff] 0.0
    %1606 = vst [vmem:[%s5 + $0x8] sm:$0xff] 0.0
    %1607 = vst [vmem:[%s5 + $0x10] sm:$0xff] 0.0
    %1608 = vst [vmem:[%s5 + $0x18] sm:$0xff] 0.0
    %1609 = vst.msk [vmem:[%s5] sm:$0xff] %vm45, %v1294
    %1610 = vst.msk [vmem:[%s5 + $0x8] sm:$0xff] %vm45, %v1299
    %1611 = vst.msk [vmem:[%s5 + $0x10] sm:$0xff] %vm45, %v1304
    %1612 = vst.msk [vmem:[%s5 + $0x18] sm:$0xff] %vm45, %v1309
    %1617 = vrot.lane.b32.xlu0 %v1591, 16
    %v1618 = vpop.permute.xlu0 %1617
    %1619 = vrot.lane.b32.xlu0 %v1594, 16
    %v1620 = vpop.permute.xlu0 %1619
    %1621 = vrot.lane.b32.xlu0 %v1599, 16
    %v1622 = vpop.permute.xlu0 %1621
    %1623 = vrot.lane.b32.xlu0 %v1602, 16
    %v1624 = vpop.permute.xlu0 %1623
    %vm1629 = vcmask 195712
    %1630 = vst.msk [vmem:[%s5] sm:$0xff] %vm1629, %v1618
    %1631 = vst.msk [vmem:[%s5 + $0x8] sm:$0xff] %vm1629, %v1620
    %1632 = vst.msk [vmem:[%s5 + $0x10] sm:$0xff] %vm1629, %v1622
    %1633 = vst.msk [vmem:[%s5 + $0x18] sm:$0xff] %vm1629, %v1624
    %1634 = vrot.lane.b32.xlu0 %v1207, 24
    %v1635 = vpop.permute.xlu0 %1634
    %1636 = vrot.lane.b32.xlu0 %v1208, 24
    %v1637 = vpop.permute.xlu0 %1636
    %1638 = vrot.lane.b32.xlu0 %v1209, 24
    %v1639 = vpop.permute.xlu0 %1638
    %1640 = vrot.lane.b32.xlu0 %v1210, 24
    %v1641 = vpop.permute.xlu0 %1640
    %vm1646 = vcmask 457920
    %1647 = vst.msk [vmem:[%s5] sm:$0xff] %vm1646, %v1635
    %1648 = vst.msk [vmem:[%s5 + $0x8] sm:$0xff] %vm1646, %v1637
    %1649 = vst.msk [vmem:[%s5 + $0x10] sm:$0xff] %vm1646, %v1639
    %1650 = vst.msk [vmem:[%s5 + $0x18] sm:$0xff] %vm1646, %v1641
    %1651 = vrot.lane.b32.xlu0 %v387, 56
    %v1652 = vpop.permute.xlu0 %1651
    %1653 = vrot.lane.b32.xlu0 %v388, 56
    %v1654 = vpop.permute.xlu0 %1653
    %1655 = vrot.lane.b32.xlu0 %v389, 56
    %v1656 = vpop.permute.xlu0 %1655
    %1657 = vrot.lane.b32.xlu0 %v390, 56
    %v1658 = vpop.permute.xlu0 %1657
    %vm1663 = vcmask 589248
    %1664 = vst.msk [vmem:[%s5] sm:$0xff] %vm1663, %v1652
    %1665 = vst.msk [vmem:[%s5 + $0x8] sm:$0xff] %vm1663, %v1654
    %1666 = vst.msk [vmem:[%s5 + $0x10] sm:$0xff] %vm1663, %v1656
    %1667 = vst.msk [vmem:[%s5 + $0x18] sm:$0xff] %vm1663, %v1658
    // Predicated region
    $region26: #{school_forward.3} parent=1 // pred_check
      _
    $region27: #{school_forward.3} parent=1 // pred_check_branch
      %1669 = sbr.rel (0) target = $region29
    $region28: #{school_forward.3} parent=1 // pred_region
      _
    $region29: #{school_forward.3} parent=1 // pred_fallthru
      _
    // Predicated region
    $region30: #{school_forward.3} parent=1 // pred_check
      _
    $region31: #{school_forward.3} parent=1 // pred_check_branch
      %1671 = sbr.rel (0) target = $region33
    $region32: #{school_forward.3} parent=1 // pred_region
      _
    $region33: #{school_forward.3} parent=1 // pred_fallthru
      _
    %1672 = vsyncpa [#allocation3], 1

</llo_original>
